<compile_context>
chip_gen: v6e
topology: v6e:2x2x1
jax: 0.10.0
libtpu: 0.0.40
codegen_flags: <defaults>
</compile_context>

<pallas_src>
import jax
import jax.numpy as jnp
from jax import lax
from jax.experimental import pallas as pl
from jax.experimental.pallas import tpu as pltpu

# ----------------------------- simulation constants -----------------------------
RES = 8                       # grid resolution per axis (power of two)
RES_BITS = RES.bit_length() - 1
BOUND = 2                     # boundary thickness (cells)
DX = 1.0 / RES
INV_DX = float(RES)
DT = 5e-4
GRAVITY = (0.0, -9.8, 0.0)
G = RES ** 3

# packed particle slab row layout (feature-major, particles on lanes)
ROW_X, ROW_V, ROW_C, ROW_F, ROW_S, ROW_VOL, ROW_MASS = 0, 3, 6, 15, 24, 33, 34
SLAB_ROWS = 40                # 35 useful rows padded to a multiple of 8
OUT_ROWS = 24                 # x(3) v(3) C(9) F(9)
GRID_ROWS = 16                # accumulate: mom(3) mass(1) affine-sums(9) pad(3)
                              # finalized:  v_g(3) v_g*coordDX(9) pad(4)

_OFFSETS = [(i, j, k) for i in range(3) for j in range(3) for k in range(3)]


# --------------------------- shared in-kernel helper -----------------------------
def _bspline_weight_matrix(x):
    """x: (3, TP) absolute positions.  Returns Wm (G, TP): quadratic B-spline
    scatter/gather weights, Wm[g, p] = wx*wy*wz for cell g in p's 3x3x3 stencil."""
    Xp = x * INV_DX
    base_f = jnp.floor(Xp - 0.5)
    # clamp so the 3x3x3 stencil never leaves the grid (no wrap-around); no-op
    # for interior particles (the supported regime).
    base_f = jnp.clip(base_f, 0.0, float(RES - 3))
    fx = Xp - base_f                                   # (3, TP)
    base = base_f.astype(jnp.int32)                    # (3, TP)

    w0 = 0.5 * (1.5 - fx) ** 2                         # (3, TP) each
    w1 = 0.75 - (fx - 1.0) ** 2
    w2 = 0.5 * (fx - 0.5) ** 2

    gcol = lax.broadcasted_iota(jnp.int32, (G, 1), 0)  # (G, 1) cell id
    coords = (gcol >> (2 * RES_BITS),
              (gcol >> RES_BITS) & (RES - 1),
              gcol & (RES - 1))

    Wm = None
    for ax in range(3):
        d = coords[ax] - base[ax:ax + 1, :]            # (G, TP) int32
        f = jnp.where(d == 0, w0[ax:ax + 1, :], 0.0)
        f = jnp.where(d == 1, w1[ax:ax + 1, :], f)
        f = jnp.where(d == 2, w2[ax:ax + 1, :], f)
        Wm = f if Wm is None else Wm * f
    return Wm


# --------------------------------- P2G kernel ------------------------------------
def _p2g_kernel(slab_ref, grid_ref):
    f32 = jnp.float32
    x = slab_ref[ROW_X:ROW_X + 3, :]                   # (3, TP)
    v = slab_ref[ROW_V:ROW_V + 3, :]
    C = slab_ref[ROW_C:ROW_C + 9, :]                   # (9, TP)
    S = slab_ref[ROW_S:ROW_S + 9, :]
    vol = slab_ref[ROW_VOL:ROW_VOL + 1, :]             # (1, TP)
    mass = slab_ref[ROW_MASS:ROW_MASS + 1, :]
    TP = x.shape[1]

    Wm = _bspline_weight_matrix(x)                     # (G, TP)

    # affine = -dt*vol*4*inv_dx^2 * stress + mass*C    (9, TP)
    affine = (-DT * 4.0 * INV_DX * INV_DX) * vol * S + mass * C

    # P2G lhs (16, TP):
    #   row a   : mass*v[a] - sum_b affine[a,b]*x[b]        (absolute-position form)
    #   row 3   : mass
    #   row 4+3a+b : affine[a,b]   (scaled by node coordinate * DX in the finalize)
    rows = []
    for a in range(3):
        r = mass * v[a:a + 1, :]
        for b in range(3):
            r = r - affine[3 * a + b:3 * a + b + 1, :] * x[b:b + 1, :]
        rows.append(r)
    rows.append(mass)
    for ab in range(9):
        rows.append(affine[ab:ab + 1, :])
    zero = jnp.zeros((1, TP), f32)
    rows += [zero, zero, zero]
    lhs = jnp.concatenate(rows, axis=0)                # (16, TP)

    # single fused scatter matmul (NT form, same as flash-attn q@k^T)
    contrib = lax.dot_general(lhs, Wm, (((1,), (1,)), ((), ())),
                              preferred_element_type=f32)   # (16, G)

    @pl.when(pl.program_id(0) == 0)
    def _():
        grid_ref[...] = jnp.zeros_like(grid_ref)

    grid_ref[...] += contrib

    # ------------- grid op on the last particle tile (finalize) -------------
    @pl.when(pl.program_id(0) == pl.num_programs(0) - 1)
    def _():
        acc = grid_ref[...]                            # (16, G)
        grow = lax.broadcasted_iota(jnp.int32, (1, G), 1)
        ci = (grow >> (2 * RES_BITS),
              (grow >> RES_BITS) & (RES - 1),
              grow & (RES - 1))
        cdx = tuple(c.astype(f32) * DX for c in ci)    # node coordinates * DX

        gmass = acc[3:4, :]
        has_mass = gmass > 0.0
        inv_m = 1.0 / jnp.maximum(gmass, 1e-10)

        vg = []
        for a in range(3):
            mom = acc[a:a + 1, :]
            for b in range(3):
                mom = mom + cdx[b] * acc[4 + 3 * a + b:5 + 3 * a + b, :]
            va = jnp.where(has_mass, mom * inv_m + DT * GRAVITY[a], 0.0)
            va = jnp.where((ci[a] < BOUND) & (va < 0.0), 0.0, va)
            va = jnp.where((ci[a] > RES - BOUND) & (va > 0.0), 0.0, va)
            vg.append(va)

        out_rows = list(vg)                                     # rows 0:3  v_g
        for a in range(3):
            for b in range(3):
                out_rows.append(vg[a] * cdx[b])                 # rows 3:12 v_g*coordDX
        zg = jnp.zeros((1, G), f32)
        out_rows += [zg, zg, zg, zg]                            # rows 12:16 pad
        grid_ref[...] = jnp.concatenate(out_rows, axis=0)


# --------------------------------- G2P kernel ------------------------------------
def _g2p_kernel(grid_ref, slab_ref, out_ref):
    f32 = jnp.float32
    x = slab_ref[ROW_X:ROW_X + 3, :]                   # (3, TP)
    F = slab_ref[ROW_F:ROW_F + 9, :]                   # (9, TP)
    gm = grid_ref[...]                                 # (16, G) finalized grid matrix

    Wm = _bspline_weight_matrix(x)                     # (G, TP)

    # single fused gather matmul (native NN form): (16, G) @ (G, TP) -> (16, TP)
    R = lax.dot_general(gm, Wm, (((1,), (0,)), ((), ())),
                        preferred_element_type=f32)
    new_v = R[0:3, :]                                  # rows 0:3

    # new_C[a,b] = 4*inv_dx^2 * ( sum_g Wm*v_g[a]*coordDX_b  -  x_b*new_v[a] )
    # NOTE: padded particles (mass=vol=0) get a nonzero G2P result here; they are
    # sliced off in the wrapper and must not be recycled into a multi-step loop.
    c_rows = []
    for a in range(3):
        for b in range(3):
            c_rows.append((4.0 * INV_DX * INV_DX)
                          * (R[3 + 3 * a + b:4 + 3 * a + b, :]
                             - x[b:b + 1, :] * new_v[a:a + 1, :]))
    new_C = jnp.concatenate(c_rows, axis=0)            # (9, TP)

    # F_next = (I + dt*new_C) @ F, row-wise (no cross-lane reductions)
    f_rows = []
    for a in range(3):
        for b in range(3):
            acc = None
            for c in range(3):
                coef = DT * c_rows[3 * a + c]
                if a == c:
                    coef = coef + 1.0
                term = coef * F[3 * c + b:3 * c + b + 1, :]
                acc = term if acc is None else acc + term
            f_rows.append(acc)
    F_next = jnp.concatenate(f_rows, axis=0)           # (9, TP)

    x_next = x + DT * new_v
    out_ref[...] = jnp.concatenate([x_next, new_v, new_C, F_next], axis=0)  # (24, TP)


# ----------------------------------- wrapper -------------------------------------
def mpm_diff_sim_forward(x, v, C, F, stress, vol, rho, tile=512):
    """One differentiable MPM step (forward only). Returns x', v', C', F'."""
    N = x.shape[0]
    np128 = ((N + 127) // 128) * 128
    TP = min(tile, np128)                 # particle-tile size (multiple of 128)
    Np = ((N + TP - 1) // TP) * TP
    num_tiles = Np // TP

    x = jnp.asarray(x, jnp.float32)
    v = jnp.asarray(v, jnp.float32)
    C9 = jnp.asarray(C, jnp.float32).reshape(N, 9)
    F9 = jnp.asarray(F, jnp.float32).reshape(N, 9)
    S9 = jnp.asarray(stress, jnp.float32).reshape(N, 9)
    vol = jnp.asarray(vol, jnp.float32).reshape(N, 1)
    mass = vol * jnp.asarray(rho, jnp.float32).reshape(N, 1)

    # single packed feature-major slab (40, Np)
    slab = jnp.concatenate([x.T, v.T, C9.T, F9.T, S9.T, vol.T, mass.T,
                            jnp.zeros((SLAB_ROWS - 35, N), jnp.float32)], axis=0)
    if Np > N:
        pad = jnp.zeros((SLAB_ROWS, Np - N), jnp.float32)
        pad = pad.at[ROW_X:ROW_X + 3, :].set(0.5)        # padded particles mid-domain
        pad = pad.at[ROW_F, :].set(1.0)                   # F = identity
        pad = pad.at[ROW_F + 4, :].set(1.0)
        pad = pad.at[ROW_F + 8, :].set(1.0)
        slab = jnp.concatenate([slab, pad], axis=1)       # mass = vol = 0 -> inert

    cp_p2g = pltpu.CompilerParams(dimension_semantics=("arbitrary",),
                                  vmem_limit_bytes=32 * 1024 * 1024)
    cp_g2p = pltpu.CompilerParams(dimension_semantics=("parallel",),
                                  vmem_limit_bytes=32 * 1024 * 1024)

    # phase 1: P2G + grid op  (grid buffer accumulated across particle tiles)
    grid_mat = pl.pallas_call(
        _p2g_kernel,
        grid=(num_tiles,),
        in_specs=[pl.BlockSpec((SLAB_ROWS, TP), lambda i: (0, i))],
        out_specs=pl.BlockSpec((GRID_ROWS, G), lambda i: (0, 0)),
        out_shape=jax.ShapeDtypeStruct((GRID_ROWS, G), jnp.float32),
        compiler_params=cp_p2g,
    )(slab)

    # phase 2: G2P + particle update (embarrassingly parallel over particle tiles)
    out_slab = pl.pallas_call(
        _g2p_kernel,
        grid=(num_tiles,),
        in_specs=[pl.BlockSpec((GRID_ROWS, G), lambda i: (0, 0)),
                  pl.BlockSpec((SLAB_ROWS, TP), lambda i: (0, i))],
        out_specs=pl.BlockSpec((OUT_ROWS, TP), lambda i: (0, i)),
        out_shape=jax.ShapeDtypeStruct((OUT_ROWS, Np), jnp.float32),
        compiler_params=cp_g2p,
    )(grid_mat, slab)

    x_out = out_slab[0:3, :N].T
    v_out = out_slab[3:6, :N].T
    C_out = out_slab[6:15, :N].T.reshape(N, 3, 3)
    F_out = out_slab[15:24, :N].T.reshape(N, 3, 3)
    return x_out, v_out, C_out, F_out


# ------------------------------ pure-JAX reference -------------------------------
def _reference_step(x, v, C, F, stress, vol, mass):
    N = x.shape[0]
    Xp = x * INV_DX
    base = jnp.floor(Xp - 0.5).astype(jnp.int32)
    fx = Xp - base.astype(jnp.float32)
    w = jnp.stack([0.5 * (1.5 - fx) ** 2,
                   0.75 - (fx - 1.0) ** 2,
                   0.5 * (fx - 0.5) ** 2], axis=0)                  # (3, N, 3)
    affine = (-DT * 4.0 * INV_DX * INV_DX) * vol[:, :, None] * stress + mass[:, :, None] * C

    grid_mv = jnp.zeros((G, 3), jnp.float32)
    grid_m = jnp.zeros((G, 1), jnp.float32)
    for (i, j, k) in _OFFSETS:
        wgt = w[i, :, 0] * w[j, :, 1] * w[k, :, 2]
        dpos = (jnp.array([i, j, k], jnp.float32) - fx) * DX
        idx = (base[:, 0] + i) * RES * RES + (base[:, 1] + j) * RES + (base[:, 2] + k)
        aff_dpos = jnp.sum(affine * dpos[:, None, :], axis=-1)
        mv = wgt[:, None] * (mass * v + aff_dpos)
        grid_mv = grid_mv.at[idx].add(mv)
        grid_m = grid_m.at[idx].add(wgt[:, None] * mass)

    v_g = jnp.where(grid_m > 0.0,
                    grid_mv / jnp.maximum(grid_m, 1e-10) + DT * jnp.array(GRAVITY, jnp.float32),
                    0.0)
    cell = jnp.arange(G)
    coords = jnp.stack([cell // (RES * RES), (cell // RES) % RES, cell % RES], axis=-1)
    v_g = jnp.where((coords < BOUND) & (v_g < 0.0), 0.0, v_g)
    v_g = jnp.where((coords > RES - BOUND) & (v_g > 0.0), 0.0, v_g)

    new_v = jnp.zeros((N, 3), jnp.float32)
    new_C = jnp.zeros((N, 3, 3), jnp.float32)
    for (i, j, k) in _OFFSETS:
        wgt = w[i, :, 0] * w[j, :, 1] * w[k, :, 2]
        dpos = (jnp.array([i, j, k], jnp.float32) - fx) * DX
        idx = (base[:, 0] + i) * RES * RES + (base[:, 1] + j) * RES + (base[:, 2] + k)
        g_v = v_g[idx]
        new_v = new_v + wgt[:, None] * g_v
        new_C = new_C + wgt[:, None, None] * g_v[:, :, None] * dpos[:, None, :]
    new_C = new_C * (4.0 * INV_DX * INV_DX)

    x_next = x + DT * new_v
    A = jnp.eye(3, dtype=jnp.float32)[None] + DT * new_C
    F_next = jnp.sum(A[:, :, :, None] * F[:, None, :, :], axis=2)
    return x_next, new_v, new_C, F_next


# ------------------------------------- main --------------------------------------
if __name__ == "__main__":
    key = jax.random.PRNGKey(0)
    k1, k2, k3, k4, k5 = jax.random.split(key, 5)

    N = 64
    # particles inside the domain, away from the boundary cells
    x = 0.35 + 0.3 * jax.random.uniform(k1, (N, 3), dtype=jnp.float32)
    v = 0.1 * jax.random.normal(k2, (N, 3), dtype=jnp.float32)
    C = 0.5 * jax.random.normal(k3, (N, 3, 3), dtype=jnp.float32)
    F = jnp.eye(3, dtype=jnp.float32)[None] + 0.01 * jax.random.normal(k4, (N, 3, 3), dtype=jnp.float32)
    stress = 0.1 * jax.random.normal(k5, (N, 3, 3), dtype=jnp.float32)

    # statics (MPMStatics): per-particle volume and density (deterministic)
    vol = jnp.full((N, 1), (DX * 0.5) ** 3, dtype=jnp.float32)
    rho = jnp.full((N, 1), 1.0, dtype=jnp.float32)

    outs = mpm_diff_sim_forward(x, v, C, F, stress, vol, rho)
    outs = jax.block_until_ready(outs)
    x_n, v_n, C_n, F_n = outs

    refs = _reference_step(x, v, C, F, stress, vol, vol * rho)
    for name, got, want in zip(("x", "v", "C", "F"), (x_n, v_n, C_n, F_n), refs):
        if not bool(jnp.allclose(got, want, rtol=2e-3, atol=2e-4)):
            err = float(jnp.max(jnp.abs(got - want)))
            raise RuntimeError(f"Pallas kernel mismatch vs reference for {name} (max abs err {err})")

    # TODO(synk): backward pass (MPMSimFunction.backward / warp Tape) not implemented.
    print("KERNEL_OK")
</pallas_src>

<mosaic_0001>
module attributes {stable_mosaic.version = 11 : i64} {
  func.func @_p2g_kernel(%arg0: i32, %arg1: memref<40x128xf32, #tpu.memory_space<vmem>>, %arg2: memref<16x512xf32, #tpu.memory_space<vmem>>) attributes {dimension_semantics = [#tpu.dimension_semantics<arbitrary>], iteration_bounds = array<i64: 1>, scalar_prefetch = 0 : i64, scratch_operands = 0 : i64, tpu.core_type = #tpu.core_type<tc>, window_params = [{transform_indices = @transform_0, window_bounds = array<i64: 40, 128>}, {pipeline_mode = #tpu.pipeline_mode<synchronous>, transform_indices = @transform_1, window_bounds = array<i64: 16, 512>}]} {
    %c0 = arith.constant 0 : index
    %c0_0 = arith.constant 0 : index
    %0 = vector.load %arg1[%c0, %c0_0] : memref<40x128xf32, #tpu.memory_space<vmem>>, vector<3x128xf32>
    %c3 = arith.constant 3 : index
    %c0_1 = arith.constant 0 : index
    %1 = vector.load %arg1[%c3, %c0_1] : memref<40x128xf32, #tpu.memory_space<vmem>>, vector<3x128xf32>
    %c6 = arith.constant 6 : index
    %c0_2 = arith.constant 0 : index
    %2 = vector.load %arg1[%c6, %c0_2] : memref<40x128xf32, #tpu.memory_space<vmem>>, vector<9x128xf32>
    %c24 = arith.constant 24 : index
    %c0_3 = arith.constant 0 : index
    %3 = vector.load %arg1[%c24, %c0_3] : memref<40x128xf32, #tpu.memory_space<vmem>>, vector<9x128xf32>
    %c33 = arith.constant 33 : index
    %c0_4 = arith.constant 0 : index
    %4 = vector.load %arg1[%c33, %c0_4] : memref<40x128xf32, #tpu.memory_space<vmem>>, vector<1x128xf32>
    %c34 = arith.constant 34 : index
    %c0_5 = arith.constant 0 : index
    %5 = vector.load %arg1[%c34, %c0_5] : memref<40x128xf32, #tpu.memory_space<vmem>>, vector<1x128xf32>
    %cst = arith.constant 8.000000e+00 : f32
    %6 = vector.broadcast %cst : f32 to vector<3x128xf32>
    %7 = arith.mulf %0, %6 : vector<3x128xf32>
    %cst_6 = arith.constant 5.000000e-01 : f32
    %8 = vector.broadcast %cst_6 : f32 to vector<3x128xf32>
    %9 = arith.subf %7, %8 : vector<3x128xf32>
    %10 = math.floor %9 : vector<3x128xf32>
    %cst_7 = arith.constant 0.000000e+00 : f32
    %cst_8 = arith.constant 5.000000e+00 : f32
    %11 = vector.broadcast %cst_7 : f32 to vector<3x128xf32>
    %12 = arith.maximumf %11, %10 : vector<3x128xf32>
    %13 = vector.broadcast %cst_8 : f32 to vector<3x128xf32>
    %14 = arith.minimumf %13, %12 : vector<3x128xf32>
    %15 = arith.subf %7, %14 : vector<3x128xf32>
    %16 = arith.fptosi %14 : vector<3x128xf32> to vector<3x128xi32>
    %cst_9 = arith.constant 1.500000e+00 : f32
    %17 = vector.broadcast %cst_9 : f32 to vector<3x128xf32>
    %18 = arith.subf %17, %15 : vector<3x128xf32>
    %19 = arith.mulf %18, %18 : vector<3x128xf32>
    %cst_10 = arith.constant 5.000000e-01 : f32
    %20 = vector.broadcast %cst_10 : f32 to vector<3x128xf32>
    %21 = arith.mulf %20, %19 : vector<3x128xf32>
    %cst_11 = arith.constant 1.000000e+00 : f32
    %22 = vector.broadcast %cst_11 : f32 to vector<3x128xf32>
    %23 = arith.subf %15, %22 : vector<3x128xf32>
    %24 = arith.mulf %23, %23 : vector<3x128xf32>
    %cst_12 = arith.constant 7.500000e-01 : f32
    %25 = vector.broadcast %cst_12 : f32 to vector<3x128xf32>
    %26 = arith.subf %25, %24 : vector<3x128xf32>
    %cst_13 = arith.constant 5.000000e-01 : f32
    %27 = vector.broadcast %cst_13 : f32 to vector<3x128xf32>
    %28 = arith.subf %15, %27 : vector<3x128xf32>
    %29 = arith.mulf %28, %28 : vector<3x128xf32>
    %cst_14 = arith.constant 5.000000e-01 : f32
    %30 = vector.broadcast %cst_14 : f32 to vector<3x128xf32>
    %31 = arith.mulf %30, %29 : vector<3x128xf32>
    %32 = tpu.iota {dimensions = array<i32: 0>} : vector<512x1xi32>
    %c6_i32 = arith.constant 6 : i32
    %33 = vector.broadcast %c6_i32 : i32 to vector<512x1xi32>
    %34 = arith.shrsi %32, %33 : vector<512x1xi32>
    %c3_i32 = arith.constant 3 : i32
    %35 = vector.broadcast %c3_i32 : i32 to vector<512x1xi32>
    %36 = arith.shrsi %32, %35 : vector<512x1xi32>
    %c7_i32 = arith.constant 7 : i32
    %37 = vector.broadcast %c7_i32 : i32 to vector<512x1xi32>
    %38 = arith.andi %36, %37 : vector<512x1xi32>
    %c7_i32_15 = arith.constant 7 : i32
    %39 = vector.broadcast %c7_i32_15 : i32 to vector<512x1xi32>
    %40 = arith.andi %32, %39 : vector<512x1xi32>
    %41 = vector.extract_strided_slice %16 {offsets = [0, 0], sizes = [1, 128], strides = [1, 1]} : vector<3x128xi32> to vector<1x128xi32>
    %42 = vector.broadcast %34 : vector<512x1xi32> to vector<512x128xi32>
    %43 = vector.broadcast %41 : vector<1x128xi32> to vector<512x128xi32>
    %44 = arith.subi %42, %43 : vector<512x128xi32>
    %c0_i32 = arith.constant 0 : i32
    %45 = vector.broadcast %c0_i32 : i32 to vector<512x128xi32>
    %46 = arith.cmpi eq, %44, %45 : vector<512x128xi32>
    %47 = vector.extract_strided_slice %21 {offsets = [0, 0], sizes = [1, 128], strides = [1, 1]} : vector<3x128xf32> to vector<1x128xf32>
    %cst_16 = arith.constant 0.000000e+00 : f32
    %48 = vector.shape_cast %47 : vector<1x128xf32> to vector<1x128xf32>
    %49 = vector.broadcast %48 : vector<1x128xf32> to vector<512x128xf32>
    %50 = vector.broadcast %cst_16 : f32 to vector<512x128xf32>
    %51 = arith.select %46, %49, %50 : vector<512x128xi1>, vector<512x128xf32>
    %c1_i32 = arith.constant 1 : i32
    %52 = vector.broadcast %c1_i32 : i32 to vector<512x128xi32>
    %53 = arith.cmpi eq, %44, %52 : vector<512x128xi32>
    %54 = vector.extract_strided_slice %26 {offsets = [0, 0], sizes = [1, 128], strides = [1, 1]} : vector<3x128xf32> to vector<1x128xf32>
    %55 = vector.shape_cast %54 : vector<1x128xf32> to vector<1x128xf32>
    %56 = vector.broadcast %55 : vector<1x128xf32> to vector<512x128xf32>
    %57 = arith.select %53, %56, %51 : vector<512x128xi1>, vector<512x128xf32>
    %c2_i32 = arith.constant 2 : i32
    %58 = vector.broadcast %c2_i32 : i32 to vector<512x128xi32>
    %59 = arith.cmpi eq, %44, %58 : vector<512x128xi32>
    %60 = vector.extract_strided_slice %31 {offsets = [0, 0], sizes = [1, 128], strides = [1, 1]} : vector<3x128xf32> to vector<1x128xf32>
    %61 = vector.shape_cast %60 : vector<1x128xf32> to vector<1x128xf32>
    %62 = vector.broadcast %61 : vector<1x128xf32> to vector<512x128xf32>
    %63 = arith.select %59, %62, %57 : vector<512x128xi1>, vector<512x128xf32>
    %64 = vector.extract_strided_slice %16 {offsets = [1, 0], sizes = [1, 128], strides = [1, 1]} : vector<3x128xi32> to vector<1x128xi32>
    %65 = vector.broadcast %38 : vector<512x1xi32> to vector<512x128xi32>
    %66 = vector.broadcast %64 : vector<1x128xi32> to vector<512x128xi32>
    %67 = arith.subi %65, %66 : vector<512x128xi32>
    %c0_i32_17 = arith.constant 0 : i32
    %68 = vector.broadcast %c0_i32_17 : i32 to vector<512x128xi32>
    %69 = arith.cmpi eq, %67, %68 : vector<512x128xi32>
    %70 = vector.extract_strided_slice %21 {offsets = [1, 0], sizes = [1, 128], strides = [1, 1]} : vector<3x128xf32> to vector<1x128xf32>
    %cst_18 = arith.constant 0.000000e+00 : f32
    %71 = vector.shape_cast %70 : vector<1x128xf32> to vector<1x128xf32>
    %72 = vector.broadcast %71 : vector<1x128xf32> to vector<512x128xf32>
    %73 = vector.broadcast %cst_18 : f32 to vector<512x128xf32>
    %74 = arith.select %69, %72, %73 : vector<512x128xi1>, vector<512x128xf32>
    %c1_i32_19 = arith.constant 1 : i32
    %75 = vector.broadcast %c1_i32_19 : i32 to vector<512x128xi32>
    %76 = arith.cmpi eq, %67, %75 : vector<512x128xi32>
    %77 = vector.extract_strided_slice %26 {offsets = [1, 0], sizes = [1, 128], strides = [1, 1]} : vector<3x128xf32> to vector<1x128xf32>
    %78 = vector.shape_cast %77 : vector<1x128xf32> to vector<1x128xf32>
    %79 = vector.broadcast %78 : vector<1x128xf32> to vector<512x128xf32>
    %80 = arith.select %76, %79, %74 : vector<512x128xi1>, vector<512x128xf32>
    %c2_i32_20 = arith.constant 2 : i32
    %81 = vector.broadcast %c2_i32_20 : i32 to vector<512x128xi32>
    %82 = arith.cmpi eq, %67, %81 : vector<512x128xi32>
    %83 = vector.extract_strided_slice %31 {offsets = [1, 0], sizes = [1, 128], strides = [1, 1]} : vector<3x128xf32> to vector<1x128xf32>
    %84 = vector.shape_cast %83 : vector<1x128xf32> to vector<1x128xf32>
    %85 = vector.broadcast %84 : vector<1x128xf32> to vector<512x128xf32>
    %86 = arith.select %82, %85, %80 : vector<512x128xi1>, vector<512x128xf32>
    %87 = arith.mulf %63, %86 : vector<512x128xf32>
    %88 = vector.extract_strided_slice %16 {offsets = [2, 0], sizes = [1, 128], strides = [1, 1]} : vector<3x128xi32> to vector<1x128xi32>
    %89 = vector.broadcast %40 : vector<512x1xi32> to vector<512x128xi32>
    %90 = vector.broadcast %88 : vector<1x128xi32> to vector<512x128xi32>
    %91 = arith.subi %89, %90 : vector<512x128xi32>
    %c0_i32_21 = arith.constant 0 : i32
    %92 = vector.broadcast %c0_i32_21 : i32 to vector<512x128xi32>
    %93 = arith.cmpi eq, %91, %92 : vector<512x128xi32>
    %94 = vector.extract_strided_slice %21 {offsets = [2, 0], sizes = [1, 128], strides = [1, 1]} : vector<3x128xf32> to vector<1x128xf32>
    %cst_22 = arith.constant 0.000000e+00 : f32
    %95 = vector.shape_cast %94 : vector<1x128xf32> to vector<1x128xf32>
    %96 = vector.broadcast %95 : vector<1x128xf32> to vector<512x128xf32>
    %97 = vector.broadcast %cst_22 : f32 to vector<512x128xf32>
    %98 = arith.select %93, %96, %97 : vector<512x128xi1>, vector<512x128xf32>
    %c1_i32_23 = arith.constant 1 : i32
    %99 = vector.broadcast %c1_i32_23 : i32 to vector<512x128xi32>
    %100 = arith.cmpi eq, %91, %99 : vector<512x128xi32>
    %101 = vector.extract_strided_slice %26 {offsets = [2, 0], sizes = [1, 128], strides = [1, 1]} : vector<3x128xf32> to vector<1x128xf32>
    %102 = vector.shape_cast %101 : vector<1x128xf32> to vector<1x128xf32>
    %103 = vector.broadcast %102 : vector<1x128xf32> to vector<512x128xf32>
    %104 = arith.select %100, %103, %98 : vector<512x128xi1>, vector<512x128xf32>
    %c2_i32_24 = arith.constant 2 : i32
    %105 = vector.broadcast %c2_i32_24 : i32 to vector<512x128xi32>
    %106 = arith.cmpi eq, %91, %105 : vector<512x128xi32>
    %107 = vector.extract_strided_slice %31 {offsets = [2, 0], sizes = [1, 128], strides = [1, 1]} : vector<3x128xf32> to vector<1x128xf32>
    %108 = vector.shape_cast %107 : vector<1x128xf32> to vector<1x128xf32>
    %109 = vector.broadcast %108 : vector<1x128xf32> to vector<512x128xf32>
    %110 = arith.select %106, %109, %104 : vector<512x128xi1>, vector<512x128xf32>
    %111 = arith.mulf %87, %110 : vector<512x128xf32>
    %cst_25 = arith.constant -1.280000e-01 : f32
    %112 = vector.broadcast %cst_25 : f32 to vector<1x128xf32>
    %113 = arith.mulf %112, %4 : vector<1x128xf32>
    %114 = vector.broadcast %113 : vector<1x128xf32> to vector<9x128xf32>
    %115 = arith.mulf %114, %3 : vector<9x128xf32>
    %116 = vector.broadcast %5 : vector<1x128xf32> to vector<9x128xf32>
    %117 = arith.mulf %116, %2 : vector<9x128xf32>
    %118 = arith.addf %115, %117 : vector<9x128xf32>
    %119 = vector.extract_strided_slice %1 {offsets = [0, 0], sizes = [1, 128], strides = [1, 1]} : vector<3x128xf32> to vector<1x128xf32>
    %120 = arith.mulf %5, %119 : vector<1x128xf32>
    %121 = vector.extract_strided_slice %118 {offsets = [0, 0], sizes = [1, 128], strides = [1, 1]} : vector<9x128xf32> to vector<1x128xf32>
    %122 = vector.extract_strided_slice %0 {offsets = [0, 0], sizes = [1, 128], strides = [1, 1]} : vector<3x128xf32> to vector<1x128xf32>
    %123 = arith.mulf %121, %122 : vector<1x128xf32>
    %124 = arith.subf %120, %123 : vector<1x128xf32>
    %125 = vector.extract_strided_slice %118 {offsets = [1, 0], sizes = [1, 128], strides = [1, 1]} : vector<9x128xf32> to vector<1x128xf32>
    %126 = vector.extract_strided_slice %0 {offsets = [1, 0], sizes = [1, 128], strides = [1, 1]} : vector<3x128xf32> to vector<1x128xf32>
    %127 = arith.mulf %125, %126 : vector<1x128xf32>
    %128 = arith.subf %124, %127 : vector<1x128xf32>
    %129 = vector.extract_strided_slice %118 {offsets = [2, 0], sizes = [1, 128], strides = [1, 1]} : vector<9x128xf32> to vector<1x128xf32>
    %130 = vector.extract_strided_slice %0 {offsets = [2, 0], sizes = [1, 128], strides = [1, 1]} : vector<3x128xf32> to vector<1x128xf32>
    %131 = arith.mulf %129, %130 : vector<1x128xf32>
    %132 = arith.subf %128, %131 : vector<1x128xf32>
    %133 = vector.extract_strided_slice %1 {offsets = [1, 0], sizes = [1, 128], strides = [1, 1]} : vector<3x128xf32> to vector<1x128xf32>
    %134 = arith.mulf %5, %133 : vector<1x128xf32>
    %135 = vector.extract_strided_slice %118 {offsets = [3, 0], sizes = [1, 128], strides = [1, 1]} : vector<9x128xf32> to vector<1x128xf32>
    %136 = vector.extract_strided_slice %0 {offsets = [0, 0], sizes = [1, 128], strides = [1, 1]} : vector<3x128xf32> to vector<1x128xf32>
    %137 = arith.mulf %135, %136 : vector<1x128xf32>
    %138 = arith.subf %134, %137 : vector<1x128xf32>
    %139 = vector.extract_strided_slice %118 {offsets = [4, 0], sizes = [1, 128], strides = [1, 1]} : vector<9x128xf32> to vector<1x128xf32>
    %140 = vector.extract_strided_slice %0 {offsets = [1, 0], sizes = [1, 128], strides = [1, 1]} : vector<3x128xf32> to vector<1x128xf32>
    %141 = arith.mulf %139, %140 : vector<1x128xf32>
    %142 = arith.subf %138, %141 : vector<1x128xf32>
    %143 = vector.extract_strided_slice %118 {offsets = [5, 0], sizes = [1, 128], strides = [1, 1]} : vector<9x128xf32> to vector<1x128xf32>
    %144 = vector.extract_strided_slice %0 {offsets = [2, 0], sizes = [1, 128], strides = [1, 1]} : vector<3x128xf32> to vector<1x128xf32>
    %145 = arith.mulf %143, %144 : vector<1x128xf32>
    %146 = arith.subf %142, %145 : vector<1x128xf32>
    %147 = vector.extract_strided_slice %1 {offsets = [2, 0], sizes = [1, 128], strides = [1, 1]} : vector<3x128xf32> to vector<1x128xf32>
    %148 = arith.mulf %5, %147 : vector<1x128xf32>
    %149 = vector.extract_strided_slice %118 {offsets = [6, 0], sizes = [1, 128], strides = [1, 1]} : vector<9x128xf32> to vector<1x128xf32>
    %150 = vector.extract_strided_slice %0 {offsets = [0, 0], sizes = [1, 128], strides = [1, 1]} : vector<3x128xf32> to vector<1x128xf32>
    %151 = arith.mulf %149, %150 : vector<1x128xf32>
    %152 = arith.subf %148, %151 : vector<1x128xf32>
    %153 = vector.extract_strided_slice %118 {offsets = [7, 0], sizes = [1, 128], strides = [1, 1]} : vector<9x128xf32> to vector<1x128xf32>
    %154 = vector.extract_strided_slice %0 {offsets = [1, 0], sizes = [1, 128], strides = [1, 1]} : vector<3x128xf32> to vector<1x128xf32>
    %155 = arith.mulf %153, %154 : vector<1x128xf32>
    %156 = arith.subf %152, %155 : vector<1x128xf32>
    %157 = vector.extract_strided_slice %118 {offsets = [8, 0], sizes = [1, 128], strides = [1, 1]} : vector<9x128xf32> to vector<1x128xf32>
    %158 = vector.extract_strided_slice %0 {offsets = [2, 0], sizes = [1, 128], strides = [1, 1]} : vector<3x128xf32> to vector<1x128xf32>
    %159 = arith.mulf %157, %158 : vector<1x128xf32>
    %160 = arith.subf %156, %159 : vector<1x128xf32>
    %161 = vector.extract_strided_slice %118 {offsets = [0, 0], sizes = [1, 128], strides = [1, 1]} : vector<9x128xf32> to vector<1x128xf32>
    %162 = vector.extract_strided_slice %118 {offsets = [1, 0], sizes = [1, 128], strides = [1, 1]} : vector<9x128xf32> to vector<1x128xf32>
    %163 = vector.extract_strided_slice %118 {offsets = [2, 0], sizes = [1, 128], strides = [1, 1]} : vector<9x128xf32> to vector<1x128xf32>
    %164 = vector.extract_strided_slice %118 {offsets = [3, 0], sizes = [1, 128], strides = [1, 1]} : vector<9x128xf32> to vector<1x128xf32>
    %165 = vector.extract_strided_slice %118 {offsets = [4, 0], sizes = [1, 128], strides = [1, 1]} : vector<9x128xf32> to vector<1x128xf32>
    %166 = vector.extract_strided_slice %118 {offsets = [5, 0], sizes = [1, 128], strides = [1, 1]} : vector<9x128xf32> to vector<1x128xf32>
    %167 = vector.extract_strided_slice %118 {offsets = [6, 0], sizes = [1, 128], strides = [1, 1]} : vector<9x128xf32> to vector<1x128xf32>
    %168 = vector.extract_strided_slice %118 {offsets = [7, 0], sizes = [1, 128], strides = [1, 1]} : vector<9x128xf32> to vector<1x128xf32>
    %169 = vector.extract_strided_slice %118 {offsets = [8, 0], sizes = [1, 128], strides = [1, 1]} : vector<9x128xf32> to vector<1x128xf32>
    %cst_26 = arith.constant 0.000000e+00 : f32
    %170 = vector.broadcast %cst_26 : f32 to vector<1x128xf32>
    %171 = tpu.concatenate %132, %146, %160, %5, %161, %162, %163, %164, %165, %166, %167, %168, %169, %170, %170, %170 in 0 : vector<1x128xf32>, vector<1x128xf32>, vector<1x128xf32>, vector<1x128xf32>, vector<1x128xf32>, vector<1x128xf32>, vector<1x128xf32>, vector<1x128xf32>, vector<1x128xf32>, vector<1x128xf32>, vector<1x128xf32>, vector<1x128xf32>, vector<1x128xf32>, vector<1x128xf32>, vector<1x128xf32>, vector<1x128xf32> -> vector<16x128xf32>
    %cst_27 = arith.constant dense<0.000000e+00> : vector<16x512xf32>
    %172 = tpu.matmul %171, %111, %cst_27 {dimension_numbers = #tpu.dot_dimension_numbers<[1], [1], [0], [0], [0, 0, 1, 0], [], []>} : vector<16x128xf32>, vector<512x128xf32>, vector<16x512xf32> -> vector<16x512xf32>
    %c0_i32_28 = arith.constant 0 : i32
    %173 = arith.cmpi eq, %arg0, %c0_i32_28 : i32
    %174 = arith.extui %173 : i1 to i32
    %c0_i32_29 = arith.constant 0 : i32
    %175 = arith.cmpi ne, %174, %c0_i32_29 : i32
    scf.if %175 {
      %cst_36 = arith.constant 0.000000e+00 : f32
      %182 = vector.broadcast %cst_36 : f32 to vector<16x512xf32>
      %c0_37 = arith.constant 0 : index
      %c0_38 = arith.constant 0 : index
      %183 = vector.load %arg2[%c0_37, %c0_38] : memref<16x512xf32, #tpu.memory_space<vmem>>, vector<16x512xf32>
      tpu.vector_store %arg2[%c0_37, %c0_38], %182 {strides = array<i32>} : memref<16x512xf32, #tpu.memory_space<vmem>>, vector<16x512xf32>,
    } else {
    }
    %c0_30 = arith.constant 0 : index
    %c0_31 = arith.constant 0 : index
    %176 = vector.load %arg2[%c0_30, %c0_31] : memref<16x512xf32, #tpu.memory_space<vmem>>, vector<16x512xf32>
    %177 = arith.addf %176, %172 : vector<16x512xf32>
    %c0_32 = arith.constant 0 : index
    %c0_33 = arith.constant 0 : index
    %178 = vector.load %arg2[%c0_32, %c0_33] : memref<16x512xf32, #tpu.memory_space<vmem>>, vector<16x512xf32>
    tpu.vector_store %arg2[%c0_32, %c0_33], %177 {strides = array<i32>} : memref<16x512xf32, #tpu.memory_space<vmem>>, vector<16x512xf32>,
    %c0_i32_34 = arith.constant 0 : i32
    %179 = arith.cmpi eq, %arg0, %c0_i32_34 : i32
    %180 = arith.extui %179 : i1 to i32
    %c0_i32_35 = arith.constant 0 : i32
    %181 = arith.cmpi ne, %180, %c0_i32_35 : i32
    scf.if %181 {
      %c0_36 = arith.constant 0 : index
      %c0_37 = arith.constant 0 : index
      %182 = vector.load %arg2[%c0_36, %c0_37] : memref<16x512xf32, #tpu.memory_space<vmem>>, vector<16x512xf32>
      %183 = tpu.iota {dimensions = array<i32: 1>} : vector<1x512xi32>
      %c6_i32_38 = arith.constant 6 : i32
      %184 = vector.broadcast %c6_i32_38 : i32 to vector<1x512xi32>
      %185 = arith.shrsi %183, %184 : vector<1x512xi32>
      %c3_i32_39 = arith.constant 3 : i32
      %186 = vector.broadcast %c3_i32_39 : i32 to vector<1x512xi32>
      %187 = arith.shrsi %183, %186 : vector<1x512xi32>
      %c7_i32_40 = arith.constant 7 : i32
      %188 = vector.broadcast %c7_i32_40 : i32 to vector<1x512xi32>
      %189 = arith.andi %187, %188 : vector<1x512xi32>
      %c7_i32_41 = arith.constant 7 : i32
      %190 = vector.broadcast %c7_i32_41 : i32 to vector<1x512xi32>
      %191 = arith.andi %183, %190 : vector<1x512xi32>
      %192 = arith.sitofp %185 : vector<1x512xi32> to vector<1x512xf32>
      %cst_42 = arith.constant 1.250000e-01 : f32
      %193 = vector.broadcast %cst_42 : f32 to vector<1x512xf32>
      %194 = arith.mulf %192, %193 : vector<1x512xf32>
      %195 = arith.sitofp %189 : vector<1x512xi32> to vector<1x512xf32>
      %cst_43 = arith.constant 1.250000e-01 : f32
      %196 = vector.broadcast %cst_43 : f32 to vector<1x512xf32>
      %197 = arith.mulf %195, %196 : vector<1x512xf32>
      %198 = arith.sitofp %191 : vector<1x512xi32> to vector<1x512xf32>
      %cst_44 = arith.constant 1.250000e-01 : f32
      %199 = vector.broadcast %cst_44 : f32 to vector<1x512xf32>
      %200 = arith.mulf %198, %199 : vector<1x512xf32>
      %201 = vector.extract_strided_slice %182 {offsets = [3, 0], sizes = [1, 512], strides = [1, 1]} : vector<16x512xf32> to vector<1x512xf32>
      %cst_45 = arith.constant 0.000000e+00 : f32
      %202 = vector.broadcast %cst_45 : f32 to vector<1x512xf32>
      %203 = arith.cmpf ogt, %201, %202 : vector<1x512xf32>
      %cst_46 = arith.constant 1.000000e-10 : f32
      %204 = vector.broadcast %cst_46 : f32 to vector<1x512xf32>
      %205 = arith.maximumf %201, %204 : vector<1x512xf32>
      %cst_47 = arith.constant 1.000000e+00 : f32
      %206 = vector.broadcast %cst_47 : f32 to vector<1x512xf32>
      %207 = arith.divf %206, %205 : vector<1x512xf32>
      %208 = vector.extract_strided_slice %182 {offsets = [0, 0], sizes = [1, 512], strides = [1, 1]} : vector<16x512xf32> to vector<1x512xf32>
      %209 = vector.extract_strided_slice %182 {offsets = [4, 0], sizes = [1, 512], strides = [1, 1]} : vector<16x512xf32> to vector<1x512xf32>
      %210 = arith.mulf %194, %209 : vector<1x512xf32>
      %211 = arith.addf %208, %210 : vector<1x512xf32>
      %212 = vector.extract_strided_slice %182 {offsets = [5, 0], sizes = [1, 512], strides = [1, 1]} : vector<16x512xf32> to vector<1x512xf32>
      %213 = arith.mulf %197, %212 : vector<1x512xf32>
      %214 = arith.addf %211, %213 : vector<1x512xf32>
      %215 = vector.extract_strided_slice %182 {offsets = [6, 0], sizes = [1, 512], strides = [1, 1]} : vector<16x512xf32> to vector<1x512xf32>
      %216 = arith.mulf %200, %215 : vector<1x512xf32>
      %217 = arith.addf %214, %216 : vector<1x512xf32>
      %218 = arith.mulf %217, %207 : vector<1x512xf32>
      %cst_48 = arith.constant 0.000000e+00 : f32
      %219 = vector.broadcast %cst_48 : f32 to vector<1x512xf32>
      %220 = arith.addf %218, %219 : vector<1x512xf32>
      %cst_49 = arith.constant 0.000000e+00 : f32
      %221 = vector.broadcast %cst_49 : f32 to vector<1x512xf32>
      %222 = arith.select %203, %220, %221 : vector<1x512xi1>, vector<1x512xf32>
      %c2_i32_50 = arith.constant 2 : i32
      %223 = vector.broadcast %c2_i32_50 : i32 to vector<1x512xi32>
      %224 = arith.cmpi slt, %185, %223 : vector<1x512xi32>
      %cst_51 = arith.constant 0.000000e+00 : f32
      %225 = vector.broadcast %cst_51 : f32 to vector<1x512xf32>
      %226 = arith.cmpf olt, %222, %225 : vector<1x512xf32>
      %227 = arith.andi %224, %226 : vector<1x512xi1>
      %cst_52 = arith.constant 0.000000e+00 : f32
      %228 = vector.broadcast %cst_52 : f32 to vector<1x512xf32>
      %229 = arith.select %227, %228, %222 : vector<1x512xi1>, vector<1x512xf32>
      %c6_i32_53 = arith.constant 6 : i32
      %230 = vector.broadcast %c6_i32_53 : i32 to vector<1x512xi32>
      %231 = arith.cmpi sgt, %185, %230 : vector<1x512xi32>
      %cst_54 = arith.constant 0.000000e+00 : f32
      %232 = vector.broadcast %cst_54 : f32 to vector<1x512xf32>
      %233 = arith.cmpf ogt, %229, %232 : vector<1x512xf32>
      %234 = arith.andi %231, %233 : vector<1x512xi1>
      %cst_55 = arith.constant 0.000000e+00 : f32
      %235 = vector.broadcast %cst_55 : f32 to vector<1x512xf32>
      %236 = arith.select %234, %235, %229 : vector<1x512xi1>, vector<1x512xf32>
      %237 = vector.extract_strided_slice %182 {offsets = [1, 0], sizes = [1, 512], strides = [1, 1]} : vector<16x512xf32> to vector<1x512xf32>
      %238 = vector.extract_strided_slice %182 {offsets = [7, 0], sizes = [1, 512], strides = [1, 1]} : vector<16x512xf32> to vector<1x512xf32>
      %239 = arith.mulf %194, %238 : vector<1x512xf32>
      %240 = arith.addf %237, %239 : vector<1x512xf32>
      %241 = vector.extract_strided_slice %182 {offsets = [8, 0], sizes = [1, 512], strides = [1, 1]} : vector<16x512xf32> to vector<1x512xf32>
      %242 = arith.mulf %197, %241 : vector<1x512xf32>
      %243 = arith.addf %240, %242 : vector<1x512xf32>
      %244 = vector.extract_strided_slice %182 {offsets = [9, 0], sizes = [1, 512], strides = [1, 1]} : vector<16x512xf32> to vector<1x512xf32>
      %245 = arith.mulf %200, %244 : vector<1x512xf32>
      %246 = arith.addf %243, %245 : vector<1x512xf32>
      %247 = arith.mulf %246, %207 : vector<1x512xf32>
      %cst_56 = arith.constant -4.900000e-03 : f32
      %248 = vector.broadcast %cst_56 : f32 to vector<1x512xf32>
      %249 = arith.addf %247, %248 : vector<1x512xf32>
      %cst_57 = arith.constant 0.000000e+00 : f32
      %250 = vector.broadcast %cst_57 : f32 to vector<1x512xf32>
      %251 = arith.select %203, %249, %250 : vector<1x512xi1>, vector<1x512xf32>
      %c2_i32_58 = arith.constant 2 : i32
      %252 = vector.broadcast %c2_i32_58 : i32 to vector<1x512xi32>
      %253 = arith.cmpi slt, %189, %252 : vector<1x512xi32>
      %cst_59 = arith.constant 0.000000e+00 : f32
      %254 = vector.broadcast %cst_59 : f32 to vector<1x512xf32>
      %255 = arith.cmpf olt, %251, %254 : vector<1x512xf32>
      %256 = arith.andi %253, %255 : vector<1x512xi1>
      %cst_60 = arith.constant 0.000000e+00 : f32
      %257 = vector.broadcast %cst_60 : f32 to vector<1x512xf32>
      %258 = arith.select %256, %257, %251 : vector<1x512xi1>, vector<1x512xf32>
      %c6_i32_61 = arith.constant 6 : i32
      %259 = vector.broadcast %c6_i32_61 : i32 to vector<1x512xi32>
      %260 = arith.cmpi sgt, %189, %259 : vector<1x512xi32>
      %cst_62 = arith.constant 0.000000e+00 : f32
      %261 = vector.broadcast %cst_62 : f32 to vector<1x512xf32>
      %262 = arith.cmpf ogt, %258, %261 : vector<1x512xf32>
      %263 = arith.andi %260, %262 : vector<1x512xi1>
      %cst_63 = arith.constant 0.000000e+00 : f32
      %264 = vector.broadcast %cst_63 : f32 to vector<1x512xf32>
      %265 = arith.select %263, %264, %258 : vector<1x512xi1>, vector<1x512xf32>
      %266 = vector.extract_strided_slice %182 {offsets = [2, 0], sizes = [1, 512], strides = [1, 1]} : vector<16x512xf32> to vector<1x512xf32>
      %267 = vector.extract_strided_slice %182 {offsets = [10, 0], sizes = [1, 512], strides = [1, 1]} : vector<16x512xf32> to vector<1x512xf32>
      %268 = arith.mulf %194, %267 : vector<1x512xf32>
      %269 = arith.addf %266, %268 : vector<1x512xf32>
      %270 = vector.extract_strided_slice %182 {offsets = [11, 0], sizes = [1, 512], strides = [1, 1]} : vector<16x512xf32> to vector<1x512xf32>
      %271 = arith.mulf %197, %270 : vector<1x512xf32>
      %272 = arith.addf %269, %271 : vector<1x512xf32>
      %273 = vector.extract_strided_slice %182 {offsets = [12, 0], sizes = [1, 512], strides = [1, 1]} : vector<16x512xf32> to vector<1x512xf32>
      %274 = arith.mulf %200, %273 : vector<1x512xf32>
      %275 = arith.addf %272, %274 : vector<1x512xf32>
      %276 = arith.mulf %275, %207 : vector<1x512xf32>
      %cst_64 = arith.constant 0.000000e+00 : f32
      %277 = vector.broadcast %cst_64 : f32 to vector<1x512xf32>
      %278 = arith.addf %276, %277 : vector<1x512xf32>
      %cst_65 = arith.constant 0.000000e+00 : f32
      %279 = vector.broadcast %cst_65 : f32 to vector<1x512xf32>
      %280 = arith.select %203, %278, %279 : vector<1x512xi1>, vector<1x512xf32>
      %c2_i32_66 = arith.constant 2 : i32
      %281 = vector.broadcast %c2_i32_66 : i32 to vector<1x512xi32>
      %282 = arith.cmpi slt, %191, %281 : vector<1x512xi32>
      %cst_67 = arith.constant 0.000000e+00 : f32
      %283 = vector.broadcast %cst_67 : f32 to vector<1x512xf32>
      %284 = arith.cmpf olt, %280, %283 : vector<1x512xf32>
      %285 = arith.andi %282, %284 : vector<1x512xi1>
      %cst_68 = arith.constant 0.000000e+00 : f32
      %286 = vector.broadcast %cst_68 : f32 to vector<1x512xf32>
      %287 = arith.select %285, %286, %280 : vector<1x512xi1>, vector<1x512xf32>
      %c6_i32_69 = arith.constant 6 : i32
      %288 = vector.broadcast %c6_i32_69 : i32 to vector<1x512xi32>
      %289 = arith.cmpi sgt, %191, %288 : vector<1x512xi32>
      %cst_70 = arith.constant 0.000000e+00 : f32
      %290 = vector.broadcast %cst_70 : f32 to vector<1x512xf32>
      %291 = arith.cmpf ogt, %287, %290 : vector<1x512xf32>
      %292 = arith.andi %289, %291 : vector<1x512xi1>
      %cst_71 = arith.constant 0.000000e+00 : f32
      %293 = vector.broadcast %cst_71 : f32 to vector<1x512xf32>
      %294 = arith.select %292, %293, %287 : vector<1x512xi1>, vector<1x512xf32>
      %295 = arith.mulf %236, %194 : vector<1x512xf32>
      %296 = arith.mulf %236, %197 : vector<1x512xf32>
      %297 = arith.mulf %236, %200 : vector<1x512xf32>
      %298 = arith.mulf %265, %194 : vector<1x512xf32>
      %299 = arith.mulf %265, %197 : vector<1x512xf32>
      %300 = arith.mulf %265, %200 : vector<1x512xf32>
      %301 = arith.mulf %294, %194 : vector<1x512xf32>
      %302 = arith.mulf %294, %197 : vector<1x512xf32>
      %303 = arith.mulf %294, %200 : vector<1x512xf32>
      %cst_72 = arith.constant 0.000000e+00 : f32
      %304 = vector.broadcast %cst_72 : f32 to vector<1x512xf32>
      %305 = tpu.concatenate %236, %265, %294, %295, %296, %297, %298, %299, %300, %301, %302, %303, %304, %304, %304, %304 in 0 : vector<1x512xf32>, vector<1x512xf32>, vector<1x512xf32>, vector<1x512xf32>, vector<1x512xf32>, vector<1x512xf32>, vector<1x512xf32>, vector<1x512xf32>, vector<1x512xf32>, vector<1x512xf32>, vector<1x512xf32>, vector<1x512xf32>, vector<1x512xf32>, vector<1x512xf32>, vector<1x512xf32>, vector<1x512xf32> -> vector<16x512xf32>
      %c0_73 = arith.constant 0 : index
      %c0_74 = arith.constant 0 : index
      %306 = vector.load %arg2[%c0_73, %c0_74] : memref<16x512xf32, #tpu.memory_space<vmem>>, vector<16x512xf32>
      tpu.vector_store %arg2[%c0_73, %c0_74], %305 {strides = array<i32>} : memref<16x512xf32, #tpu.memory_space<vmem>>, vector<16x512xf32>,
    } else {
    }
    return
  }
  func.func @transform_0(%arg0: i32) -> (i32, i32) {
    %c0_i32 = arith.constant 0 : i32
    %c0_i32_0 = arith.constant 0 : i32
    return %c0_i32, %arg0 : i32, i32
  }
  func.func @transform_1(%arg0: i32) -> (i32, i32) {
    %c0_i32 = arith.constant 0 : i32
    %c0_i32_0 = arith.constant 0 : i32
    %c0_i32_1 = arith.constant 0 : i32
    return %c0_i32, %c0_i32_0 : i32, i32
  }
}

</mosaic_0001>

<llo_original>
// kernel: tpu_custom_call.1
$region0: #{tpu_custom_call.1}
  #allocation0 [shape = 'u32[]', space=smem, size = 0x4, offset = 0x4, fixed_abs, tag = 'smem constant byte address 0x4 - core index']
  #allocation1 [shape = 'u32[144,128]{1,0:T(1,128)}', space=vmem, size = 0x12000, scoped, tag = 'internal scratch']
  %s0 = inlined_call_operand.hbm [shape: f32[40,128], index: 0, kind: input, shape index: {}]
  %s1 = inlined_call_operand.hbm [shape: f32[16,512], index: 1, kind: output, shape index: {}]
  %s2 = sld [smem:[#allocation0]]
  $region26: #{tpu_custom_call.1} parent=0
    _
  %s4 = ssub.s32 1, %s2
  %s5 = scalar_select 0, %s4, %s2
  $region1: #{tpu_custom_call.1} parent=0
    #allocation2 [shape = 'u8[20480]{0}', space=vmem, size = 0x5000, scoped, tag = 'input window, operand 0, single buffered']
    #allocation3 [shape = 's32[1]{0}', space=sflag, size = 0x4, scoped, tag = 'scoped memory for tpu_custom_call.1']
    #allocation4 [shape = 's32[1]{0}', space=sflag, size = 0x4, scoped, tag = 'scoped memory for tpu_custom_call.1']
    #allocation5 [shape = 'u8[32768]{0}', space=vmem, size = 0x8000, scoped, tag = 'output window, operand 0, single buffered']
    %6 = vsyncpa [#allocation3], 0
    %7 = vsyncpa [#allocation4], 0
    // Predicated region
    $region2: #{tpu_custom_call.1} parent=1 // pred_check
      _
    $region3: #{tpu_custom_call.1} parent=1 // pred_check_branch
      %9 = sbr.rel (0) target = $region5
    $region4: #{tpu_custom_call.1} parent=1 // pred_region
      %s11 = ssub.s32 640, 640
      %12 = vsyncadd [#allocation3], %s11
      %s13 = sshll.u32 [#allocation2], 4
      %s14 = int_to_ptr.vmem [resolvable:$true] %s13
      %19 = dma.hbm_to_vmem [thread:$0]  %s0, 640, %s14, [#allocation3], 128, 128, 8
    $region5: #{tpu_custom_call.1} parent=1 // pred_fallthru
      _
    // Predicated region
    $region6: #{tpu_custom_call.1} parent=1 // pred_check
      _
    $region7: #{tpu_custom_call.1} parent=1 // pred_check_branch
      %21 = sbr.rel (0) target = $region9
    $region8: #{tpu_custom_call.1} parent=1 // pred_region
      %22 = dma.done [#allocation3], 640
    $region9: #{tpu_custom_call.1} parent=1 // pred_fallthru
      _
    %v23 = vld [vmem:[#allocation2] sm:$0x7]
    %v24 = vld [vmem:[#allocation2 + $0x3] sm:$0x7]
    %v25 = vld [vmem:[#allocation2 + $0x6] sm:$0xff]
    %v26 = vld [vmem:[#allocation2 + $0xe] sm:$0x1]
    %v27 = vld [vmem:[#allocation2 + $0x18] sm:$0xff]
    %v28 = vld [vmem:[#allocation2 + $0x20] sm:$0x1]
    %v29 = vld [vmem:[#allocation2 + $0x21] sm:$0x1]
    %v30 = vld [vmem:[#allocation2 + $0x22] sm:$0x1]
    %v31 = vmul.f32 %v23, 8.0
    %v32 = vsub.f32 %v31, 0.5
    %v33 = vfloor.f32 %v32
    %v34 = vmax.f32 %v33, 0.0
    %v35 = vmin.f32 %v34, 5.0
    %v36 = vsub.f32 %v31, %v35
    %v37 = vcvt.f32.s32.to.zero.pseudo %v35
    %v38 = vsub.f32 1.5, %v36
    %v39 = vmul.f32 %v38, %v38
    %v40 = vmul.f32 %v39, 0.5
    %v41 = vsub.f32 %v36, 1.0
    %v42 = vmul.f32 %v41, %v41
    %v43 = vsub.f32 0.75, %v42
    %v44 = vsub.f32 %v36, 0.5
    %v45 = vmul.f32 %v44, %v44
    %v46 = vmul.f32 %v45, 0.5
    %v47 = vlaneseq
    %v48 = vshrl.u32 %v47, 7
    %v49 = vadd.s32 %v48, 8
    %v50 = vadd.s32 %v48, 16
    %v51 = vadd.s32 %v48, 24
    %v52 = vadd.s32 %v48, 32
    %v53 = vadd.s32 %v48, 40
    %v54 = vadd.s32 %v48, 48
    %v55 = vadd.s32 %v48, 56
    %v56 = vadd.s32 %v48, 64
    %v57 = vadd.s32 %v48, 72
    %v58 = vadd.s32 %v48, 80
    %v59 = vadd.s32 %v48, 88
    %v60 = vadd.s32 %v48, 96
    %v61 = vadd.s32 %v48, 104
    %v62 = vadd.s32 %v48, 112
    %v63 = vadd.s32 %v48, 120
    %v64 = vadd.s32 %v48, 128
    %v65 = vadd.s32 %v48, 136
    %v66 = vadd.s32 %v48, 144
    %v67 = vadd.s32 %v48, 152
    %v68 = vadd.s32 %v48, 160
    %v69 = vadd.s32 %v48, 168
    %v70 = vadd.s32 %v48, 176
    %v71 = vadd.s32 %v48, 184
    %v72 = vadd.s32 %v48, 192
    %v73 = vadd.s32 %v48, 200
    %v74 = vadd.s32 %v48, 208
    %v75 = vadd.s32 %v48, 216
    %v76 = vadd.s32 %v48, 224
    %v77 = vadd.s32 %v48, 232
    %v78 = vadd.s32 %v48, 240
    %v79 = vadd.s32 %v48, 248
    %v80 = vadd.s32 %v48, 256
    %v81 = vadd.s32 %v48, 264
    %v82 = vadd.s32 %v48, 272
    %v83 = vadd.s32 %v48, 280
    %v84 = vadd.s32 %v48, 288
    %v85 = vadd.s32 %v48, 296
    %v86 = vadd.s32 %v48, 304
    %v87 = vadd.s32 %v48, 312
    %v88 = vadd.s32 %v48, 320
    %v89 = vadd.s32 %v48, 328
    %v90 = vadd.s32 %v48, 336
    %v91 = vadd.s32 %v48, 344
    %v92 = vadd.s32 %v48, 352
    %v93 = vadd.s32 %v48, 360
    %v94 = vadd.s32 %v48, 368
    %v95 = vadd.s32 %v48, 376
    %v96 = vadd.s32 %v48, 384
    %v97 = vadd.s32 %v48, 392
    %v98 = vadd.s32 %v48, 400
    %v99 = vadd.s32 %v48, 408
    %v100 = vadd.s32 %v48, 416
    %v101 = vadd.s32 %v48, 424
    %v102 = vadd.s32 %v48, 432
    %v103 = vadd.s32 %v48, 440
    %v104 = vadd.s32 %v48, 448
    %v105 = vadd.s32 %v48, 456
    %v106 = vadd.s32 %v48, 464
    %v107 = vadd.s32 %v48, 472
    %v108 = vadd.s32 %v48, 480
    %v109 = vadd.s32 %v48, 488
    %v110 = vadd.s32 %v48, 496
    %v111 = vadd.s32 %v48, 504
    %v112 = vshra.s32 %v48, 6
    %v113 = vshra.s32 %v49, 6
    %v114 = vshra.s32 %v50, 6
    %v115 = vshra.s32 %v51, 6
    %v116 = vshra.s32 %v52, 6
    %v117 = vshra.s32 %v53, 6
    %v118 = vshra.s32 %v54, 6
    %v119 = vshra.s32 %v55, 6
    %v120 = vshra.s32 %v56, 6
    %v121 = vshra.s32 %v57, 6
    %v122 = vshra.s32 %v58, 6
    %v123 = vshra.s32 %v59, 6
    %v124 = vshra.s32 %v60, 6
    %v125 = vshra.s32 %v61, 6
    %v126 = vshra.s32 %v62, 6
    %v127 = vshra.s32 %v63, 6
    %v128 = vshra.s32 %v64, 6
    %v129 = vshra.s32 %v65, 6
    %v130 = vshra.s32 %v66, 6
    %v131 = vshra.s32 %v67, 6
    %v132 = vshra.s32 %v68, 6
    %v133 = vshra.s32 %v69, 6
    %v134 = vshra.s32 %v70, 6
    %v135 = vshra.s32 %v71, 6
    %v136 = vshra.s32 %v72, 6
    %v137 = vshra.s32 %v73, 6
    %v138 = vshra.s32 %v74, 6
    %v139 = vshra.s32 %v75, 6
    %v140 = vshra.s32 %v76, 6
    %v141 = vshra.s32 %v77, 6
    %v142 = vshra.s32 %v78, 6
    %v143 = vshra.s32 %v79, 6
    %v144 = vshra.s32 %v80, 6
    %v145 = vshra.s32 %v81, 6
    %v146 = vshra.s32 %v82, 6
    %v147 = vshra.s32 %v83, 6
    %v148 = vshra.s32 %v84, 6
    %v149 = vshra.s32 %v85, 6
    %v150 = vshra.s32 %v86, 6
    %v151 = vshra.s32 %v87, 6
    %v152 = vshra.s32 %v88, 6
    %v153 = vshra.s32 %v89, 6
    %v154 = vshra.s32 %v90, 6
    %v155 = vshra.s32 %v91, 6
    %v156 = vshra.s32 %v92, 6
    %v157 = vshra.s32 %v93, 6
    %v158 = vshra.s32 %v94, 6
    %v159 = vshra.s32 %v95, 6
    %v160 = vshra.s32 %v96, 6
    %v161 = vshra.s32 %v97, 6
    %v162 = vshra.s32 %v98, 6
    %v163 = vshra.s32 %v99, 6
    %v164 = vshra.s32 %v100, 6
    %v165 = vshra.s32 %v101, 6
    %v166 = vshra.s32 %v102, 6
    %v167 = vshra.s32 %v103, 6
    %v168 = vshra.s32 %v104, 6
    %v169 = vshra.s32 %v105, 6
    %v170 = vshra.s32 %v106, 6
    %v171 = vshra.s32 %v107, 6
    %v172 = vshra.s32 %v108, 6
    %v173 = vshra.s32 %v109, 6
    %v174 = vshra.s32 %v110, 6
    %v175 = vshra.s32 %v111, 6
    %v176 = vshra.s32 %v48, 3
    %v177 = vshra.s32 %v49, 3
    %v178 = vshra.s32 %v50, 3
    %v179 = vshra.s32 %v51, 3
    %v180 = vshra.s32 %v52, 3
    %v181 = vshra.s32 %v53, 3
    %v182 = vshra.s32 %v54, 3
    %v183 = vshra.s32 %v55, 3
    %v184 = vshra.s32 %v56, 3
    %v185 = vshra.s32 %v57, 3
    %v186 = vshra.s32 %v58, 3
    %v187 = vshra.s32 %v59, 3
    %v188 = vshra.s32 %v60, 3
    %v189 = vshra.s32 %v61, 3
    %v190 = vshra.s32 %v62, 3
    %v191 = vshra.s32 %v63, 3
    %v192 = vshra.s32 %v64, 3
    %v193 = vshra.s32 %v65, 3
    %v194 = vshra.s32 %v66, 3
    %v195 = vshra.s32 %v67, 3
    %v196 = vshra.s32 %v68, 3
    %v197 = vshra.s32 %v69, 3
    %v198 = vshra.s32 %v70, 3
    %v199 = vshra.s32 %v71, 3
    %v200 = vshra.s32 %v72, 3
    %v201 = vshra.s32 %v73, 3
    %v202 = vshra.s32 %v74, 3
    %v203 = vshra.s32 %v75, 3
    %v204 = vshra.s32 %v76, 3
    %v205 = vshra.s32 %v77, 3
    %v206 = vshra.s32 %v78, 3
    %v207 = vshra.s32 %v79, 3
    %v208 = vshra.s32 %v80, 3
    %v209 = vshra.s32 %v81, 3
    %v210 = vshra.s32 %v82, 3
    %v211 = vshra.s32 %v83, 3
    %v212 = vshra.s32 %v84, 3
    %v213 = vshra.s32 %v85, 3
    %v214 = vshra.s32 %v86, 3
    %v215 = vshra.s32 %v87, 3
    %v216 = vshra.s32 %v88, 3
    %v217 = vshra.s32 %v89, 3
    %v218 = vshra.s32 %v90, 3
    %v219 = vshra.s32 %v91, 3
    %v220 = vshra.s32 %v92, 3
    %v221 = vshra.s32 %v93, 3
    %v222 = vshra.s32 %v94, 3
    %v223 = vshra.s32 %v95, 3
    %v224 = vshra.s32 %v96, 3
    %v225 = vshra.s32 %v97, 3
    %v226 = vshra.s32 %v98, 3
    %v227 = vshra.s32 %v99, 3
    %v228 = vshra.s32 %v100, 3
    %v229 = vshra.s32 %v101, 3
    %v230 = vshra.s32 %v102, 3
    %v231 = vshra.s32 %v103, 3
    %v232 = vshra.s32 %v104, 3
    %v233 = vshra.s32 %v105, 3
    %v234 = vshra.s32 %v106, 3
    %v235 = vshra.s32 %v107, 3
    %v236 = vshra.s32 %v108, 3
    %v237 = vshra.s32 %v109, 3
    %v238 = vshra.s32 %v110, 3
    %v239 = vshra.s32 %v111, 3
    %v240 = vand.u32 %v176, 7
    %v241 = vand.u32 %v177, 7
    %v242 = vand.u32 %v178, 7
    %v243 = vand.u32 %v179, 7
    %v244 = vand.u32 %v180, 7
    %v245 = vand.u32 %v181, 7
    %v246 = vand.u32 %v182, 7
    %v247 = vand.u32 %v183, 7
    %v248 = vand.u32 %v184, 7
    %v249 = vand.u32 %v185, 7
    %v250 = vand.u32 %v186, 7
    %v251 = vand.u32 %v187, 7
    %v252 = vand.u32 %v188, 7
    %v253 = vand.u32 %v189, 7
    %v254 = vand.u32 %v190, 7
    %v255 = vand.u32 %v191, 7
    %v256 = vand.u32 %v192, 7
    %v257 = vand.u32 %v193, 7
    %v258 = vand.u32 %v194, 7
    %v259 = vand.u32 %v195, 7
    %v260 = vand.u32 %v196, 7
    %v261 = vand.u32 %v197, 7
    %v262 = vand.u32 %v198, 7
    %v263 = vand.u32 %v199, 7
    %v264 = vand.u32 %v200, 7
    %v265 = vand.u32 %v201, 7
    %v266 = vand.u32 %v202, 7
    %v267 = vand.u32 %v203, 7
    %v268 = vand.u32 %v204, 7
    %v269 = vand.u32 %v205, 7
    %v270 = vand.u32 %v206, 7
    %v271 = vand.u32 %v207, 7
    %v272 = vand.u32 %v208, 7
    %v273 = vand.u32 %v209, 7
    %v274 = vand.u32 %v210, 7
    %v275 = vand.u32 %v211, 7
    %v276 = vand.u32 %v212, 7
    %v277 = vand.u32 %v213, 7
    %v278 = vand.u32 %v214, 7
    %v279 = vand.u32 %v215, 7
    %v280 = vand.u32 %v216, 7
    %v281 = vand.u32 %v217, 7
    %v282 = vand.u32 %v218, 7
    %v283 = vand.u32 %v219, 7
    %v284 = vand.u32 %v220, 7
    %v285 = vand.u32 %v221, 7
    %v286 = vand.u32 %v222, 7
    %v287 = vand.u32 %v223, 7
    %v288 = vand.u32 %v224, 7
    %v289 = vand.u32 %v225, 7
    %v290 = vand.u32 %v226, 7
    %v291 = vand.u32 %v227, 7
    %v292 = vand.u32 %v228, 7
    %v293 = vand.u32 %v229, 7
    %v294 = vand.u32 %v230, 7
    %v295 = vand.u32 %v231, 7
    %v296 = vand.u32 %v232, 7
    %v297 = vand.u32 %v233, 7
    %v298 = vand.u32 %v234, 7
    %v299 = vand.u32 %v235, 7
    %v300 = vand.u32 %v236, 7
    %v301 = vand.u32 %v237, 7
    %v302 = vand.u32 %v238, 7
    %v303 = vand.u32 %v239, 7
    %v304 = vand.u32 %v48, 7
    %v305 = vand.u32 %v49, 7
    %v306 = vand.u32 %v50, 7
    %v307 = vand.u32 %v51, 7
    %v308 = vand.u32 %v52, 7
    %v309 = vand.u32 %v53, 7
    %v310 = vand.u32 %v54, 7
    %v311 = vand.u32 %v55, 7
    %v312 = vand.u32 %v56, 7
    %v313 = vand.u32 %v57, 7
    %v314 = vand.u32 %v58, 7
    %v315 = vand.u32 %v59, 7
    %v316 = vand.u32 %v60, 7
    %v317 = vand.u32 %v61, 7
    %v318 = vand.u32 %v62, 7
    %v319 = vand.u32 %v63, 7
    %v320 = vand.u32 %v64, 7
    %v321 = vand.u32 %v65, 7
    %v322 = vand.u32 %v66, 7
    %v323 = vand.u32 %v67, 7
    %v324 = vand.u32 %v68, 7
    %v325 = vand.u32 %v69, 7
    %v326 = vand.u32 %v70, 7
    %v327 = vand.u32 %v71, 7
    %v328 = vand.u32 %v72, 7
    %v329 = vand.u32 %v73, 7
    %v330 = vand.u32 %v74, 7
    %v331 = vand.u32 %v75, 7
    %v332 = vand.u32 %v76, 7
    %v333 = vand.u32 %v77, 7
    %v334 = vand.u32 %v78, 7
    %v335 = vand.u32 %v79, 7
    %v336 = vand.u32 %v80, 7
    %v337 = vand.u32 %v81, 7
    %v338 = vand.u32 %v82, 7
    %v339 = vand.u32 %v83, 7
    %v340 = vand.u32 %v84, 7
    %v341 = vand.u32 %v85, 7
    %v342 = vand.u32 %v86, 7
    %v343 = vand.u32 %v87, 7
    %v344 = vand.u32 %v88, 7
    %v345 = vand.u32 %v89, 7
    %v346 = vand.u32 %v90, 7
    %v347 = vand.u32 %v91, 7
    %v348 = vand.u32 %v92, 7
    %v349 = vand.u32 %v93, 7
    %v350 = vand.u32 %v94, 7
    %v351 = vand.u32 %v95, 7
    %v352 = vand.u32 %v96, 7
    %v353 = vand.u32 %v97, 7
    %v354 = vand.u32 %v98, 7
    %v355 = vand.u32 %v99, 7
    %v356 = vand.u32 %v100, 7
    %v357 = vand.u32 %v101, 7
    %v358 = vand.u32 %v102, 7
    %v359 = vand.u32 %v103, 7
    %v360 = vand.u32 %v104, 7
    %v361 = vand.u32 %v105, 7
    %v362 = vand.u32 %v106, 7
    %v363 = vand.u32 %v107, 7
    %v364 = vand.u32 %v108, 7
    %v365 = vand.u32 %v109, 7
    %v366 = vand.u32 %v110, 7
    %v367 = vand.u32 %v111, 7
    %v368 = vlaneseq
    %v369 = vshrl.u32 %v368, 7
    %v370 = vsub.s32 0, %v369
    %v371 = vrot.slane %v37, %v370
    %v372 = vsub.s32 %v112, %v371
    %v373 = vsub.s32 %v113, %v371
    %v374 = vsub.s32 %v114, %v371
    %v375 = vsub.s32 %v115, %v371
    %v376 = vsub.s32 %v116, %v371
    %v377 = vsub.s32 %v117, %v371
    %v378 = vsub.s32 %v118, %v371
    %v379 = vsub.s32 %v119, %v371
    %v380 = vsub.s32 %v120, %v371
    %v381 = vsub.s32 %v121, %v371
    %v382 = vsub.s32 %v122, %v371
    %v383 = vsub.s32 %v123, %v371
    %v384 = vsub.s32 %v124, %v371
    %v385 = vsub.s32 %v125, %v371
    %v386 = vsub.s32 %v126, %v371
    %v387 = vsub.s32 %v127, %v371
    %v388 = vsub.s32 %v128, %v371
    %v389 = vsub.s32 %v129, %v371
    %v390 = vsub.s32 %v130, %v371
    %v391 = vsub.s32 %v131, %v371
    %v392 = vsub.s32 %v132, %v371
    %v393 = vsub.s32 %v133, %v371
    %v394 = vsub.s32 %v134, %v371
    %v395 = vsub.s32 %v135, %v371
    %v396 = vsub.s32 %v136, %v371
    %v397 = vsub.s32 %v137, %v371
    %v398 = vsub.s32 %v138, %v371
    %v399 = vsub.s32 %v139, %v371
    %v400 = vsub.s32 %v140, %v371
    %v401 = vsub.s32 %v141, %v371
    %v402 = vsub.s32 %v142, %v371
    %v403 = vsub.s32 %v143, %v371
    %v404 = vsub.s32 %v144, %v371
    %v405 = vsub.s32 %v145, %v371
    %v406 = vsub.s32 %v146, %v371
    %v407 = vsub.s32 %v147, %v371
    %v408 = vsub.s32 %v148, %v371
    %v409 = vsub.s32 %v149, %v371
    %v410 = vsub.s32 %v150, %v371
    %v411 = vsub.s32 %v151, %v371
    %v412 = vsub.s32 %v152, %v371
    %v413 = vsub.s32 %v153, %v371
    %v414 = vsub.s32 %v154, %v371
    %v415 = vsub.s32 %v155, %v371
    %v416 = vsub.s32 %v156, %v371
    %v417 = vsub.s32 %v157, %v371
    %v418 = vsub.s32 %v158, %v371
    %v419 = vsub.s32 %v159, %v371
    %v420 = vsub.s32 %v160, %v371
    %v421 = vsub.s32 %v161, %v371
    %v422 = vsub.s32 %v162, %v371
    %v423 = vsub.s32 %v163, %v371
    %v424 = vsub.s32 %v164, %v371
    %v425 = vsub.s32 %v165, %v371
    %v426 = vsub.s32 %v166, %v371
    %v427 = vsub.s32 %v167, %v371
    %v428 = vsub.s32 %v168, %v371
    %v429 = vsub.s32 %v169, %v371
    %v430 = vsub.s32 %v170, %v371
    %v431 = vsub.s32 %v171, %v371
    %v432 = vsub.s32 %v172, %v371
    %v433 = vsub.s32 %v173, %v371
    %v434 = vsub.s32 %v174, %v371
    %v435 = vsub.s32 %v175, %v371
    %vm436 = vcmp.eq.s32.totalorder %v372, 0
    %vm437 = vcmp.eq.s32.totalorder %v373, 0
    %vm438 = vcmp.eq.s32.totalorder %v374, 0
    %vm439 = vcmp.eq.s32.totalorder %v375, 0
    %vm440 = vcmp.eq.s32.totalorder %v376, 0
    %vm441 = vcmp.eq.s32.totalorder %v377, 0
    %vm442 = vcmp.eq.s32.totalorder %v378, 0
    %vm443 = vcmp.eq.s32.totalorder %v379, 0
    %vm444 = vcmp.eq.s32.totalorder %v380, 0
    %vm445 = vcmp.eq.s32.totalorder %v381, 0
    %vm446 = vcmp.eq.s32.totalorder %v382, 0
    %vm447 = vcmp.eq.s32.totalorder %v383, 0
    %vm448 = vcmp.eq.s32.totalorder %v384, 0
    %vm449 = vcmp.eq.s32.totalorder %v385, 0
    %vm450 = vcmp.eq.s32.totalorder %v386, 0
    %vm451 = vcmp.eq.s32.totalorder %v387, 0
    %vm452 = vcmp.eq.s32.totalorder %v388, 0
    %vm453 = vcmp.eq.s32.totalorder %v389, 0
    %vm454 = vcmp.eq.s32.totalorder %v390, 0
    %vm455 = vcmp.eq.s32.totalorder %v391, 0
    %vm456 = vcmp.eq.s32.totalorder %v392, 0
    %vm457 = vcmp.eq.s32.totalorder %v393, 0
    %vm458 = vcmp.eq.s32.totalorder %v394, 0
    %vm459 = vcmp.eq.s32.totalorder %v395, 0
    %vm460 = vcmp.eq.s32.totalorder %v396, 0
    %vm461 = vcmp.eq.s32.totalorder %v397, 0
    %vm462 = vcmp.eq.s32.totalorder %v398, 0
    %vm463 = vcmp.eq.s32.totalorder %v399, 0
    %vm464 = vcmp.eq.s32.totalorder %v400, 0
    %vm465 = vcmp.eq.s32.totalorder %v401, 0
    %vm466 = vcmp.eq.s32.totalorder %v402, 0
    %vm467 = vcmp.eq.s32.totalorder %v403, 0
    %vm468 = vcmp.eq.s32.totalorder %v404, 0
    %vm469 = vcmp.eq.s32.totalorder %v405, 0
    %vm470 = vcmp.eq.s32.totalorder %v406, 0
    %vm471 = vcmp.eq.s32.totalorder %v407, 0
    %vm472 = vcmp.eq.s32.totalorder %v408, 0
    %vm473 = vcmp.eq.s32.totalorder %v409, 0
    %vm474 = vcmp.eq.s32.totalorder %v410, 0
    %vm475 = vcmp.eq.s32.totalorder %v411, 0
    %vm476 = vcmp.eq.s32.totalorder %v412, 0
    %vm477 = vcmp.eq.s32.totalorder %v413, 0
    %vm478 = vcmp.eq.s32.totalorder %v414, 0
    %vm479 = vcmp.eq.s32.totalorder %v415, 0
    %vm480 = vcmp.eq.s32.totalorder %v416, 0
    %vm481 = vcmp.eq.s32.totalorder %v417, 0
    %vm482 = vcmp.eq.s32.totalorder %v418, 0
    %vm483 = vcmp.eq.s32.totalorder %v419, 0
    %vm484 = vcmp.eq.s32.totalorder %v420, 0
    %vm485 = vcmp.eq.s32.totalorder %v421, 0
    %vm486 = vcmp.eq.s32.totalorder %v422, 0
    %vm487 = vcmp.eq.s32.totalorder %v423, 0
    %vm488 = vcmp.eq.s32.totalorder %v424, 0
    %vm489 = vcmp.eq.s32.totalorder %v425, 0
    %vm490 = vcmp.eq.s32.totalorder %v426, 0
    %vm491 = vcmp.eq.s32.totalorder %v427, 0
    %vm492 = vcmp.eq.s32.totalorder %v428, 0
    %vm493 = vcmp.eq.s32.totalorder %v429, 0
    %vm494 = vcmp.eq.s32.totalorder %v430, 0
    %vm495 = vcmp.eq.s32.totalorder %v431, 0
    %vm496 = vcmp.eq.s32.totalorder %v432, 0
    %vm497 = vcmp.eq.s32.totalorder %v433, 0
    %vm498 = vcmp.eq.s32.totalorder %v434, 0
    %vm499 = vcmp.eq.s32.totalorder %v435, 0
    %v500 = vlaneseq
    %v501 = vshrl.u32 %v500, 7
    %v502 = vsub.s32 0, %v501
    %v503 = vrot.slane %v40, %v502
    %v504 = vsel %vm436, %v503, 0.0
    %v505 = vsel %vm437, %v503, 0.0
    %v506 = vsel %vm438, %v503, 0.0
    %v507 = vsel %vm439, %v503, 0.0
    %v508 = vsel %vm440, %v503, 0.0
    %v509 = vsel %vm441, %v503, 0.0
    %v510 = vsel %vm442, %v503, 0.0
    %v511 = vsel %vm443, %v503, 0.0
    %v512 = vsel %vm444, %v503, 0.0
    %v513 = vsel %vm445, %v503, 0.0
    %v514 = vsel %vm446, %v503, 0.0
    %v515 = vsel %vm447, %v503, 0.0
    %v516 = vsel %vm448, %v503, 0.0
    %v517 = vsel %vm449, %v503, 0.0
    %v518 = vsel %vm450, %v503, 0.0
    %v519 = vsel %vm451, %v503, 0.0
    %v520 = vsel %vm452, %v503, 0.0
    %v521 = vsel %vm453, %v503, 0.0
    %v522 = vsel %vm454, %v503, 0.0
    %v523 = vsel %vm455, %v503, 0.0
    %v524 = vsel %vm456, %v503, 0.0
    %v525 = vsel %vm457, %v503, 0.0
    %v526 = vsel %vm458, %v503, 0.0
    %v527 = vsel %vm459, %v503, 0.0
    %v528 = vsel %vm460, %v503, 0.0
    %v529 = vsel %vm461, %v503, 0.0
    %v530 = vsel %vm462, %v503, 0.0
    %v531 = vsel %vm463, %v503, 0.0
    %v532 = vsel %vm464, %v503, 0.0
    %v533 = vsel %vm465, %v503, 0.0
    %v534 = vsel %vm466, %v503, 0.0
    %v535 = vsel %vm467, %v503, 0.0
    %v536 = vsel %vm468, %v503, 0.0
    %v537 = vsel %vm469, %v503, 0.0
    %v538 = vsel %vm470, %v503, 0.0
    %v539 = vsel %vm471, %v503, 0.0
    %v540 = vsel %vm472, %v503, 0.0
    %v541 = vsel %vm473, %v503, 0.0
    %v542 = vsel %vm474, %v503, 0.0
    %v543 = vsel %vm475, %v503, 0.0
    %v544 = vsel %vm476, %v503, 0.0
    %v545 = vsel %vm477, %v503, 0.0
    %v546 = vsel %vm478, %v503, 0.0
    %v547 = vsel %vm479, %v503, 0.0
    %v548 = vsel %vm480, %v503, 0.0
    %v549 = vsel %vm481, %v503, 0.0
    %v550 = vsel %vm482, %v503, 0.0
    %v551 = vsel %vm483, %v503, 0.0
    %v552 = vsel %vm484, %v503, 0.0
    %v553 = vsel %vm485, %v503, 0.0
    %v554 = vsel %vm486, %v503, 0.0
    %v555 = vsel %vm487, %v503, 0.0
    %v556 = vsel %vm488, %v503, 0.0
    %v557 = vsel %vm489, %v503, 0.0
    %v558 = vsel %vm490, %v503, 0.0
    %v559 = vsel %vm491, %v503, 0.0
    %v560 = vsel %vm492, %v503, 0.0
    %v561 = vsel %vm493, %v503, 0.0
    %v562 = vsel %vm494, %v503, 0.0
    %v563 = vsel %vm495, %v503, 0.0
    %v564 = vsel %vm496, %v503, 0.0
    %v565 = vsel %vm497, %v503, 0.0
    %v566 = vsel %vm498, %v503, 0.0
    %v567 = vsel %vm499, %v503, 0.0
    %vm568 = vcmp.eq.s32.totalorder %v372, 1
    %vm569 = vcmp.eq.s32.totalorder %v373, 1
    %vm570 = vcmp.eq.s32.totalorder %v374, 1
    %vm571 = vcmp.eq.s32.totalorder %v375, 1
    %vm572 = vcmp.eq.s32.totalorder %v376, 1
    %vm573 = vcmp.eq.s32.totalorder %v377, 1
    %vm574 = vcmp.eq.s32.totalorder %v378, 1
    %vm575 = vcmp.eq.s32.totalorder %v379, 1
    %vm576 = vcmp.eq.s32.totalorder %v380, 1
    %vm577 = vcmp.eq.s32.totalorder %v381, 1
    %vm578 = vcmp.eq.s32.totalorder %v382, 1
    %vm579 = vcmp.eq.s32.totalorder %v383, 1
    %vm580 = vcmp.eq.s32.totalorder %v384, 1
    %vm581 = vcmp.eq.s32.totalorder %v385, 1
    %vm582 = vcmp.eq.s32.totalorder %v386, 1
    %vm583 = vcmp.eq.s32.totalorder %v387, 1
    %vm584 = vcmp.eq.s32.totalorder %v388, 1
    %vm585 = vcmp.eq.s32.totalorder %v389, 1
    %vm586 = vcmp.eq.s32.totalorder %v390, 1
    %vm587 = vcmp.eq.s32.totalorder %v391, 1
    %vm588 = vcmp.eq.s32.totalorder %v392, 1
    %vm589 = vcmp.eq.s32.totalorder %v393, 1
    %vm590 = vcmp.eq.s32.totalorder %v394, 1
    %vm591 = vcmp.eq.s32.totalorder %v395, 1
    %vm592 = vcmp.eq.s32.totalorder %v396, 1
    %vm593 = vcmp.eq.s32.totalorder %v397, 1
    %vm594 = vcmp.eq.s32.totalorder %v398, 1
    %vm595 = vcmp.eq.s32.totalorder %v399, 1
    %vm596 = vcmp.eq.s32.totalorder %v400, 1
    %vm597 = vcmp.eq.s32.totalorder %v401, 1
    %vm598 = vcmp.eq.s32.totalorder %v402, 1
    %vm599 = vcmp.eq.s32.totalorder %v403, 1
    %vm600 = vcmp.eq.s32.totalorder %v404, 1
    %vm601 = vcmp.eq.s32.totalorder %v405, 1
    %vm602 = vcmp.eq.s32.totalorder %v406, 1
    %vm603 = vcmp.eq.s32.totalorder %v407, 1
    %vm604 = vcmp.eq.s32.totalorder %v408, 1
    %vm605 = vcmp.eq.s32.totalorder %v409, 1
    %vm606 = vcmp.eq.s32.totalorder %v410, 1
    %vm607 = vcmp.eq.s32.totalorder %v411, 1
    %vm608 = vcmp.eq.s32.totalorder %v412, 1
    %vm609 = vcmp.eq.s32.totalorder %v413, 1
    %vm610 = vcmp.eq.s32.totalorder %v414, 1
    %vm611 = vcmp.eq.s32.totalorder %v415, 1
    %vm612 = vcmp.eq.s32.totalorder %v416, 1
    %vm613 = vcmp.eq.s32.totalorder %v417, 1
    %vm614 = vcmp.eq.s32.totalorder %v418, 1
    %vm615 = vcmp.eq.s32.totalorder %v419, 1
    %vm616 = vcmp.eq.s32.totalorder %v420, 1
    %vm617 = vcmp.eq.s32.totalorder %v421, 1
    %vm618 = vcmp.eq.s32.totalorder %v422, 1
    %vm619 = vcmp.eq.s32.totalorder %v423, 1
    %vm620 = vcmp.eq.s32.totalorder %v424, 1
    %vm621 = vcmp.eq.s32.totalorder %v425, 1
    %vm622 = vcmp.eq.s32.totalorder %v426, 1
    %vm623 = vcmp.eq.s32.totalorder %v427, 1
    %vm624 = vcmp.eq.s32.totalorder %v428, 1
    %vm625 = vcmp.eq.s32.totalorder %v429, 1
    %vm626 = vcmp.eq.s32.totalorder %v430, 1
    %vm627 = vcmp.eq.s32.totalorder %v431, 1
    %vm628 = vcmp.eq.s32.totalorder %v432, 1
    %vm629 = vcmp.eq.s32.totalorder %v433, 1
    %vm630 = vcmp.eq.s32.totalorder %v434, 1
    %vm631 = vcmp.eq.s32.totalorder %v435, 1
    %v632 = vlaneseq
    %v633 = vshrl.u32 %v632, 7
    %v634 = vsub.s32 0, %v633
    %v635 = vrot.slane %v43, %v634
    %v636 = vsel %vm568, %v635, %v504
    %v637 = vsel %vm569, %v635, %v505
    %v638 = vsel %vm570, %v635, %v506
    %v639 = vsel %vm571, %v635, %v507
    %v640 = vsel %vm572, %v635, %v508
    %v641 = vsel %vm573, %v635, %v509
    %v642 = vsel %vm574, %v635, %v510
    %v643 = vsel %vm575, %v635, %v511
    %v644 = vsel %vm576, %v635, %v512
    %v645 = vsel %vm577, %v635, %v513
    %v646 = vsel %vm578, %v635, %v514
    %v647 = vsel %vm579, %v635, %v515
    %v648 = vsel %vm580, %v635, %v516
    %v649 = vsel %vm581, %v635, %v517
    %v650 = vsel %vm582, %v635, %v518
    %v651 = vsel %vm583, %v635, %v519
    %v652 = vsel %vm584, %v635, %v520
    %v653 = vsel %vm585, %v635, %v521
    %v654 = vsel %vm586, %v635, %v522
    %v655 = vsel %vm587, %v635, %v523
    %v656 = vsel %vm588, %v635, %v524
    %v657 = vsel %vm589, %v635, %v525
    %v658 = vsel %vm590, %v635, %v526
    %v659 = vsel %vm591, %v635, %v527
    %v660 = vsel %vm592, %v635, %v528
    %v661 = vsel %vm593, %v635, %v529
    %v662 = vsel %vm594, %v635, %v530
    %v663 = vsel %vm595, %v635, %v531
    %v664 = vsel %vm596, %v635, %v532
    %v665 = vsel %vm597, %v635, %v533
    %v666 = vsel %vm598, %v635, %v534
    %v667 = vsel %vm599, %v635, %v535
    %v668 = vsel %vm600, %v635, %v536
    %v669 = vsel %vm601, %v635, %v537
    %v670 = vsel %vm602, %v635, %v538
    %v671 = vsel %vm603, %v635, %v539
    %v672 = vsel %vm604, %v635, %v540
    %v673 = vsel %vm605, %v635, %v541
    %v674 = vsel %vm606, %v635, %v542
    %v675 = vsel %vm607, %v635, %v543
    %v676 = vsel %vm608, %v635, %v544
    %v677 = vsel %vm609, %v635, %v545
    %v678 = vsel %vm610, %v635, %v546
    %v679 = vsel %vm611, %v635, %v547
    %v680 = vsel %vm612, %v635, %v548
    %v681 = vsel %vm613, %v635, %v549
    %v682 = vsel %vm614, %v635, %v550
    %v683 = vsel %vm615, %v635, %v551
    %v684 = vsel %vm616, %v635, %v552
    %v685 = vsel %vm617, %v635, %v553
    %v686 = vsel %vm618, %v635, %v554
    %v687 = vsel %vm619, %v635, %v555
    %v688 = vsel %vm620, %v635, %v556
    %v689 = vsel %vm621, %v635, %v557
    %v690 = vsel %vm622, %v635, %v558
    %v691 = vsel %vm623, %v635, %v559
    %v692 = vsel %vm624, %v635, %v560
    %v693 = vsel %vm625, %v635, %v561
    %v694 = vsel %vm626, %v635, %v562
    %v695 = vsel %vm627, %v635, %v563
    %v696 = vsel %vm628, %v635, %v564
    %v697 = vsel %vm629, %v635, %v565
    %v698 = vsel %vm630, %v635, %v566
    %v699 = vsel %vm631, %v635, %v567
    %vm700 = vcmp.eq.s32.totalorder %v372, 2
    %vm701 = vcmp.eq.s32.totalorder %v373, 2
    %vm702 = vcmp.eq.s32.totalorder %v374, 2
    %vm703 = vcmp.eq.s32.totalorder %v375, 2
    %vm704 = vcmp.eq.s32.totalorder %v376, 2
    %vm705 = vcmp.eq.s32.totalorder %v377, 2
    %vm706 = vcmp.eq.s32.totalorder %v378, 2
    %vm707 = vcmp.eq.s32.totalorder %v379, 2
    %vm708 = vcmp.eq.s32.totalorder %v380, 2
    %vm709 = vcmp.eq.s32.totalorder %v381, 2
    %vm710 = vcmp.eq.s32.totalorder %v382, 2
    %vm711 = vcmp.eq.s32.totalorder %v383, 2
    %vm712 = vcmp.eq.s32.totalorder %v384, 2
    %vm713 = vcmp.eq.s32.totalorder %v385, 2
    %vm714 = vcmp.eq.s32.totalorder %v386, 2
    %vm715 = vcmp.eq.s32.totalorder %v387, 2
    %vm716 = vcmp.eq.s32.totalorder %v388, 2
    %vm717 = vcmp.eq.s32.totalorder %v389, 2
    %vm718 = vcmp.eq.s32.totalorder %v390, 2
    %vm719 = vcmp.eq.s32.totalorder %v391, 2
    %vm720 = vcmp.eq.s32.totalorder %v392, 2
    %vm721 = vcmp.eq.s32.totalorder %v393, 2
    %vm722 = vcmp.eq.s32.totalorder %v394, 2
    %vm723 = vcmp.eq.s32.totalorder %v395, 2
    %vm724 = vcmp.eq.s32.totalorder %v396, 2
    %vm725 = vcmp.eq.s32.totalorder %v397, 2
    %vm726 = vcmp.eq.s32.totalorder %v398, 2
    %vm727 = vcmp.eq.s32.totalorder %v399, 2
    %vm728 = vcmp.eq.s32.totalorder %v400, 2
    %vm729 = vcmp.eq.s32.totalorder %v401, 2
    %vm730 = vcmp.eq.s32.totalorder %v402, 2
    %vm731 = vcmp.eq.s32.totalorder %v403, 2
    %vm732 = vcmp.eq.s32.totalorder %v404, 2
    %vm733 = vcmp.eq.s32.totalorder %v405, 2
    %vm734 = vcmp.eq.s32.totalorder %v406, 2
    %vm735 = vcmp.eq.s32.totalorder %v407, 2
    %vm736 = vcmp.eq.s32.totalorder %v408, 2
    %vm737 = vcmp.eq.s32.totalorder %v409, 2
    %vm738 = vcmp.eq.s32.totalorder %v410, 2
    %vm739 = vcmp.eq.s32.totalorder %v411, 2
    %vm740 = vcmp.eq.s32.totalorder %v412, 2
    %vm741 = vcmp.eq.s32.totalorder %v413, 2
    %vm742 = vcmp.eq.s32.totalorder %v414, 2
    %vm743 = vcmp.eq.s32.totalorder %v415, 2
    %vm744 = vcmp.eq.s32.totalorder %v416, 2
    %vm745 = vcmp.eq.s32.totalorder %v417, 2
    %vm746 = vcmp.eq.s32.totalorder %v418, 2
    %vm747 = vcmp.eq.s32.totalorder %v419, 2
    %vm748 = vcmp.eq.s32.totalorder %v420, 2
    %vm749 = vcmp.eq.s32.totalorder %v421, 2
    %vm750 = vcmp.eq.s32.totalorder %v422, 2
    %vm751 = vcmp.eq.s32.totalorder %v423, 2
    %vm752 = vcmp.eq.s32.totalorder %v424, 2
    %vm753 = vcmp.eq.s32.totalorder %v425, 2
    %vm754 = vcmp.eq.s32.totalorder %v426, 2
    %vm755 = vcmp.eq.s32.totalorder %v427, 2
    %vm756 = vcmp.eq.s32.totalorder %v428, 2
    %vm757 = vcmp.eq.s32.totalorder %v429, 2
    %vm758 = vcmp.eq.s32.totalorder %v430, 2
    %vm759 = vcmp.eq.s32.totalorder %v431, 2
    %vm760 = vcmp.eq.s32.totalorder %v432, 2
    %vm761 = vcmp.eq.s32.totalorder %v433, 2
    %vm762 = vcmp.eq.s32.totalorder %v434, 2
    %vm763 = vcmp.eq.s32.totalorder %v435, 2
    %v764 = vlaneseq
    %v765 = vshrl.u32 %v764, 7
    %v766 = vsub.s32 0, %v765
    %v767 = vrot.slane %v46, %v766
    %v768 = vsel %vm700, %v767, %v636
    %v769 = vsel %vm701, %v767, %v637
    %v770 = vsel %vm702, %v767, %v638
    %v771 = vsel %vm703, %v767, %v639
    %v772 = vsel %vm704, %v767, %v640
    %v773 = vsel %vm705, %v767, %v641
    %v774 = vsel %vm706, %v767, %v642
    %v775 = vsel %vm707, %v767, %v643
    %v776 = vsel %vm708, %v767, %v644
    %v777 = vsel %vm709, %v767, %v645
    %v778 = vsel %vm710, %v767, %v646
    %v779 = vsel %vm711, %v767, %v647
    %v780 = vsel %vm712, %v767, %v648
    %v781 = vsel %vm713, %v767, %v649
    %v782 = vsel %vm714, %v767, %v650
    %v783 = vsel %vm715, %v767, %v651
    %v784 = vsel %vm716, %v767, %v652
    %v785 = vsel %vm717, %v767, %v653
    %v786 = vsel %vm718, %v767, %v654
    %v787 = vsel %vm719, %v767, %v655
    %v788 = vsel %vm720, %v767, %v656
    %v789 = vsel %vm721, %v767, %v657
    %v790 = vsel %vm722, %v767, %v658
    %v791 = vsel %vm723, %v767, %v659
    %v792 = vsel %vm724, %v767, %v660
    %v793 = vsel %vm725, %v767, %v661
    %v794 = vsel %vm726, %v767, %v662
    %v795 = vsel %vm727, %v767, %v663
    %v796 = vsel %vm728, %v767, %v664
    %v797 = vsel %vm729, %v767, %v665
    %v798 = vsel %vm730, %v767, %v666
    %v799 = vsel %vm731, %v767, %v667
    %v800 = vsel %vm732, %v767, %v668
    %v801 = vsel %vm733, %v767, %v669
    %v802 = vsel %vm734, %v767, %v670
    %v803 = vsel %vm735, %v767, %v671
    %v804 = vsel %vm736, %v767, %v672
    %v805 = vsel %vm737, %v767, %v673
    %v806 = vsel %vm738, %v767, %v674
    %v807 = vsel %vm739, %v767, %v675
    %v808 = vsel %vm740, %v767, %v676
    %v809 = vsel %vm741, %v767, %v677
    %v810 = vsel %vm742, %v767, %v678
    %v811 = vsel %vm743, %v767, %v679
    %v812 = vsel %vm744, %v767, %v680
    %v813 = vsel %vm745, %v767, %v681
    %v814 = vsel %vm746, %v767, %v682
    %v815 = vsel %vm747, %v767, %v683
    %v816 = vsel %vm748, %v767, %v684
    %v817 = vsel %vm749, %v767, %v685
    %v818 = vsel %vm750, %v767, %v686
    %v819 = vsel %vm751, %v767, %v687
    %v820 = vsel %vm752, %v767, %v688
    %v821 = vsel %vm753, %v767, %v689
    %v822 = vsel %vm754, %v767, %v690
    %v823 = vsel %vm755, %v767, %v691
    %v824 = vsel %vm756, %v767, %v692
    %v825 = vsel %vm757, %v767, %v693
    %v826 = vsel %vm758, %v767, %v694
    %v827 = vsel %vm759, %v767, %v695
    %v828 = vsel %vm760, %v767, %v696
    %v829 = vsel %vm761, %v767, %v697
    %v830 = vsel %vm762, %v767, %v698
    %v831 = vsel %vm763, %v767, %v699
    %v832 = vlaneseq
    %v833 = vshrl.u32 %v832, 7
    %v834 = vsub.s32 1, %v833
    %v835 = vrot.slane %v37, %v834
    %v836 = vsub.s32 %v240, %v835
    %v837 = vsub.s32 %v241, %v835
    %v838 = vsub.s32 %v242, %v835
    %v839 = vsub.s32 %v243, %v835
    %v840 = vsub.s32 %v244, %v835
    %v841 = vsub.s32 %v245, %v835
    %v842 = vsub.s32 %v246, %v835
    %v843 = vsub.s32 %v247, %v835
    %v844 = vsub.s32 %v248, %v835
    %v845 = vsub.s32 %v249, %v835
    %v846 = vsub.s32 %v250, %v835
    %v847 = vsub.s32 %v251, %v835
    %v848 = vsub.s32 %v252, %v835
    %v849 = vsub.s32 %v253, %v835
    %v850 = vsub.s32 %v254, %v835
    %v851 = vsub.s32 %v255, %v835
    %v852 = vsub.s32 %v256, %v835
    %v853 = vsub.s32 %v257, %v835
    %v854 = vsub.s32 %v258, %v835
    %v855 = vsub.s32 %v259, %v835
    %v856 = vsub.s32 %v260, %v835
    %v857 = vsub.s32 %v261, %v835
    %v858 = vsub.s32 %v262, %v835
    %v859 = vsub.s32 %v263, %v835
    %v860 = vsub.s32 %v264, %v835
    %v861 = vsub.s32 %v265, %v835
    %v862 = vsub.s32 %v266, %v835
    %v863 = vsub.s32 %v267, %v835
    %v864 = vsub.s32 %v268, %v835
    %v865 = vsub.s32 %v269, %v835
    %v866 = vsub.s32 %v270, %v835
    %v867 = vsub.s32 %v271, %v835
    %v868 = vsub.s32 %v272, %v835
    %v869 = vsub.s32 %v273, %v835
    %v870 = vsub.s32 %v274, %v835
    %v871 = vsub.s32 %v275, %v835
    %v872 = vsub.s32 %v276, %v835
    %v873 = vsub.s32 %v277, %v835
    %v874 = vsub.s32 %v278, %v835
    %v875 = vsub.s32 %v279, %v835
    %v876 = vsub.s32 %v280, %v835
    %v877 = vsub.s32 %v281, %v835
    %v878 = vsub.s32 %v282, %v835
    %v879 = vsub.s32 %v283, %v835
    %v880 = vsub.s32 %v284, %v835
    %v881 = vsub.s32 %v285, %v835
    %v882 = vsub.s32 %v286, %v835
    %v883 = vsub.s32 %v287, %v835
    %v884 = vsub.s32 %v288, %v835
    %v885 = vsub.s32 %v289, %v835
    %v886 = vsub.s32 %v290, %v835
    %v887 = vsub.s32 %v291, %v835
    %v888 = vsub.s32 %v292, %v835
    %v889 = vsub.s32 %v293, %v835
    %v890 = vsub.s32 %v294, %v835
    %v891 = vsub.s32 %v295, %v835
    %v892 = vsub.s32 %v296, %v835
    %v893 = vsub.s32 %v297, %v835
    %v894 = vsub.s32 %v298, %v835
    %v895 = vsub.s32 %v299, %v835
    %v896 = vsub.s32 %v300, %v835
    %v897 = vsub.s32 %v301, %v835
    %v898 = vsub.s32 %v302, %v835
    %v899 = vsub.s32 %v303, %v835
    %vm900 = vcmp.eq.s32.totalorder %v836, 0
    %vm901 = vcmp.eq.s32.totalorder %v837, 0
    %vm902 = vcmp.eq.s32.totalorder %v838, 0
    %vm903 = vcmp.eq.s32.totalorder %v839, 0
    %vm904 = vcmp.eq.s32.totalorder %v840, 0
    %vm905 = vcmp.eq.s32.totalorder %v841, 0
    %vm906 = vcmp.eq.s32.totalorder %v842, 0
    %vm907 = vcmp.eq.s32.totalorder %v843, 0
    %vm908 = vcmp.eq.s32.totalorder %v844, 0
    %vm909 = vcmp.eq.s32.totalorder %v845, 0
    %vm910 = vcmp.eq.s32.totalorder %v846, 0
    %vm911 = vcmp.eq.s32.totalorder %v847, 0
    %vm912 = vcmp.eq.s32.totalorder %v848, 0
    %vm913 = vcmp.eq.s32.totalorder %v849, 0
    %vm914 = vcmp.eq.s32.totalorder %v850, 0
    %vm915 = vcmp.eq.s32.totalorder %v851, 0
    %vm916 = vcmp.eq.s32.totalorder %v852, 0
    %vm917 = vcmp.eq.s32.totalorder %v853, 0
    %vm918 = vcmp.eq.s32.totalorder %v854, 0
    %vm919 = vcmp.eq.s32.totalorder %v855, 0
    %vm920 = vcmp.eq.s32.totalorder %v856, 0
    %vm921 = vcmp.eq.s32.totalorder %v857, 0
    %vm922 = vcmp.eq.s32.totalorder %v858, 0
    %vm923 = vcmp.eq.s32.totalorder %v859, 0
    %vm924 = vcmp.eq.s32.totalorder %v860, 0
    %vm925 = vcmp.eq.s32.totalorder %v861, 0
    %vm926 = vcmp.eq.s32.totalorder %v862, 0
    %vm927 = vcmp.eq.s32.totalorder %v863, 0
    %vm928 = vcmp.eq.s32.totalorder %v864, 0
    %vm929 = vcmp.eq.s32.totalorder %v865, 0
    %vm930 = vcmp.eq.s32.totalorder %v866, 0
    %vm931 = vcmp.eq.s32.totalorder %v867, 0
    %vm932 = vcmp.eq.s32.totalorder %v868, 0
    %vm933 = vcmp.eq.s32.totalorder %v869, 0
    %vm934 = vcmp.eq.s32.totalorder %v870, 0
    %vm935 = vcmp.eq.s32.totalorder %v871, 0
    %vm936 = vcmp.eq.s32.totalorder %v872, 0
    %vm937 = vcmp.eq.s32.totalorder %v873, 0
    %vm938 = vcmp.eq.s32.totalorder %v874, 0
    %vm939 = vcmp.eq.s32.totalorder %v875, 0
    %vm940 = vcmp.eq.s32.totalorder %v876, 0
    %vm941 = vcmp.eq.s32.totalorder %v877, 0
    %vm942 = vcmp.eq.s32.totalorder %v878, 0
    %vm943 = vcmp.eq.s32.totalorder %v879, 0
    %vm944 = vcmp.eq.s32.totalorder %v880, 0
    %vm945 = vcmp.eq.s32.totalorder %v881, 0
    %vm946 = vcmp.eq.s32.totalorder %v882, 0
    %vm947 = vcmp.eq.s32.totalorder %v883, 0
    %vm948 = vcmp.eq.s32.totalorder %v884, 0
    %vm949 = vcmp.eq.s32.totalorder %v885, 0
    %vm950 = vcmp.eq.s32.totalorder %v886, 0
    %vm951 = vcmp.eq.s32.totalorder %v887, 0
    %vm952 = vcmp.eq.s32.totalorder %v888, 0
    %vm953 = vcmp.eq.s32.totalorder %v889, 0
    %vm954 = vcmp.eq.s32.totalorder %v890, 0
    %vm955 = vcmp.eq.s32.totalorder %v891, 0
    %vm956 = vcmp.eq.s32.totalorder %v892, 0
    %vm957 = vcmp.eq.s32.totalorder %v893, 0
    %vm958 = vcmp.eq.s32.totalorder %v894, 0
    %vm959 = vcmp.eq.s32.totalorder %v895, 0
    %vm960 = vcmp.eq.s32.totalorder %v896, 0
    %vm961 = vcmp.eq.s32.totalorder %v897, 0
    %vm962 = vcmp.eq.s32.totalorder %v898, 0
    %vm963 = vcmp.eq.s32.totalorder %v899, 0
    %v964 = vlaneseq
    %v965 = vshrl.u32 %v964, 7
    %v966 = vsub.s32 1, %v965
    %v967 = vrot.slane %v40, %v966
    %v968 = vsel %vm900, %v967, 0.0
    %v969 = vsel %vm901, %v967, 0.0
    %v970 = vsel %vm902, %v967, 0.0
    %v971 = vsel %vm903, %v967, 0.0
    %v972 = vsel %vm904, %v967, 0.0
    %v973 = vsel %vm905, %v967, 0.0
    %v974 = vsel %vm906, %v967, 0.0
    %v975 = vsel %vm907, %v967, 0.0
    %v976 = vsel %vm908, %v967, 0.0
    %v977 = vsel %vm909, %v967, 0.0
    %v978 = vsel %vm910, %v967, 0.0
    %v979 = vsel %vm911, %v967, 0.0
    %v980 = vsel %vm912, %v967, 0.0
    %v981 = vsel %vm913, %v967, 0.0
    %v982 = vsel %vm914, %v967, 0.0
    %v983 = vsel %vm915, %v967, 0.0
    %v984 = vsel %vm916, %v967, 0.0
    %v985 = vsel %vm917, %v967, 0.0
    %v986 = vsel %vm918, %v967, 0.0
    %v987 = vsel %vm919, %v967, 0.0
    %v988 = vsel %vm920, %v967, 0.0
    %v989 = vsel %vm921, %v967, 0.0
    %v990 = vsel %vm922, %v967, 0.0
    %v991 = vsel %vm923, %v967, 0.0
    %v992 = vsel %vm924, %v967, 0.0
    %v993 = vsel %vm925, %v967, 0.0
    %v994 = vsel %vm926, %v967, 0.0
    %v995 = vsel %vm927, %v967, 0.0
    %v996 = vsel %vm928, %v967, 0.0
    %v997 = vsel %vm929, %v967, 0.0
    %v998 = vsel %vm930, %v967, 0.0
    %v999 = vsel %vm931, %v967, 0.0
    %v1000 = vsel %vm932, %v967, 0.0
    %v1001 = vsel %vm933, %v967, 0.0
    %v1002 = vsel %vm934, %v967, 0.0
    %v1003 = vsel %vm935, %v967, 0.0
    %v1004 = vsel %vm936, %v967, 0.0
    %v1005 = vsel %vm937, %v967, 0.0
    %v1006 = vsel %vm938, %v967, 0.0
    %v1007 = vsel %vm939, %v967, 0.0
    %v1008 = vsel %vm940, %v967, 0.0
    %v1009 = vsel %vm941, %v967, 0.0
    %v1010 = vsel %vm942, %v967, 0.0
    %v1011 = vsel %vm943, %v967, 0.0
    %v1012 = vsel %vm944, %v967, 0.0
    %v1013 = vsel %vm945, %v967, 0.0
    %v1014 = vsel %vm946, %v967, 0.0
    %v1015 = vsel %vm947, %v967, 0.0
    %v1016 = vsel %vm948, %v967, 0.0
    %v1017 = vsel %vm949, %v967, 0.0
    %v1018 = vsel %vm950, %v967, 0.0
    %v1019 = vsel %vm951, %v967, 0.0
    %v1020 = vsel %vm952, %v967, 0.0
    %v1021 = vsel %vm953, %v967, 0.0
    %v1022 = vsel %vm954, %v967, 0.0
    %v1023 = vsel %vm955, %v967, 0.0
    %v1024 = vsel %vm956, %v967, 0.0
    %v1025 = vsel %vm957, %v967, 0.0
    %v1026 = vsel %vm958, %v967, 0.0
    %v1027 = vsel %vm959, %v967, 0.0
    %v1028 = vsel %vm960, %v967, 0.0
    %v1029 = vsel %vm961, %v967, 0.0
    %v1030 = vsel %vm962, %v967, 0.0
    %v1031 = vsel %vm963, %v967, 0.0
    %vm1032 = vcmp.eq.s32.totalorder %v836, 1
    %vm1033 = vcmp.eq.s32.totalorder %v837, 1
    %vm1034 = vcmp.eq.s32.totalorder %v838, 1
    %vm1035 = vcmp.eq.s32.totalorder %v839, 1
    %vm1036 = vcmp.eq.s32.totalorder %v840, 1
    %vm1037 = vcmp.eq.s32.totalorder %v841, 1
    %vm1038 = vcmp.eq.s32.totalorder %v842, 1
    %vm1039 = vcmp.eq.s32.totalorder %v843, 1
    %vm1040 = vcmp.eq.s32.totalorder %v844, 1
    %vm1041 = vcmp.eq.s32.totalorder %v845, 1
    %vm1042 = vcmp.eq.s32.totalorder %v846, 1
    %vm1043 = vcmp.eq.s32.totalorder %v847, 1
    %vm1044 = vcmp.eq.s32.totalorder %v848, 1
    %vm1045 = vcmp.eq.s32.totalorder %v849, 1
    %vm1046 = vcmp.eq.s32.totalorder %v850, 1
    %vm1047 = vcmp.eq.s32.totalorder %v851, 1
    %vm1048 = vcmp.eq.s32.totalorder %v852, 1
    %vm1049 = vcmp.eq.s32.totalorder %v853, 1
    %vm1050 = vcmp.eq.s32.totalorder %v854, 1
    %vm1051 = vcmp.eq.s32.totalorder %v855, 1
    %vm1052 = vcmp.eq.s32.totalorder %v856, 1
    %vm1053 = vcmp.eq.s32.totalorder %v857, 1
    %vm1054 = vcmp.eq.s32.totalorder %v858, 1
    %vm1055 = vcmp.eq.s32.totalorder %v859, 1
    %vm1056 = vcmp.eq.s32.totalorder %v860, 1
    %vm1057 = vcmp.eq.s32.totalorder %v861, 1
    %vm1058 = vcmp.eq.s32.totalorder %v862, 1
    %vm1059 = vcmp.eq.s32.totalorder %v863, 1
    %vm1060 = vcmp.eq.s32.totalorder %v864, 1
    %vm1061 = vcmp.eq.s32.totalorder %v865, 1
    %vm1062 = vcmp.eq.s32.totalorder %v866, 1
    %vm1063 = vcmp.eq.s32.totalorder %v867, 1
    %vm1064 = vcmp.eq.s32.totalorder %v868, 1
    %vm1065 = vcmp.eq.s32.totalorder %v869, 1
    %vm1066 = vcmp.eq.s32.totalorder %v870, 1
    %vm1067 = vcmp.eq.s32.totalorder %v871, 1
    %vm1068 = vcmp.eq.s32.totalorder %v872, 1
    %vm1069 = vcmp.eq.s32.totalorder %v873, 1
    %vm1070 = vcmp.eq.s32.totalorder %v874, 1
    %vm1071 = vcmp.eq.s32.totalorder %v875, 1
    %vm1072 = vcmp.eq.s32.totalorder %v876, 1
    %vm1073 = vcmp.eq.s32.totalorder %v877, 1
    %vm1074 = vcmp.eq.s32.totalorder %v878, 1
    %vm1075 = vcmp.eq.s32.totalorder %v879, 1
    %vm1076 = vcmp.eq.s32.totalorder %v880, 1
    %vm1077 = vcmp.eq.s32.totalorder %v881, 1
    %vm1078 = vcmp.eq.s32.totalorder %v882, 1
    %vm1079 = vcmp.eq.s32.totalorder %v883, 1
    %vm1080 = vcmp.eq.s32.totalorder %v884, 1
    %vm1081 = vcmp.eq.s32.totalorder %v885, 1
    %vm1082 = vcmp.eq.s32.totalorder %v886, 1
    %vm1083 = vcmp.eq.s32.totalorder %v887, 1
    %vm1084 = vcmp.eq.s32.totalorder %v888, 1
    %vm1085 = vcmp.eq.s32.totalorder %v889, 1
    %vm1086 = vcmp.eq.s32.totalorder %v890, 1
    %vm1087 = vcmp.eq.s32.totalorder %v891, 1
    %vm1088 = vcmp.eq.s32.totalorder %v892, 1
    %vm1089 = vcmp.eq.s32.totalorder %v893, 1
    %vm1090 = vcmp.eq.s32.totalorder %v894, 1
    %vm1091 = vcmp.eq.s32.totalorder %v895, 1
    %vm1092 = vcmp.eq.s32.totalorder %v896, 1
    %vm1093 = vcmp.eq.s32.totalorder %v897, 1
    %vm1094 = vcmp.eq.s32.totalorder %v898, 1
    %vm1095 = vcmp.eq.s32.totalorder %v899, 1
    %v1096 = vlaneseq
    %v1097 = vshrl.u32 %v1096, 7
    %v1098 = vsub.s32 1, %v1097
    %v1099 = vrot.slane %v43, %v1098
    %v1100 = vsel %vm1032, %v1099, %v968
    %v1101 = vsel %vm1033, %v1099, %v969
    %v1102 = vsel %vm1034, %v1099, %v970
    %v1103 = vsel %vm1035, %v1099, %v971
    %v1104 = vsel %vm1036, %v1099, %v972
    %v1105 = vsel %vm1037, %v1099, %v973
    %v1106 = vsel %vm1038, %v1099, %v974
    %v1107 = vsel %vm1039, %v1099, %v975
    %v1108 = vsel %vm1040, %v1099, %v976
    %v1109 = vsel %vm1041, %v1099, %v977
    %v1110 = vsel %vm1042, %v1099, %v978
    %v1111 = vsel %vm1043, %v1099, %v979
    %v1112 = vsel %vm1044, %v1099, %v980
    %v1113 = vsel %vm1045, %v1099, %v981
    %v1114 = vsel %vm1046, %v1099, %v982
    %v1115 = vsel %vm1047, %v1099, %v983
    %v1116 = vsel %vm1048, %v1099, %v984
    %v1117 = vsel %vm1049, %v1099, %v985
    %v1118 = vsel %vm1050, %v1099, %v986
    %v1119 = vsel %vm1051, %v1099, %v987
    %v1120 = vsel %vm1052, %v1099, %v988
    %v1121 = vsel %vm1053, %v1099, %v989
    %v1122 = vsel %vm1054, %v1099, %v990
    %v1123 = vsel %vm1055, %v1099, %v991
    %v1124 = vsel %vm1056, %v1099, %v992
    %v1125 = vsel %vm1057, %v1099, %v993
    %v1126 = vsel %vm1058, %v1099, %v994
    %v1127 = vsel %vm1059, %v1099, %v995
    %v1128 = vsel %vm1060, %v1099, %v996
    %v1129 = vsel %vm1061, %v1099, %v997
    %v1130 = vsel %vm1062, %v1099, %v998
    %v1131 = vsel %vm1063, %v1099, %v999
    %v1132 = vsel %vm1064, %v1099, %v1000
    %v1133 = vsel %vm1065, %v1099, %v1001
    %v1134 = vsel %vm1066, %v1099, %v1002
    %v1135 = vsel %vm1067, %v1099, %v1003
    %v1136 = vsel %vm1068, %v1099, %v1004
    %v1137 = vsel %vm1069, %v1099, %v1005
    %v1138 = vsel %vm1070, %v1099, %v1006
    %v1139 = vsel %vm1071, %v1099, %v1007
    %v1140 = vsel %vm1072, %v1099, %v1008
    %v1141 = vsel %vm1073, %v1099, %v1009
    %v1142 = vsel %vm1074, %v1099, %v1010
    %v1143 = vsel %vm1075, %v1099, %v1011
    %v1144 = vsel %vm1076, %v1099, %v1012
    %v1145 = vsel %vm1077, %v1099, %v1013
    %v1146 = vsel %vm1078, %v1099, %v1014
    %v1147 = vsel %vm1079, %v1099, %v1015
    %v1148 = vsel %vm1080, %v1099, %v1016
    %v1149 = vsel %vm1081, %v1099, %v1017
    %v1150 = vsel %vm1082, %v1099, %v1018
    %v1151 = vsel %vm1083, %v1099, %v1019
    %v1152 = vsel %vm1084, %v1099, %v1020
    %v1153 = vsel %vm1085, %v1099, %v1021
    %v1154 = vsel %vm1086, %v1099, %v1022
    %v1155 = vsel %vm1087, %v1099, %v1023
    %v1156 = vsel %vm1088, %v1099, %v1024
    %v1157 = vsel %vm1089, %v1099, %v1025
    %v1158 = vsel %vm1090, %v1099, %v1026
    %v1159 = vsel %vm1091, %v1099, %v1027
    %v1160 = vsel %vm1092, %v1099, %v1028
    %v1161 = vsel %vm1093, %v1099, %v1029
    %v1162 = vsel %vm1094, %v1099, %v1030
    %v1163 = vsel %vm1095, %v1099, %v1031
    %vm1164 = vcmp.eq.s32.totalorder %v836, 2
    %vm1165 = vcmp.eq.s32.totalorder %v837, 2
    %vm1166 = vcmp.eq.s32.totalorder %v838, 2
    %vm1167 = vcmp.eq.s32.totalorder %v839, 2
    %vm1168 = vcmp.eq.s32.totalorder %v840, 2
    %vm1169 = vcmp.eq.s32.totalorder %v841, 2
    %vm1170 = vcmp.eq.s32.totalorder %v842, 2
    %vm1171 = vcmp.eq.s32.totalorder %v843, 2
    %vm1172 = vcmp.eq.s32.totalorder %v844, 2
    %vm1173 = vcmp.eq.s32.totalorder %v845, 2
    %vm1174 = vcmp.eq.s32.totalorder %v846, 2
    %vm1175 = vcmp.eq.s32.totalorder %v847, 2
    %vm1176 = vcmp.eq.s32.totalorder %v848, 2
    %vm1177 = vcmp.eq.s32.totalorder %v849, 2
    %vm1178 = vcmp.eq.s32.totalorder %v850, 2
    %vm1179 = vcmp.eq.s32.totalorder %v851, 2
    %vm1180 = vcmp.eq.s32.totalorder %v852, 2
    %vm1181 = vcmp.eq.s32.totalorder %v853, 2
    %vm1182 = vcmp.eq.s32.totalorder %v854, 2
    %vm1183 = vcmp.eq.s32.totalorder %v855, 2
    %vm1184 = vcmp.eq.s32.totalorder %v856, 2
    %vm1185 = vcmp.eq.s32.totalorder %v857, 2
    %vm1186 = vcmp.eq.s32.totalorder %v858, 2
    %vm1187 = vcmp.eq.s32.totalorder %v859, 2
    %vm1188 = vcmp.eq.s32.totalorder %v860, 2
    %vm1189 = vcmp.eq.s32.totalorder %v861, 2
    %vm1190 = vcmp.eq.s32.totalorder %v862, 2
    %vm1191 = vcmp.eq.s32.totalorder %v863, 2
    %vm1192 = vcmp.eq.s32.totalorder %v864, 2
    %vm1193 = vcmp.eq.s32.totalorder %v865, 2
    %vm1194 = vcmp.eq.s32.totalorder %v866, 2
    %vm1195 = vcmp.eq.s32.totalorder %v867, 2
    %vm1196 = vcmp.eq.s32.totalorder %v868, 2
    %vm1197 = vcmp.eq.s32.totalorder %v869, 2
    %vm1198 = vcmp.eq.s32.totalorder %v870, 2
    %vm1199 = vcmp.eq.s32.totalorder %v871, 2
    %vm1200 = vcmp.eq.s32.totalorder %v872, 2
    %vm1201 = vcmp.eq.s32.totalorder %v873, 2
    %vm1202 = vcmp.eq.s32.totalorder %v874, 2
    %vm1203 = vcmp.eq.s32.totalorder %v875, 2
    %vm1204 = vcmp.eq.s32.totalorder %v876, 2
    %vm1205 = vcmp.eq.s32.totalorder %v877, 2
    %vm1206 = vcmp.eq.s32.totalorder %v878, 2
    %vm1207 = vcmp.eq.s32.totalorder %v879, 2
    %vm1208 = vcmp.eq.s32.totalorder %v880, 2
    %vm1209 = vcmp.eq.s32.totalorder %v881, 2
    %vm1210 = vcmp.eq.s32.totalorder %v882, 2
    %vm1211 = vcmp.eq.s32.totalorder %v883, 2
    %vm1212 = vcmp.eq.s32.totalorder %v884, 2
    %vm1213 = vcmp.eq.s32.totalorder %v885, 2
    %vm1214 = vcmp.eq.s32.totalorder %v886, 2
    %vm1215 = vcmp.eq.s32.totalorder %v887, 2
    %vm1216 = vcmp.eq.s32.totalorder %v888, 2
    %vm1217 = vcmp.eq.s32.totalorder %v889, 2
    %vm1218 = vcmp.eq.s32.totalorder %v890, 2
    %vm1219 = vcmp.eq.s32.totalorder %v891, 2
    %vm1220 = vcmp.eq.s32.totalorder %v892, 2
    %vm1221 = vcmp.eq.s32.totalorder %v893, 2
    %vm1222 = vcmp.eq.s32.totalorder %v894, 2
    %vm1223 = vcmp.eq.s32.totalorder %v895, 2
    %vm1224 = vcmp.eq.s32.totalorder %v896, 2
    %vm1225 = vcmp.eq.s32.totalorder %v897, 2
    %vm1226 = vcmp.eq.s32.totalorder %v898, 2
    %vm1227 = vcmp.eq.s32.totalorder %v899, 2
    %v1228 = vlaneseq
    %v1229 = vshrl.u32 %v1228, 7
    %v1230 = vsub.s32 1, %v1229
    %v1231 = vrot.slane %v46, %v1230
    %v1232 = vsel %vm1164, %v1231, %v1100
    %v1233 = vsel %vm1165, %v1231, %v1101
    %v1234 = vsel %vm1166, %v1231, %v1102
    %v1235 = vsel %vm1167, %v1231, %v1103
    %v1236 = vsel %vm1168, %v1231, %v1104
    %v1237 = vsel %vm1169, %v1231, %v1105
    %v1238 = vsel %vm1170, %v1231, %v1106
    %v1239 = vsel %vm1171, %v1231, %v1107
    %v1240 = vsel %vm1172, %v1231, %v1108
    %v1241 = vsel %vm1173, %v1231, %v1109
    %v1242 = vsel %vm1174, %v1231, %v1110
    %v1243 = vsel %vm1175, %v1231, %v1111
    %v1244 = vsel %vm1176, %v1231, %v1112
    %v1245 = vsel %vm1177, %v1231, %v1113
    %v1246 = vsel %vm1178, %v1231, %v1114
    %v1247 = vsel %vm1179, %v1231, %v1115
    %v1248 = vsel %vm1180, %v1231, %v1116
    %v1249 = vsel %vm1181, %v1231, %v1117
    %v1250 = vsel %vm1182, %v1231, %v1118
    %v1251 = vsel %vm1183, %v1231, %v1119
    %v1252 = vsel %vm1184, %v1231, %v1120
    %v1253 = vsel %vm1185, %v1231, %v1121
    %v1254 = vsel %vm1186, %v1231, %v1122
    %v1255 = vsel %vm1187, %v1231, %v1123
    %v1256 = vsel %vm1188, %v1231, %v1124
    %v1257 = vsel %vm1189, %v1231, %v1125
    %v1258 = vsel %vm1190, %v1231, %v1126
    %v1259 = vsel %vm1191, %v1231, %v1127
    %v1260 = vsel %vm1192, %v1231, %v1128
    %v1261 = vsel %vm1193, %v1231, %v1129
    %v1262 = vsel %vm1194, %v1231, %v1130
    %v1263 = vsel %vm1195, %v1231, %v1131
    %v1264 = vsel %vm1196, %v1231, %v1132
    %v1265 = vsel %vm1197, %v1231, %v1133
    %v1266 = vsel %vm1198, %v1231, %v1134
    %v1267 = vsel %vm1199, %v1231, %v1135
    %v1268 = vsel %vm1200, %v1231, %v1136
    %v1269 = vsel %vm1201, %v1231, %v1137
    %v1270 = vsel %vm1202, %v1231, %v1138
    %v1271 = vsel %vm1203, %v1231, %v1139
    %v1272 = vsel %vm1204, %v1231, %v1140
    %v1273 = vsel %vm1205, %v1231, %v1141
    %v1274 = vsel %vm1206, %v1231, %v1142
    %v1275 = vsel %vm1207, %v1231, %v1143
    %v1276 = vsel %vm1208, %v1231, %v1144
    %v1277 = vsel %vm1209, %v1231, %v1145
    %v1278 = vsel %vm1210, %v1231, %v1146
    %v1279 = vsel %vm1211, %v1231, %v1147
    %v1280 = vsel %vm1212, %v1231, %v1148
    %v1281 = vsel %vm1213, %v1231, %v1149
    %v1282 = vsel %vm1214, %v1231, %v1150
    %v1283 = vsel %vm1215, %v1231, %v1151
    %v1284 = vsel %vm1216, %v1231, %v1152
    %v1285 = vsel %vm1217, %v1231, %v1153
    %v1286 = vsel %vm1218, %v1231, %v1154
    %v1287 = vsel %vm1219, %v1231, %v1155
    %v1288 = vsel %vm1220, %v1231, %v1156
    %v1289 = vsel %vm1221, %v1231, %v1157
    %v1290 = vsel %vm1222, %v1231, %v1158
    %v1291 = vsel %vm1223, %v1231, %v1159
    %v1292 = vsel %vm1224, %v1231, %v1160
    %v1293 = vsel %vm1225, %v1231, %v1161
    %v1294 = vsel %vm1226, %v1231, %v1162
    %v1295 = vsel %vm1227, %v1231, %v1163
    %v1296 = vmul.f32 %v768, %v1232
    %v1297 = vmul.f32 %v769, %v1233
    %v1298 = vmul.f32 %v770, %v1234
    %v1299 = vmul.f32 %v771, %v1235
    %v1300 = vmul.f32 %v772, %v1236
    %v1301 = vmul.f32 %v773, %v1237
    %v1302 = vmul.f32 %v774, %v1238
    %v1303 = vmul.f32 %v775, %v1239
    %v1304 = vmul.f32 %v776, %v1240
    %v1305 = vmul.f32 %v777, %v1241
    %v1306 = vmul.f32 %v778, %v1242
    %v1307 = vmul.f32 %v779, %v1243
    %v1308 = vmul.f32 %v780, %v1244
    %v1309 = vmul.f32 %v781, %v1245
    %v1310 = vmul.f32 %v782, %v1246
    %v1311 = vmul.f32 %v783, %v1247
    %v1312 = vmul.f32 %v784, %v1248
    %v1313 = vmul.f32 %v785, %v1249
    %v1314 = vmul.f32 %v786, %v1250
    %v1315 = vmul.f32 %v787, %v1251
    %v1316 = vmul.f32 %v788, %v1252
    %v1317 = vmul.f32 %v789, %v1253
    %v1318 = vmul.f32 %v790, %v1254
    %v1319 = vmul.f32 %v791, %v1255
    %v1320 = vmul.f32 %v792, %v1256
    %v1321 = vmul.f32 %v793, %v1257
    %v1322 = vmul.f32 %v794, %v1258
    %v1323 = vmul.f32 %v795, %v1259
    %v1324 = vmul.f32 %v796, %v1260
    %v1325 = vmul.f32 %v797, %v1261
    %v1326 = vmul.f32 %v798, %v1262
    %v1327 = vmul.f32 %v799, %v1263
    %v1328 = vmul.f32 %v800, %v1264
    %v1329 = vmul.f32 %v801, %v1265
    %v1330 = vmul.f32 %v802, %v1266
    %v1331 = vmul.f32 %v803, %v1267
    %v1332 = vmul.f32 %v804, %v1268
    %v1333 = vmul.f32 %v805, %v1269
    %v1334 = vmul.f32 %v806, %v1270
    %v1335 = vmul.f32 %v807, %v1271
    %v1336 = vmul.f32 %v808, %v1272
    %v1337 = vmul.f32 %v809, %v1273
    %v1338 = vmul.f32 %v810, %v1274
    %v1339 = vmul.f32 %v811, %v1275
    %v1340 = vmul.f32 %v812, %v1276
    %v1341 = vmul.f32 %v813, %v1277
    %v1342 = vmul.f32 %v814, %v1278
    %v1343 = vmul.f32 %v815, %v1279
    %v1344 = vmul.f32 %v816, %v1280
    %v1345 = vmul.f32 %v817, %v1281
    %v1346 = vmul.f32 %v818, %v1282
    %v1347 = vmul.f32 %v819, %v1283
    %v1348 = vmul.f32 %v820, %v1284
    %v1349 = vmul.f32 %v821, %v1285
    %v1350 = vmul.f32 %v822, %v1286
    %v1351 = vmul.f32 %v823, %v1287
    %v1352 = vmul.f32 %v824, %v1288
    %v1353 = vmul.f32 %v825, %v1289
    %v1354 = vmul.f32 %v826, %v1290
    %v1355 = vmul.f32 %v827, %v1291
    %v1356 = vmul.f32 %v828, %v1292
    %v1357 = vmul.f32 %v829, %v1293
    %v1358 = vmul.f32 %v830, %v1294
    %v1359 = vmul.f32 %v831, %v1295
    %v1360 = vlaneseq
    %v1361 = vshrl.u32 %v1360, 7
    %v1362 = vsub.s32 2, %v1361
    %v1363 = vrot.slane %v37, %v1362
    %v1364 = vsub.s32 %v304, %v1363
    %v1365 = vsub.s32 %v305, %v1363
    %v1366 = vsub.s32 %v306, %v1363
    %v1367 = vsub.s32 %v307, %v1363
    %v1368 = vsub.s32 %v308, %v1363
    %v1369 = vsub.s32 %v309, %v1363
    %v1370 = vsub.s32 %v310, %v1363
    %v1371 = vsub.s32 %v311, %v1363
    %v1372 = vsub.s32 %v312, %v1363
    %v1373 = vsub.s32 %v313, %v1363
    %v1374 = vsub.s32 %v314, %v1363
    %v1375 = vsub.s32 %v315, %v1363
    %v1376 = vsub.s32 %v316, %v1363
    %v1377 = vsub.s32 %v317, %v1363
    %v1378 = vsub.s32 %v318, %v1363
    %v1379 = vsub.s32 %v319, %v1363
    %v1380 = vsub.s32 %v320, %v1363
    %v1381 = vsub.s32 %v321, %v1363
    %v1382 = vsub.s32 %v322, %v1363
    %v1383 = vsub.s32 %v323, %v1363
    %v1384 = vsub.s32 %v324, %v1363
    %v1385 = vsub.s32 %v325, %v1363
    %v1386 = vsub.s32 %v326, %v1363
    %v1387 = vsub.s32 %v327, %v1363
    %v1388 = vsub.s32 %v328, %v1363
    %v1389 = vsub.s32 %v329, %v1363
    %v1390 = vsub.s32 %v330, %v1363
    %v1391 = vsub.s32 %v331, %v1363
    %v1392 = vsub.s32 %v332, %v1363
    %v1393 = vsub.s32 %v333, %v1363
    %v1394 = vsub.s32 %v334, %v1363
    %v1395 = vsub.s32 %v335, %v1363
    %v1396 = vsub.s32 %v336, %v1363
    %v1397 = vsub.s32 %v337, %v1363
    %v1398 = vsub.s32 %v338, %v1363
    %v1399 = vsub.s32 %v339, %v1363
    %v1400 = vsub.s32 %v340, %v1363
    %v1401 = vsub.s32 %v341, %v1363
    %v1402 = vsub.s32 %v342, %v1363
    %v1403 = vsub.s32 %v343, %v1363
    %v1404 = vsub.s32 %v344, %v1363
    %v1405 = vsub.s32 %v345, %v1363
    %v1406 = vsub.s32 %v346, %v1363
    %v1407 = vsub.s32 %v347, %v1363
    %v1408 = vsub.s32 %v348, %v1363
    %v1409 = vsub.s32 %v349, %v1363
    %v1410 = vsub.s32 %v350, %v1363
    %v1411 = vsub.s32 %v351, %v1363
    %v1412 = vsub.s32 %v352, %v1363
    %v1413 = vsub.s32 %v353, %v1363
    %v1414 = vsub.s32 %v354, %v1363
    %v1415 = vsub.s32 %v355, %v1363
    %v1416 = vsub.s32 %v356, %v1363
    %v1417 = vsub.s32 %v357, %v1363
    %v1418 = vsub.s32 %v358, %v1363
    %v1419 = vsub.s32 %v359, %v1363
    %v1420 = vsub.s32 %v360, %v1363
    %v1421 = vsub.s32 %v361, %v1363
    %v1422 = vsub.s32 %v362, %v1363
    %v1423 = vsub.s32 %v363, %v1363
    %v1424 = vsub.s32 %v364, %v1363
    %v1425 = vsub.s32 %v365, %v1363
    %v1426 = vsub.s32 %v366, %v1363
    %v1427 = vsub.s32 %v367, %v1363
    %vm1428 = vcmp.eq.s32.totalorder %v1364, 0
    %vm1429 = vcmp.eq.s32.totalorder %v1365, 0
    %vm1430 = vcmp.eq.s32.totalorder %v1366, 0
    %vm1431 = vcmp.eq.s32.totalorder %v1367, 0
    %vm1432 = vcmp.eq.s32.totalorder %v1368, 0
    %vm1433 = vcmp.eq.s32.totalorder %v1369, 0
    %vm1434 = vcmp.eq.s32.totalorder %v1370, 0
    %vm1435 = vcmp.eq.s32.totalorder %v1371, 0
    %vm1436 = vcmp.eq.s32.totalorder %v1372, 0
    %vm1437 = vcmp.eq.s32.totalorder %v1373, 0
    %vm1438 = vcmp.eq.s32.totalorder %v1374, 0
    %vm1439 = vcmp.eq.s32.totalorder %v1375, 0
    %vm1440 = vcmp.eq.s32.totalorder %v1376, 0
    %vm1441 = vcmp.eq.s32.totalorder %v1377, 0
    %vm1442 = vcmp.eq.s32.totalorder %v1378, 0
    %vm1443 = vcmp.eq.s32.totalorder %v1379, 0
    %vm1444 = vcmp.eq.s32.totalorder %v1380, 0
    %vm1445 = vcmp.eq.s32.totalorder %v1381, 0
    %vm1446 = vcmp.eq.s32.totalorder %v1382, 0
    %vm1447 = vcmp.eq.s32.totalorder %v1383, 0
    %vm1448 = vcmp.eq.s32.totalorder %v1384, 0
    %vm1449 = vcmp.eq.s32.totalorder %v1385, 0
    %vm1450 = vcmp.eq.s32.totalorder %v1386, 0
    %vm1451 = vcmp.eq.s32.totalorder %v1387, 0
    %vm1452 = vcmp.eq.s32.totalorder %v1388, 0
    %vm1453 = vcmp.eq.s32.totalorder %v1389, 0
    %vm1454 = vcmp.eq.s32.totalorder %v1390, 0
    %vm1455 = vcmp.eq.s32.totalorder %v1391, 0
    %vm1456 = vcmp.eq.s32.totalorder %v1392, 0
    %vm1457 = vcmp.eq.s32.totalorder %v1393, 0
    %vm1458 = vcmp.eq.s32.totalorder %v1394, 0
    %vm1459 = vcmp.eq.s32.totalorder %v1395, 0
    %vm1460 = vcmp.eq.s32.totalorder %v1396, 0
    %vm1461 = vcmp.eq.s32.totalorder %v1397, 0
    %vm1462 = vcmp.eq.s32.totalorder %v1398, 0
    %vm1463 = vcmp.eq.s32.totalorder %v1399, 0
    %vm1464 = vcmp.eq.s32.totalorder %v1400, 0
    %vm1465 = vcmp.eq.s32.totalorder %v1401, 0
    %vm1466 = vcmp.eq.s32.totalorder %v1402, 0
    %vm1467 = vcmp.eq.s32.totalorder %v1403, 0
    %vm1468 = vcmp.eq.s32.totalorder %v1404, 0
    %vm1469 = vcmp.eq.s32.totalorder %v1405, 0
    %vm1470 = vcmp.eq.s32.totalorder %v1406, 0
    %vm1471 = vcmp.eq.s32.totalorder %v1407, 0
    %vm1472 = vcmp.eq.s32.totalorder %v1408, 0
    %vm1473 = vcmp.eq.s32.totalorder %v1409, 0
    %vm1474 = vcmp.eq.s32.totalorder %v1410, 0
    %vm1475 = vcmp.eq.s32.totalorder %v1411, 0
    %vm1476 = vcmp.eq.s32.totalorder %v1412, 0
    %vm1477 = vcmp.eq.s32.totalorder %v1413, 0
    %vm1478 = vcmp.eq.s32.totalorder %v1414, 0
    %vm1479 = vcmp.eq.s32.totalorder %v1415, 0
    %vm1480 = vcmp.eq.s32.totalorder %v1416, 0
    %vm1481 = vcmp.eq.s32.totalorder %v1417, 0
    %vm1482 = vcmp.eq.s32.totalorder %v1418, 0
    %vm1483 = vcmp.eq.s32.totalorder %v1419, 0
    %vm1484 = vcmp.eq.s32.totalorder %v1420, 0
    %vm1485 = vcmp.eq.s32.totalorder %v1421, 0
    %vm1486 = vcmp.eq.s32.totalorder %v1422, 0
    %vm1487 = vcmp.eq.s32.totalorder %v1423, 0
    %vm1488 = vcmp.eq.s32.totalorder %v1424, 0
    %vm1489 = vcmp.eq.s32.totalorder %v1425, 0
    %vm1490 = vcmp.eq.s32.totalorder %v1426, 0
    %vm1491 = vcmp.eq.s32.totalorder %v1427, 0
    %v1492 = vlaneseq
    %v1493 = vshrl.u32 %v1492, 7
    %v1494 = vsub.s32 2, %v1493
    %v1495 = vrot.slane %v40, %v1494
    %v1496 = vsel %vm1428, %v1495, 0.0
    %v1497 = vsel %vm1429, %v1495, 0.0
    %v1498 = vsel %vm1430, %v1495, 0.0
    %v1499 = vsel %vm1431, %v1495, 0.0
    %v1500 = vsel %vm1432, %v1495, 0.0
    %v1501 = vsel %vm1433, %v1495, 0.0
    %v1502 = vsel %vm1434, %v1495, 0.0
    %v1503 = vsel %vm1435, %v1495, 0.0
    %v1504 = vsel %vm1436, %v1495, 0.0
    %v1505 = vsel %vm1437, %v1495, 0.0
    %v1506 = vsel %vm1438, %v1495, 0.0
    %v1507 = vsel %vm1439, %v1495, 0.0
    %v1508 = vsel %vm1440, %v1495, 0.0
    %v1509 = vsel %vm1441, %v1495, 0.0
    %v1510 = vsel %vm1442, %v1495, 0.0
    %v1511 = vsel %vm1443, %v1495, 0.0
    %v1512 = vsel %vm1444, %v1495, 0.0
    %v1513 = vsel %vm1445, %v1495, 0.0
    %v1514 = vsel %vm1446, %v1495, 0.0
    %v1515 = vsel %vm1447, %v1495, 0.0
    %v1516 = vsel %vm1448, %v1495, 0.0
    %v1517 = vsel %vm1449, %v1495, 0.0
    %v1518 = vsel %vm1450, %v1495, 0.0
    %v1519 = vsel %vm1451, %v1495, 0.0
    %v1520 = vsel %vm1452, %v1495, 0.0
    %v1521 = vsel %vm1453, %v1495, 0.0
    %v1522 = vsel %vm1454, %v1495, 0.0
    %v1523 = vsel %vm1455, %v1495, 0.0
    %v1524 = vsel %vm1456, %v1495, 0.0
    %v1525 = vsel %vm1457, %v1495, 0.0
    %v1526 = vsel %vm1458, %v1495, 0.0
    %v1527 = vsel %vm1459, %v1495, 0.0
    %v1528 = vsel %vm1460, %v1495, 0.0
    %v1529 = vsel %vm1461, %v1495, 0.0
    %v1530 = vsel %vm1462, %v1495, 0.0
    %v1531 = vsel %vm1463, %v1495, 0.0
    %v1532 = vsel %vm1464, %v1495, 0.0
    %v1533 = vsel %vm1465, %v1495, 0.0
    %v1534 = vsel %vm1466, %v1495, 0.0
    %v1535 = vsel %vm1467, %v1495, 0.0
    %v1536 = vsel %vm1468, %v1495, 0.0
    %v1537 = vsel %vm1469, %v1495, 0.0
    %v1538 = vsel %vm1470, %v1495, 0.0
    %v1539 = vsel %vm1471, %v1495, 0.0
    %v1540 = vsel %vm1472, %v1495, 0.0
    %v1541 = vsel %vm1473, %v1495, 0.0
    %v1542 = vsel %vm1474, %v1495, 0.0
    %v1543 = vsel %vm1475, %v1495, 0.0
    %v1544 = vsel %vm1476, %v1495, 0.0
    %v1545 = vsel %vm1477, %v1495, 0.0
    %v1546 = vsel %vm1478, %v1495, 0.0
    %v1547 = vsel %vm1479, %v1495, 0.0
    %v1548 = vsel %vm1480, %v1495, 0.0
    %v1549 = vsel %vm1481, %v1495, 0.0
    %v1550 = vsel %vm1482, %v1495, 0.0
    %v1551 = vsel %vm1483, %v1495, 0.0
    %v1552 = vsel %vm1484, %v1495, 0.0
    %v1553 = vsel %vm1485, %v1495, 0.0
    %v1554 = vsel %vm1486, %v1495, 0.0
    %v1555 = vsel %vm1487, %v1495, 0.0
    %v1556 = vsel %vm1488, %v1495, 0.0
    %v1557 = vsel %vm1489, %v1495, 0.0
    %v1558 = vsel %vm1490, %v1495, 0.0
    %v1559 = vsel %vm1491, %v1495, 0.0
    %vm1560 = vcmp.eq.s32.totalorder %v1364, 1
    %vm1561 = vcmp.eq.s32.totalorder %v1365, 1
    %vm1562 = vcmp.eq.s32.totalorder %v1366, 1
    %vm1563 = vcmp.eq.s32.totalorder %v1367, 1
    %vm1564 = vcmp.eq.s32.totalorder %v1368, 1
    %vm1565 = vcmp.eq.s32.totalorder %v1369, 1
    %vm1566 = vcmp.eq.s32.totalorder %v1370, 1
    %vm1567 = vcmp.eq.s32.totalorder %v1371, 1
    %vm1568 = vcmp.eq.s32.totalorder %v1372, 1
    %vm1569 = vcmp.eq.s32.totalorder %v1373, 1
    %vm1570 = vcmp.eq.s32.totalorder %v1374, 1
    %vm1571 = vcmp.eq.s32.totalorder %v1375, 1
    %vm1572 = vcmp.eq.s32.totalorder %v1376, 1
    %vm1573 = vcmp.eq.s32.totalorder %v1377, 1
    %vm1574 = vcmp.eq.s32.totalorder %v1378, 1
    %vm1575 = vcmp.eq.s32.totalorder %v1379, 1
    %vm1576 = vcmp.eq.s32.totalorder %v1380, 1
    %vm1577 = vcmp.eq.s32.totalorder %v1381, 1
    %vm1578 = vcmp.eq.s32.totalorder %v1382, 1
    %vm1579 = vcmp.eq.s32.totalorder %v1383, 1
    %vm1580 = vcmp.eq.s32.totalorder %v1384, 1
    %vm1581 = vcmp.eq.s32.totalorder %v1385, 1
    %vm1582 = vcmp.eq.s32.totalorder %v1386, 1
    %vm1583 = vcmp.eq.s32.totalorder %v1387, 1
    %vm1584 = vcmp.eq.s32.totalorder %v1388, 1
    %vm1585 = vcmp.eq.s32.totalorder %v1389, 1
    %vm1586 = vcmp.eq.s32.totalorder %v1390, 1
    %vm1587 = vcmp.eq.s32.totalorder %v1391, 1
    %vm1588 = vcmp.eq.s32.totalorder %v1392, 1
    %vm1589 = vcmp.eq.s32.totalorder %v1393, 1
    %vm1590 = vcmp.eq.s32.totalorder %v1394, 1
    %vm1591 = vcmp.eq.s32.totalorder %v1395, 1
    %vm1592 = vcmp.eq.s32.totalorder %v1396, 1
    %vm1593 = vcmp.eq.s32.totalorder %v1397, 1
    %vm1594 = vcmp.eq.s32.totalorder %v1398, 1
    %vm1595 = vcmp.eq.s32.totalorder %v1399, 1
    %vm1596 = vcmp.eq.s32.totalorder %v1400, 1
    %vm1597 = vcmp.eq.s32.totalorder %v1401, 1
    %vm1598 = vcmp.eq.s32.totalorder %v1402, 1
    %vm1599 = vcmp.eq.s32.totalorder %v1403, 1
    %vm1600 = vcmp.eq.s32.totalorder %v1404, 1
    %vm1601 = vcmp.eq.s32.totalorder %v1405, 1
    %vm1602 = vcmp.eq.s32.totalorder %v1406, 1
    %vm1603 = vcmp.eq.s32.totalorder %v1407, 1
    %vm1604 = vcmp.eq.s32.totalorder %v1408, 1
    %vm1605 = vcmp.eq.s32.totalorder %v1409, 1
    %vm1606 = vcmp.eq.s32.totalorder %v1410, 1
    %vm1607 = vcmp.eq.s32.totalorder %v1411, 1
    %vm1608 = vcmp.eq.s32.totalorder %v1412, 1
    %vm1609 = vcmp.eq.s32.totalorder %v1413, 1
    %vm1610 = vcmp.eq.s32.totalorder %v1414, 1
    %vm1611 = vcmp.eq.s32.totalorder %v1415, 1
    %vm1612 = vcmp.eq.s32.totalorder %v1416, 1
    %vm1613 = vcmp.eq.s32.totalorder %v1417, 1
    %vm1614 = vcmp.eq.s32.totalorder %v1418, 1
    %vm1615 = vcmp.eq.s32.totalorder %v1419, 1
    %vm1616 = vcmp.eq.s32.totalorder %v1420, 1
    %vm1617 = vcmp.eq.s32.totalorder %v1421, 1
    %vm1618 = vcmp.eq.s32.totalorder %v1422, 1
    %vm1619 = vcmp.eq.s32.totalorder %v1423, 1
    %vm1620 = vcmp.eq.s32.totalorder %v1424, 1
    %vm1621 = vcmp.eq.s32.totalorder %v1425, 1
    %vm1622 = vcmp.eq.s32.totalorder %v1426, 1
    %vm1623 = vcmp.eq.s32.totalorder %v1427, 1
    %v1624 = vlaneseq
    %v1625 = vshrl.u32 %v1624, 7
    %v1626 = vsub.s32 2, %v1625
    %v1627 = vrot.slane %v43, %v1626
    %v1628 = vsel %vm1560, %v1627, %v1496
    %v1629 = vsel %vm1561, %v1627, %v1497
    %v1630 = vsel %vm1562, %v1627, %v1498
    %v1631 = vsel %vm1563, %v1627, %v1499
    %v1632 = vsel %vm1564, %v1627, %v1500
    %v1633 = vsel %vm1565, %v1627, %v1501
    %v1634 = vsel %vm1566, %v1627, %v1502
    %v1635 = vsel %vm1567, %v1627, %v1503
    %v1636 = vsel %vm1568, %v1627, %v1504
    %v1637 = vsel %vm1569, %v1627, %v1505
    %v1638 = vsel %vm1570, %v1627, %v1506
    %v1639 = vsel %vm1571, %v1627, %v1507
    %v1640 = vsel %vm1572, %v1627, %v1508
    %v1641 = vsel %vm1573, %v1627, %v1509
    %v1642 = vsel %vm1574, %v1627, %v1510
    %v1643 = vsel %vm1575, %v1627, %v1511
    %v1644 = vsel %vm1576, %v1627, %v1512
    %v1645 = vsel %vm1577, %v1627, %v1513
    %v1646 = vsel %vm1578, %v1627, %v1514
    %v1647 = vsel %vm1579, %v1627, %v1515
    %v1648 = vsel %vm1580, %v1627, %v1516
    %v1649 = vsel %vm1581, %v1627, %v1517
    %v1650 = vsel %vm1582, %v1627, %v1518
    %v1651 = vsel %vm1583, %v1627, %v1519
    %v1652 = vsel %vm1584, %v1627, %v1520
    %v1653 = vsel %vm1585, %v1627, %v1521
    %v1654 = vsel %vm1586, %v1627, %v1522
    %v1655 = vsel %vm1587, %v1627, %v1523
    %v1656 = vsel %vm1588, %v1627, %v1524
    %v1657 = vsel %vm1589, %v1627, %v1525
    %v1658 = vsel %vm1590, %v1627, %v1526
    %v1659 = vsel %vm1591, %v1627, %v1527
    %v1660 = vsel %vm1592, %v1627, %v1528
    %v1661 = vsel %vm1593, %v1627, %v1529
    %v1662 = vsel %vm1594, %v1627, %v1530
    %v1663 = vsel %vm1595, %v1627, %v1531
    %v1664 = vsel %vm1596, %v1627, %v1532
    %v1665 = vsel %vm1597, %v1627, %v1533
    %v1666 = vsel %vm1598, %v1627, %v1534
    %v1667 = vsel %vm1599, %v1627, %v1535
    %v1668 = vsel %vm1600, %v1627, %v1536
    %v1669 = vsel %vm1601, %v1627, %v1537
    %v1670 = vsel %vm1602, %v1627, %v1538
    %v1671 = vsel %vm1603, %v1627, %v1539
    %v1672 = vsel %vm1604, %v1627, %v1540
    %v1673 = vsel %vm1605, %v1627, %v1541
    %v1674 = vsel %vm1606, %v1627, %v1542
    %v1675 = vsel %vm1607, %v1627, %v1543
    %v1676 = vsel %vm1608, %v1627, %v1544
    %v1677 = vsel %vm1609, %v1627, %v1545
    %v1678 = vsel %vm1610, %v1627, %v1546
    %v1679 = vsel %vm1611, %v1627, %v1547
    %v1680 = vsel %vm1612, %v1627, %v1548
    %v1681 = vsel %vm1613, %v1627, %v1549
    %v1682 = vsel %vm1614, %v1627, %v1550
    %v1683 = vsel %vm1615, %v1627, %v1551
    %v1684 = vsel %vm1616, %v1627, %v1552
    %v1685 = vsel %vm1617, %v1627, %v1553
    %v1686 = vsel %vm1618, %v1627, %v1554
    %v1687 = vsel %vm1619, %v1627, %v1555
    %v1688 = vsel %vm1620, %v1627, %v1556
    %v1689 = vsel %vm1621, %v1627, %v1557
    %v1690 = vsel %vm1622, %v1627, %v1558
    %v1691 = vsel %vm1623, %v1627, %v1559
    %vm1692 = vcmp.eq.s32.totalorder %v1364, 2
    %vm1693 = vcmp.eq.s32.totalorder %v1365, 2
    %vm1694 = vcmp.eq.s32.totalorder %v1366, 2
    %vm1695 = vcmp.eq.s32.totalorder %v1367, 2
    %vm1696 = vcmp.eq.s32.totalorder %v1368, 2
    %vm1697 = vcmp.eq.s32.totalorder %v1369, 2
    %vm1698 = vcmp.eq.s32.totalorder %v1370, 2
    %vm1699 = vcmp.eq.s32.totalorder %v1371, 2
    %vm1700 = vcmp.eq.s32.totalorder %v1372, 2
    %vm1701 = vcmp.eq.s32.totalorder %v1373, 2
    %vm1702 = vcmp.eq.s32.totalorder %v1374, 2
    %vm1703 = vcmp.eq.s32.totalorder %v1375, 2
    %vm1704 = vcmp.eq.s32.totalorder %v1376, 2
    %vm1705 = vcmp.eq.s32.totalorder %v1377, 2
    %vm1706 = vcmp.eq.s32.totalorder %v1378, 2
    %vm1707 = vcmp.eq.s32.totalorder %v1379, 2
    %vm1708 = vcmp.eq.s32.totalorder %v1380, 2
    %vm1709 = vcmp.eq.s32.totalorder %v1381, 2
    %vm1710 = vcmp.eq.s32.totalorder %v1382, 2
    %vm1711 = vcmp.eq.s32.totalorder %v1383, 2
    %vm1712 = vcmp.eq.s32.totalorder %v1384, 2
    %vm1713 = vcmp.eq.s32.totalorder %v1385, 2
    %vm1714 = vcmp.eq.s32.totalorder %v1386, 2
    %vm1715 = vcmp.eq.s32.totalorder %v1387, 2
    %vm1716 = vcmp.eq.s32.totalorder %v1388, 2
    %vm1717 = vcmp.eq.s32.totalorder %v1389, 2
    %vm1718 = vcmp.eq.s32.totalorder %v1390, 2
    %vm1719 = vcmp.eq.s32.totalorder %v1391, 2
    %vm1720 = vcmp.eq.s32.totalorder %v1392, 2
    %vm1721 = vcmp.eq.s32.totalorder %v1393, 2
    %vm1722 = vcmp.eq.s32.totalorder %v1394, 2
    %vm1723 = vcmp.eq.s32.totalorder %v1395, 2
    %vm1724 = vcmp.eq.s32.totalorder %v1396, 2
    %vm1725 = vcmp.eq.s32.totalorder %v1397, 2
    %vm1726 = vcmp.eq.s32.totalorder %v1398, 2
    %vm1727 = vcmp.eq.s32.totalorder %v1399, 2
    %vm1728 = vcmp.eq.s32.totalorder %v1400, 2
    %vm1729 = vcmp.eq.s32.totalorder %v1401, 2
    %vm1730 = vcmp.eq.s32.totalorder %v1402, 2
    %vm1731 = vcmp.eq.s32.totalorder %v1403, 2
    %vm1732 = vcmp.eq.s32.totalorder %v1404, 2
    %vm1733 = vcmp.eq.s32.totalorder %v1405, 2
    %vm1734 = vcmp.eq.s32.totalorder %v1406, 2
    %vm1735 = vcmp.eq.s32.totalorder %v1407, 2
    %vm1736 = vcmp.eq.s32.totalorder %v1408, 2
    %vm1737 = vcmp.eq.s32.totalorder %v1409, 2
    %vm1738 = vcmp.eq.s32.totalorder %v1410, 2
    %vm1739 = vcmp.eq.s32.totalorder %v1411, 2
    %vm1740 = vcmp.eq.s32.totalorder %v1412, 2
    %vm1741 = vcmp.eq.s32.totalorder %v1413, 2
    %vm1742 = vcmp.eq.s32.totalorder %v1414, 2
    %vm1743 = vcmp.eq.s32.totalorder %v1415, 2
    %vm1744 = vcmp.eq.s32.totalorder %v1416, 2
    %vm1745 = vcmp.eq.s32.totalorder %v1417, 2
    %vm1746 = vcmp.eq.s32.totalorder %v1418, 2
    %vm1747 = vcmp.eq.s32.totalorder %v1419, 2
    %vm1748 = vcmp.eq.s32.totalorder %v1420, 2
    %vm1749 = vcmp.eq.s32.totalorder %v1421, 2
    %vm1750 = vcmp.eq.s32.totalorder %v1422, 2
    %vm1751 = vcmp.eq.s32.totalorder %v1423, 2
    %vm1752 = vcmp.eq.s32.totalorder %v1424, 2
    %vm1753 = vcmp.eq.s32.totalorder %v1425, 2
    %vm1754 = vcmp.eq.s32.totalorder %v1426, 2
    %vm1755 = vcmp.eq.s32.totalorder %v1427, 2
    %v1756 = vlaneseq
    %v1757 = vshrl.u32 %v1756, 7
    %v1758 = vsub.s32 2, %v1757
    %v1759 = vrot.slane %v46, %v1758
    %v1760 = vsel %vm1692, %v1759, %v1628
    %v1761 = vsel %vm1693, %v1759, %v1629
    %v1762 = vsel %vm1694, %v1759, %v1630
    %v1763 = vsel %vm1695, %v1759, %v1631
    %v1764 = vsel %vm1696, %v1759, %v1632
    %v1765 = vsel %vm1697, %v1759, %v1633
    %v1766 = vsel %vm1698, %v1759, %v1634
    %v1767 = vsel %vm1699, %v1759, %v1635
    %v1768 = vsel %vm1700, %v1759, %v1636
    %v1769 = vsel %vm1701, %v1759, %v1637
    %v1770 = vsel %vm1702, %v1759, %v1638
    %v1771 = vsel %vm1703, %v1759, %v1639
    %v1772 = vsel %vm1704, %v1759, %v1640
    %v1773 = vsel %vm1705, %v1759, %v1641
    %v1774 = vsel %vm1706, %v1759, %v1642
    %v1775 = vsel %vm1707, %v1759, %v1643
    %v1776 = vsel %vm1708, %v1759, %v1644
    %v1777 = vsel %vm1709, %v1759, %v1645
    %v1778 = vsel %vm1710, %v1759, %v1646
    %v1779 = vsel %vm1711, %v1759, %v1647
    %v1780 = vsel %vm1712, %v1759, %v1648
    %v1781 = vsel %vm1713, %v1759, %v1649
    %v1782 = vsel %vm1714, %v1759, %v1650
    %v1783 = vsel %vm1715, %v1759, %v1651
    %v1784 = vsel %vm1716, %v1759, %v1652
    %v1785 = vsel %vm1717, %v1759, %v1653
    %v1786 = vsel %vm1718, %v1759, %v1654
    %v1787 = vsel %vm1719, %v1759, %v1655
    %v1788 = vsel %vm1720, %v1759, %v1656
    %v1789 = vsel %vm1721, %v1759, %v1657
    %v1790 = vsel %vm1722, %v1759, %v1658
    %v1791 = vsel %vm1723, %v1759, %v1659
    %v1792 = vsel %vm1724, %v1759, %v1660
    %v1793 = vsel %vm1725, %v1759, %v1661
    %v1794 = vsel %vm1726, %v1759, %v1662
    %v1795 = vsel %vm1727, %v1759, %v1663
    %v1796 = vsel %vm1728, %v1759, %v1664
    %v1797 = vsel %vm1729, %v1759, %v1665
    %v1798 = vsel %vm1730, %v1759, %v1666
    %v1799 = vsel %vm1731, %v1759, %v1667
    %v1800 = vsel %vm1732, %v1759, %v1668
    %v1801 = vsel %vm1733, %v1759, %v1669
    %v1802 = vsel %vm1734, %v1759, %v1670
    %v1803 = vsel %vm1735, %v1759, %v1671
    %v1804 = vsel %vm1736, %v1759, %v1672
    %v1805 = vsel %vm1737, %v1759, %v1673
    %v1806 = vsel %vm1738, %v1759, %v1674
    %v1807 = vsel %vm1739, %v1759, %v1675
    %v1808 = vsel %vm1740, %v1759, %v1676
    %v1809 = vsel %vm1741, %v1759, %v1677
    %v1810 = vsel %vm1742, %v1759, %v1678
    %v1811 = vsel %vm1743, %v1759, %v1679
    %v1812 = vsel %vm1744, %v1759, %v1680
    %v1813 = vsel %vm1745, %v1759, %v1681
    %v1814 = vsel %vm1746, %v1759, %v1682
    %v1815 = vsel %vm1747, %v1759, %v1683
    %v1816 = vsel %vm1748, %v1759, %v1684
    %v1817 = vsel %vm1749, %v1759, %v1685
    %v1818 = vsel %vm1750, %v1759, %v1686
    %v1819 = vsel %vm1751, %v1759, %v1687
    %v1820 = vsel %vm1752, %v1759, %v1688
    %v1821 = vsel %vm1753, %v1759, %v1689
    %v1822 = vsel %vm1754, %v1759, %v1690
    %v1823 = vsel %vm1755, %v1759, %v1691
    %v1824 = vmul.f32 %v1296, %v1760
    %v1825 = vmul.f32 %v1297, %v1761
    %v1826 = vmul.f32 %v1298, %v1762
    %v1827 = vmul.f32 %v1299, %v1763
    %v1828 = vmul.f32 %v1300, %v1764
    %v1829 = vmul.f32 %v1301, %v1765
    %v1830 = vmul.f32 %v1302, %v1766
    %v1831 = vmul.f32 %v1303, %v1767
    %v1832 = vmul.f32 %v1304, %v1768
    %v1833 = vmul.f32 %v1305, %v1769
    %v1834 = vmul.f32 %v1306, %v1770
    %v1835 = vmul.f32 %v1307, %v1771
    %v1836 = vmul.f32 %v1308, %v1772
    %v1837 = vmul.f32 %v1309, %v1773
    %v1838 = vmul.f32 %v1310, %v1774
    %v1839 = vmul.f32 %v1311, %v1775
    %v1840 = vmul.f32 %v1312, %v1776
    %v1841 = vmul.f32 %v1313, %v1777
    %v1842 = vmul.f32 %v1314, %v1778
    %v1843 = vmul.f32 %v1315, %v1779
    %v1844 = vmul.f32 %v1316, %v1780
    %v1845 = vmul.f32 %v1317, %v1781
    %v1846 = vmul.f32 %v1318, %v1782
    %v1847 = vmul.f32 %v1319, %v1783
    %v1848 = vmul.f32 %v1320, %v1784
    %v1849 = vmul.f32 %v1321, %v1785
    %v1850 = vmul.f32 %v1322, %v1786
    %v1851 = vmul.f32 %v1323, %v1787
    %v1852 = vmul.f32 %v1324, %v1788
    %v1853 = vmul.f32 %v1325, %v1789
    %v1854 = vmul.f32 %v1326, %v1790
    %v1855 = vmul.f32 %v1327, %v1791
    %v1856 = vmul.f32 %v1328, %v1792
    %v1857 = vmul.f32 %v1329, %v1793
    %v1858 = vmul.f32 %v1330, %v1794
    %v1859 = vmul.f32 %v1331, %v1795
    %v1860 = vmul.f32 %v1332, %v1796
    %v1861 = vmul.f32 %v1333, %v1797
    %v1862 = vmul.f32 %v1334, %v1798
    %v1863 = vmul.f32 %v1335, %v1799
    %v1864 = vmul.f32 %v1336, %v1800
    %v1865 = vmul.f32 %v1337, %v1801
    %v1866 = vmul.f32 %v1338, %v1802
    %v1867 = vmul.f32 %v1339, %v1803
    %v1868 = vmul.f32 %v1340, %v1804
    %v1869 = vmul.f32 %v1341, %v1805
    %v1870 = vmul.f32 %v1342, %v1806
    %v1871 = vmul.f32 %v1343, %v1807
    %v1872 = vmul.f32 %v1344, %v1808
    %v1873 = vmul.f32 %v1345, %v1809
    %v1874 = vmul.f32 %v1346, %v1810
    %v1875 = vmul.f32 %v1347, %v1811
    %v1876 = vmul.f32 %v1348, %v1812
    %v1877 = vmul.f32 %v1349, %v1813
    %v1878 = vmul.f32 %v1350, %v1814
    %v1879 = vmul.f32 %v1351, %v1815
    %v1880 = vmul.f32 %v1352, %v1816
    %v1881 = vmul.f32 %v1353, %v1817
    %v1882 = vmul.f32 %v1354, %v1818
    %v1883 = vmul.f32 %v1355, %v1819
    %v1884 = vmul.f32 %v1356, %v1820
    %v1885 = vmul.f32 %v1357, %v1821
    %v1886 = vmul.f32 %v1358, %v1822
    %v1887 = vmul.f32 %v1359, %v1823
    %v1888 = vmul.f32 %v29, -0.128
    %v1889 = vlaneseq
    %v1890 = vshrl.u32 %v1889, 7
    %v1891 = vsub.s32 0, %v1890
    %v1892 = vrot.slane %v1888, %v1891
    %v1893 = vmul.f32 %v1892, %v27
    %v1894 = vmul.f32 %v1892, %v28
    %v1895 = vlaneseq
    %v1896 = vshrl.u32 %v1895, 7
    %v1897 = vsub.s32 0, %v1896
    %v1898 = vrot.slane %v30, %v1897
    %v1899 = vmul.f32 %v1898, %v25
    %v1900 = vmul.f32 %v1898, %v26
    %v1901 = vadd.f32 %v1893, %v1899
    %v1902 = vadd.f32 %v1894, %v1900
    %v1903 = vmul.f32 %v30, %v24
    %v1904 = vmul.f32 %v1901, %v23
    %v1905 = vsub.f32 %v1903, %v1904
    %v1907 = vrot.slane %v1904, 1
    %v1909 = vsub.f32 %v1905, %v1907
    %v1910 = vrot.slane %v1904, 2
    %v1912 = vsub.f32 %v1909, %v1910
    %v1914 = vrot.slane %v24, 1
    %v1916 = vmul.f32 %v30, %v1914
    %v1918 = vrot.slane %v23, 5
    %v1920 = vmul.f32 %v1901, %v1918
    %v1922 = vrot.slane %v1920, 3
    %v1924 = vsub.f32 %v1916, %v1922
    %v1925 = vrot.slane %v1920, 4
    %v1927 = vsub.f32 %v1924, %v1925
    %v1928 = vrot.slane %v1920, 5
    %v1930 = vsub.f32 %v1927, %v1928
    %v1931 = vrot.slane %v24, 2
    %v1933 = vmul.f32 %v30, %v1931
    %v1934 = vrot.slane %v23, 2
    %v1936 = vmul.f32 %v1901, %v1934
    %v1938 = vrot.slane %v1936, 6
    %v1940 = vsub.f32 %v1933, %v1938
    %v1941 = vrot.slane %v1936, 7
    %v1943 = vsub.f32 %v1940, %v1941
    %v1944 = vmul.f32 %v1902, %v1934
    %v1945 = vsub.f32 %v1943, %v1944
    %v1947 = vrot.slane %v1930, 7
    %v1950 = vrot.slane %v1945, 6
    %v1953 = vrot.slane %v30, 5
    %v1956 = vrot.slane %v1901, 4
    %v1959 = vrot.slane %v1902, 4
    %vm1961 = vcmask 1040384
    %v1962 = vsel %vm1961, %v1912, %v1947
    %vm1963 = vcmask 1041408
    %v1964 = vsel %vm1963, %v1962, %v1950
    %vm1965 = vcmask 1042432
    %v1966 = vsel %vm1965, %v1964, %v1953
    %vm1967 = vcmask 1043456
    %v1968 = vsel %vm1967, %v1966, %v1956
    %vm1969 = vcmask 1044480
    %v1970 = vsel %vm1969, %v1968, %v1956
    %vm1971 = vcmask 1045504
    %v1972 = vsel %vm1971, %v1970, %v1956
    %vm1973 = vcmask 1046528
    %v1974 = vsel %vm1973, %v1972, %v1956
    %v1975 = vsel %vm1963, %v1956, %v1956
    %v1976 = vsel %vm1965, %v1975, %v1956
    %v1977 = vsel %vm1967, %v1976, %v1959
    %v1978 = vsel %vm1969, %v1977, 0.0
    %v1979 = vsel %vm1971, %v1978, 0.0
    %v1980 = vsel %vm1973, %v1979, 0.0
    %1981 = vmatprep.subr.mxu0 0.0
    %1982 = vmatpush1.xpose.msra.mxu0 %v1839
    %1983 = vmatprep.subr.mxu0 0.0
    %1984 = vmatpush1.xpose.msra.mxu0 %v1838
    %1985 = vmatprep.subr.mxu0 0.0
    %1986 = vmatpush1.xpose.msra.mxu0 %v1837
    %1987 = vmatprep.subr.mxu0 0.0
    %1988 = vmatpush1.xpose.msra.mxu0 %v1836
    %1989 = vmatprep.subr.mxu0 0.0
    %1990 = vmatpush1.xpose.msra.mxu0 %v1835
    %1991 = vmatprep.subr.mxu0 0.0
    %1992 = vmatpush1.xpose.msra.mxu0 %v1834
    %1993 = vmatprep.subr.mxu0 0.0
    %1994 = vmatpush1.xpose.msra.mxu0 %v1833
    %1995 = vmatprep.subr.mxu0 0.0
    %1996 = vmatpush1.xpose.msra.mxu0 %v1832
    %1997 = vmatprep.subr.mxu0 0.0
    %1998 = vmatpush1.xpose.msra.mxu0 %v1831
    %1999 = vmatprep.subr.mxu0 0.0
    %2000 = vmatpush1.xpose.msra.mxu0 %v1830
    %2001 = vmatprep.subr.mxu0 0.0
    %2002 = vmatpush1.xpose.msra.mxu0 %v1829
    %2003 = vmatprep.subr.mxu0 0.0
    %2004 = vmatpush1.xpose.msra.mxu0 %v1828
    %2005 = vmatprep.subr.mxu0 0.0
    %2006 = vmatpush1.xpose.msra.mxu0 %v1827
    %2007 = vmatprep.subr.mxu0 0.0
    %2008 = vmatpush1.xpose.msra.mxu0 %v1826
    %2009 = vmatprep.subr.mxu0 0.0
    %2010 = vmatpush1.xpose.msra.mxu0 %v1825
    %2011 = vmatprep.subr.mxu0 0.0
    %2012 = vmatpush1.xpose.msra.mxu0 %v1824
    %2013 = vmatprep.subr.mxu0 0.0
    %2014 = vmatpush2.xpose.msra.mxu0 %v1855
    %2015 = vmatprep.subr.mxu0 0.0
    %2016 = vmatpush2.xpose.msra.mxu0 %v1854
    %2017 = vmatprep.subr.mxu0 0.0
    %2018 = vmatpush2.xpose.msra.mxu0 %v1853
    %2019 = vmatprep.subr.mxu0 0.0
    %2020 = vmatpush2.xpose.msra.mxu0 %v1852
    %2021 = vmatprep.subr.mxu0 0.0
    %2022 = vmatpush2.xpose.msra.mxu0 %v1851
    %2023 = vmatprep.subr.mxu0 0.0
    %2024 = vmatpush2.xpose.msra.mxu0 %v1850
    %2025 = vmatprep.subr.mxu0 0.0
    %2026 = vmatpush2.xpose.msra.mxu0 %v1849
    %2027 = vmatprep.subr.mxu0 0.0
    %2028 = vmatpush2.xpose.msra.mxu0 %v1848
    %2029 = vmatprep.subr.mxu0 0.0
    %2030 = vmatpush2.xpose.msra.mxu0 %v1847
    %2031 = vmatprep.subr.mxu0 0.0
    %2032 = vmatpush2.xpose.msra.mxu0 %v1846
    %2033 = vmatprep.subr.mxu0 0.0
    %2034 = vmatpush2.xpose.msra.mxu0 %v1845
    %2035 = vmatprep.subr.mxu0 0.0
    %2036 = vmatpush2.xpose.msra.mxu0 %v1844
    %2037 = vmatprep.subr.mxu0 0.0
    %2038 = vmatpush2.xpose.msra.mxu0 %v1843
    %2039 = vmatprep.subr.mxu0 0.0
    %2040 = vmatpush2.xpose.msra.mxu0 %v1842
    %2041 = vmatprep.subr.mxu0 0.0
    %2042 = vmatpush2.xpose.msra.mxu0 %v1841
    %2043 = vmatprep.subr.mxu0 0.0
    %2044 = vmatpush2.xpose.msra.mxu0 %v1840
    %2045 = vmatprep.mubr.f32.mxu0 0.0
    %2046 = vmatmul.mubr.f32.gmra.mxu0 %v1974
    %v2047 = vpop.f32.mrf.mxu0
    %v2048 = vadd.f32 0.0, %v2047
    %v2049 = vpop.f32.mrf.mxu0
    %v2050 = vadd.f32 0.0, %v2049
    %2051 = vmatprep.mubr.f32.mxu0 0.0
    %2052 = vmatmul.mubr.f32.gmra.mxu0 %v1980
    %v2053 = vpop.f32.mrf.mxu0
    %v2054 = vadd.f32 0.0, %v2053
    %v2055 = vpop.f32.mrf.mxu0
    %v2056 = vadd.f32 0.0, %v2055
    %2057 = vdwg.mxu0
    %2058 = vmatprep.subr.mxu0 0.0
    %2059 = vmatpush1.xpose.msra.mxu0 %v1871
    %2060 = vmatprep.subr.mxu0 0.0
    %2061 = vmatpush1.xpose.msra.mxu0 %v1870
    %2062 = vmatprep.subr.mxu0 0.0
    %2063 = vmatpush1.xpose.msra.mxu0 %v1869
    %2064 = vmatprep.subr.mxu0 0.0
    %2065 = vmatpush1.xpose.msra.mxu0 %v1868
    %2066 = vmatprep.subr.mxu0 0.0
    %2067 = vmatpush1.xpose.msra.mxu0 %v1867
    %2068 = vmatprep.subr.mxu0 0.0
    %2069 = vmatpush1.xpose.msra.mxu0 %v1866
    %2070 = vmatprep.subr.mxu0 0.0
    %2071 = vmatpush1.xpose.msra.mxu0 %v1865
    %2072 = vmatprep.subr.mxu0 0.0
    %2073 = vmatpush1.xpose.msra.mxu0 %v1864
    %2074 = vmatprep.subr.mxu0 0.0
    %2075 = vmatpush1.xpose.msra.mxu0 %v1863
    %2076 = vmatprep.subr.mxu0 0.0
    %2077 = vmatpush1.xpose.msra.mxu0 %v1862
    %2078 = vmatprep.subr.mxu0 0.0
    %2079 = vmatpush1.xpose.msra.mxu0 %v1861
    %2080 = vmatprep.subr.mxu0 0.0
    %2081 = vmatpush1.xpose.msra.mxu0 %v1860
    %2082 = vmatprep.subr.mxu0 0.0
    %2083 = vmatpush1.xpose.msra.mxu0 %v1859
    %2084 = vmatprep.subr.mxu0 0.0
    %2085 = vmatpush1.xpose.msra.mxu0 %v1858
    %2086 = vmatprep.subr.mxu0 0.0
    %2087 = vmatpush1.xpose.msra.mxu0 %v1857
    %2088 = vmatprep.subr.mxu0 0.0
    %2089 = vmatpush1.xpose.msra.mxu0 %v1856
    %2090 = vmatprep.subr.mxu0 0.0
    %2091 = vmatpush2.xpose.msra.mxu0 %v1887
    %2092 = vmatprep.subr.mxu0 0.0
    %2093 = vmatpush2.xpose.msra.mxu0 %v1886
    %2094 = vmatprep.subr.mxu0 0.0
    %2095 = vmatpush2.xpose.msra.mxu0 %v1885
    %2096 = vmatprep.subr.mxu0 0.0
    %2097 = vmatpush2.xpose.msra.mxu0 %v1884
    %2098 = vmatprep.subr.mxu0 0.0
    %2099 = vmatpush2.xpose.msra.mxu0 %v1883
    %2100 = vmatprep.subr.mxu0 0.0
    %2101 = vmatpush2.xpose.msra.mxu0 %v1882
    %2102 = vmatprep.subr.mxu0 0.0
    %2103 = vmatpush2.xpose.msra.mxu0 %v1881
    %2104 = vmatprep.subr.mxu0 0.0
    %2105 = vmatpush2.xpose.msra.mxu0 %v1880
    %2106 = vmatprep.subr.mxu0 0.0
    %2107 = vmatpush2.xpose.msra.mxu0 %v1879
    %2108 = vmatprep.subr.mxu0 0.0
    %2109 = vmatpush2.xpose.msra.mxu0 %v1878
    %2110 = vmatprep.subr.mxu0 0.0
    %2111 = vmatpush2.xpose.msra.mxu0 %v1877
    %2112 = vmatprep.subr.mxu0 0.0
    %2113 = vmatpush2.xpose.msra.mxu0 %v1876
    %2114 = vmatprep.subr.mxu0 0.0
    %2115 = vmatpush2.xpose.msra.mxu0 %v1875
    %2116 = vmatprep.subr.mxu0 0.0
    %2117 = vmatpush2.xpose.msra.mxu0 %v1874
    %2118 = vmatprep.subr.mxu0 0.0
    %2119 = vmatpush2.xpose.msra.mxu0 %v1873
    %2120 = vmatprep.subr.mxu0 0.0
    %2121 = vmatpush2.xpose.msra.mxu0 %v1872
    %2122 = vmatprep.mubr.f32.mxu0 0.0
    %2123 = vmatmul.mubr.f32.gmra.mxu0 %v1974
    %v2124 = vpop.f32.mrf.mxu0
    %v2125 = vadd.f32 0.0, %v2124
    %v2126 = vpop.f32.mrf.mxu0
    %v2127 = vadd.f32 0.0, %v2126
    %2128 = vmatprep.mubr.f32.mxu0 0.0
    %2129 = vmatmul.mubr.f32.gmra.mxu0 %v1980
    %v2130 = vpop.f32.mrf.mxu0
    %v2131 = vadd.f32 0.0, %v2130
    %v2132 = vpop.f32.mrf.mxu0
    %v2133 = vadd.f32 0.0, %v2132
    %2134 = vdwg.mxu0
    %p2135 = scmp.eq.s32.totalorder 0, 0
    // Predicated region
    $region10: #{tpu_custom_call.1} parent=1 // pred_check
      %p2136 = pneg %p2135
    $region11: #{tpu_custom_call.1} parent=1 // pred_check_branch
      %2138 = sbr.rel (%p2136) target = $region13
    $region12: #{tpu_custom_call.1} parent=1 // pred_region
      %2139 = vst [vmem:[#allocation5] sm:$0xff] 0.0
      %2140 = vst [vmem:[#allocation5 + $0x8] sm:$0xff] 0.0
      %2141 = vst [vmem:[#allocation5 + $0x10] sm:$0xff] 0.0
      %2142 = vst [vmem:[#allocation5 + $0x18] sm:$0xff] 0.0
      %2143 = vst [vmem:[#allocation5 + $0x20] sm:$0xff] 0.0
      %2144 = vst [vmem:[#allocation5 + $0x28] sm:$0xff] 0.0
      %2145 = vst [vmem:[#allocation5 + $0x30] sm:$0xff] 0.0
      %2146 = vst [vmem:[#allocation5 + $0x38] sm:$0xff] 0.0
    $region13: #{tpu_custom_call.1} parent=1 // pred_fallthru
      _
    %v2147 = vld [vmem:[#allocation5] sm:$0xff]
    %v2148 = vld [vmem:[#allocation5 + $0x8] sm:$0xff]
    %v2149 = vld [vmem:[#allocation5 + $0x10] sm:$0xff]
    %v2150 = vld [vmem:[#allocation5 + $0x18] sm:$0xff]
    %v2151 = vld [vmem:[#allocation5 + $0x20] sm:$0xff]
    %v2152 = vld [vmem:[#allocation5 + $0x28] sm:$0xff]
    %v2153 = vld [vmem:[#allocation5 + $0x30] sm:$0xff]
    %v2154 = vld [vmem:[#allocation5 + $0x38] sm:$0xff]
    %v2155 = vadd.f32 %v2147, %v2048
    %v2156 = vadd.f32 %v2148, %v2050
    %v2157 = vadd.f32 %v2149, %v2125
    %v2158 = vadd.f32 %v2150, %v2127
    %v2159 = vadd.f32 %v2151, %v2054
    %v2160 = vadd.f32 %v2152, %v2056
    %v2161 = vadd.f32 %v2153, %v2131
    %v2162 = vadd.f32 %v2154, %v2133
    %2163 = vst [vmem:[#allocation5] sm:$0xff] %v2155
    %2164 = vst [vmem:[#allocation5 + $0x8] sm:$0xff] %v2156
    %2165 = vst [vmem:[#allocation5 + $0x10] sm:$0xff] %v2157
    %2166 = vst [vmem:[#allocation5 + $0x18] sm:$0xff] %v2158
    %2167 = vst [vmem:[#allocation5 + $0x20] sm:$0xff] %v2159
    %2168 = vst [vmem:[#allocation5 + $0x28] sm:$0xff] %v2160
    %2169 = vst [vmem:[#allocation5 + $0x30] sm:$0xff] %v2161
    %2170 = vst [vmem:[#allocation5 + $0x38] sm:$0xff] %v2162
    // Predicated region
    $region14: #{tpu_custom_call.1} parent=1 // pred_check
      %p2171 = pneg %p2135
    $region15: #{tpu_custom_call.1} parent=1 // pred_check_branch
      %2173 = sbr.rel (%p2171) target = $region17
    $region16: #{tpu_custom_call.1} parent=1 // pred_region
      %v2174 = vld [vmem:[#allocation5] sm:$0xff]
      %v2175 = vld [vmem:[#allocation5 + $0x8] sm:$0xff]
      %v2176 = vld [vmem:[#allocation5 + $0x10] sm:$0xff]
      %v2177 = vld [vmem:[#allocation5 + $0x18] sm:$0xff]
      %v2178 = vld [vmem:[#allocation5 + $0x20] sm:$0xff]
      %v2179 = vld [vmem:[#allocation5 + $0x28] sm:$0xff]
      %v2180 = vld [vmem:[#allocation5 + $0x30] sm:$0xff]
      %v2181 = vld [vmem:[#allocation5 + $0x38] sm:$0xff]
      %v2182 = vlaneseq
      %v2183 = vand.u32 %v2182, 127
      %v2184 = vadd.s32 %v2183, 128
      %v2185 = vadd.s32 %v2183, 256
      %v2186 = vadd.s32 %v2183, 384
      %v2187 = vshra.s32 %v2183, 6
      %v2188 = vshra.s32 %v2184, 6
      %v2189 = vshra.s32 %v2185, 6
      %v2190 = vshra.s32 %v2186, 6
      %v2191 = vshra.s32 %v2183, 3
      %v2192 = vshra.s32 %v2184, 3
      %v2193 = vshra.s32 %v2185, 3
      %v2194 = vshra.s32 %v2186, 3
      %v2195 = vand.u32 %v2191, 7
      %v2196 = vand.u32 %v2192, 7
      %v2197 = vand.u32 %v2193, 7
      %v2198 = vand.u32 %v2194, 7
      %v2199 = vand.u32 %v2183, 7
      %v2200 = vand.u32 %v2184, 7
      %v2201 = vand.u32 %v2185, 7
      %v2202 = vand.u32 %v2186, 7
      %v2203 = vcvt.s32.f32 %v2187
      %v2204 = vcvt.s32.f32 %v2188
      %v2205 = vcvt.s32.f32 %v2189
      %v2206 = vcvt.s32.f32 %v2190
      %v2207 = vmul.f32 %v2203, 0.125
      %v2208 = vmul.f32 %v2204, 0.125
      %v2209 = vmul.f32 %v2205, 0.125
      %v2210 = vmul.f32 %v2206, 0.125
      %v2211 = vcvt.s32.f32 %v2195
      %v2212 = vcvt.s32.f32 %v2196
      %v2213 = vcvt.s32.f32 %v2197
      %v2214 = vcvt.s32.f32 %v2198
      %v2215 = vmul.f32 %v2211, 0.125
      %v2216 = vmul.f32 %v2212, 0.125
      %v2217 = vmul.f32 %v2213, 0.125
      %v2218 = vmul.f32 %v2214, 0.125
      %v2219 = vcvt.s32.f32 %v2199
      %v2220 = vcvt.s32.f32 %v2200
      %v2221 = vcvt.s32.f32 %v2201
      %v2222 = vcvt.s32.f32 %v2202
      %v2223 = vmul.f32 %v2219, 0.125
      %v2224 = vmul.f32 %v2220, 0.125
      %v2225 = vmul.f32 %v2221, 0.125
      %v2226 = vmul.f32 %v2222, 0.125
      %vm2227 = vcmp.gt.f32.partialorder %v2174, 0.0
      %vm2228 = vcmp.gt.f32.partialorder %v2175, 0.0
      %vm2229 = vcmp.gt.f32.partialorder %v2176, 0.0
      %vm2230 = vcmp.gt.f32.partialorder %v2177, 0.0
      %v2231 = vmax.f32 %v2174, 1e-10
      %v2232 = vmax.f32 %v2175, 1e-10
      %v2233 = vmax.f32 %v2176, 1e-10
      %v2234 = vmax.f32 %v2177, 1e-10
      %v2235 = vrcp.pop %v2231
      %v2236 = vmul.f32 1.0, %v2235
      %v2237 = vrcp.pop %v2232
      %v2238 = vmul.f32 1.0, %v2237
      %v2239 = vrcp.pop %v2233
      %v2240 = vmul.f32 1.0, %v2239
      %v2241 = vrcp.pop %v2234
      %v2242 = vmul.f32 1.0, %v2241
      %v2243 = vmul.f32 %v2207, %v2174
      %v2244 = vmul.f32 %v2208, %v2175
      %v2245 = vmul.f32 %v2209, %v2176
      %v2246 = vmul.f32 %v2210, %v2177
      %v2251 = vrot.slane %v2243, 4
      %v2252 = vrot.slane %v2244, 4
      %v2253 = vrot.slane %v2245, 4
      %v2254 = vrot.slane %v2246, 4
      %v2259 = vadd.f32 %v2174, %v2251
      %v2260 = vadd.f32 %v2175, %v2252
      %v2261 = vadd.f32 %v2176, %v2253
      %v2262 = vadd.f32 %v2177, %v2254
      %v2263 = vmul.f32 %v2215, %v2174
      %v2264 = vmul.f32 %v2216, %v2175
      %v2265 = vmul.f32 %v2217, %v2176
      %v2266 = vmul.f32 %v2218, %v2177
      %v2271 = vrot.slane %v2263, 5
      %v2272 = vrot.slane %v2264, 5
      %v2273 = vrot.slane %v2265, 5
      %v2274 = vrot.slane %v2266, 5
      %v2279 = vadd.f32 %v2259, %v2271
      %v2280 = vadd.f32 %v2260, %v2272
      %v2281 = vadd.f32 %v2261, %v2273
      %v2282 = vadd.f32 %v2262, %v2274
      %v2283 = vmul.f32 %v2223, %v2174
      %v2284 = vmul.f32 %v2224, %v2175
      %v2285 = vmul.f32 %v2225, %v2176
      %v2286 = vmul.f32 %v2226, %v2177
      %v2291 = vrot.slane %v2283, 6
      %v2292 = vrot.slane %v2284, 6
      %v2293 = vrot.slane %v2285, 6
      %v2294 = vrot.slane %v2286, 6
      %v2299 = vadd.f32 %v2279, %v2291
      %v2300 = vadd.f32 %v2280, %v2292
      %v2301 = vadd.f32 %v2281, %v2293
      %v2302 = vadd.f32 %v2282, %v2294
      %v2307 = vrot.slane %v2236, 3
      %v2308 = vrot.slane %v2238, 3
      %v2309 = vrot.slane %v2240, 3
      %v2310 = vrot.slane %v2242, 3
      %v2315 = vmul.f32 %v2299, %v2307
      %v2316 = vmul.f32 %v2300, %v2308
      %v2317 = vmul.f32 %v2301, %v2309
      %v2318 = vmul.f32 %v2302, %v2310
      %v2319 = vadd.f32 %v2315, 0.0
      %v2320 = vadd.f32 %v2316, 0.0
      %v2321 = vadd.f32 %v2317, 0.0
      %v2322 = vadd.f32 %v2318, 0.0
      %v2327 = vrot.slane %v2319, 5
      %v2328 = vrot.slane %v2320, 5
      %v2329 = vrot.slane %v2321, 5
      %v2330 = vrot.slane %v2322, 5
      %v2335 = vsel %vm2227, %v2327, 0.0
      %v2336 = vsel %vm2228, %v2328, 0.0
      %v2337 = vsel %vm2229, %v2329, 0.0
      %v2338 = vsel %vm2230, %v2330, 0.0
      %vm2339 = vcmp.lt.s32.totalorder %v2187, 2
      %vm2340 = vcmp.lt.s32.totalorder %v2188, 2
      %vm2341 = vcmp.lt.s32.totalorder %v2189, 2
      %vm2342 = vcmp.lt.s32.totalorder %v2190, 2
      %vm2343 = vcmp.lt.f32.partialorder %v2335, 0.0
      %vm2344 = vcmp.lt.f32.partialorder %v2336, 0.0
      %vm2345 = vcmp.lt.f32.partialorder %v2337, 0.0
      %vm2346 = vcmp.lt.f32.partialorder %v2338, 0.0
      %vm2347 = vmand %vm2339, %vm2343
      %vm2348 = vmand %vm2340, %vm2344
      %vm2349 = vmand %vm2341, %vm2345
      %vm2350 = vmand %vm2342, %vm2346
      %v2351 = vsel %vm2347, 0.0, %v2335
      %v2352 = vsel %vm2348, 0.0, %v2336
      %v2353 = vsel %vm2349, 0.0, %v2337
      %v2354 = vsel %vm2350, 0.0, %v2338
      %vm2355 = vcmp.gt.s32.totalorder %v2187, 6
      %vm2356 = vcmp.gt.s32.totalorder %v2188, 6
      %vm2357 = vcmp.gt.s32.totalorder %v2189, 6
      %vm2358 = vcmp.gt.s32.totalorder %v2190, 6
      %vm2359 = vcmp.gt.f32.partialorder %v2351, 0.0
      %vm2360 = vcmp.gt.f32.partialorder %v2352, 0.0
      %vm2361 = vcmp.gt.f32.partialorder %v2353, 0.0
      %vm2362 = vcmp.gt.f32.partialorder %v2354, 0.0
      %vm2363 = vmand %vm2355, %vm2359
      %vm2364 = vmand %vm2356, %vm2360
      %vm2365 = vmand %vm2357, %vm2361
      %vm2366 = vmand %vm2358, %vm2362
      %v2367 = vsel %vm2363, 0.0, %v2351
      %v2368 = vsel %vm2364, 0.0, %v2352
      %v2369 = vsel %vm2365, 0.0, %v2353
      %v2370 = vsel %vm2366, 0.0, %v2354
      %v2371 = vrot.slane %v2243, 6
      %v2372 = vrot.slane %v2244, 6
      %v2373 = vrot.slane %v2245, 6
      %v2374 = vrot.slane %v2246, 6
      %v2379 = vadd.f32 %v2174, %v2371
      %v2380 = vadd.f32 %v2175, %v2372
      %v2381 = vadd.f32 %v2176, %v2373
      %v2382 = vadd.f32 %v2177, %v2374
      %v2383 = vmul.f32 %v2215, %v2178
      %v2384 = vmul.f32 %v2216, %v2179
      %v2385 = vmul.f32 %v2217, %v2180
      %v2386 = vmul.f32 %v2218, %v2181
      %v2391 = vrot.slane %v2383, 7
      %v2392 = vrot.slane %v2384, 7
      %v2393 = vrot.slane %v2385, 7
      %v2394 = vrot.slane %v2386, 7
      %v2399 = vadd.f32 %v2379, %v2391
      %v2400 = vadd.f32 %v2380, %v2392
      %v2401 = vadd.f32 %v2381, %v2393
      %v2402 = vadd.f32 %v2382, %v2394
      %v2403 = vmul.f32 %v2223, %v2178
      %v2404 = vmul.f32 %v2224, %v2179
      %v2405 = vmul.f32 %v2225, %v2180
      %v2406 = vmul.f32 %v2226, %v2181
      %v2407 = vadd.f32 %v2399, %v2403
      %v2408 = vadd.f32 %v2400, %v2404
      %v2409 = vadd.f32 %v2401, %v2405
      %v2410 = vadd.f32 %v2402, %v2406
      %v2411 = vrot.slane %v2236, 2
      %v2412 = vrot.slane %v2238, 2
      %v2413 = vrot.slane %v2240, 2
      %v2414 = vrot.slane %v2242, 2
      %v2419 = vmul.f32 %v2407, %v2411
      %v2420 = vmul.f32 %v2408, %v2412
      %v2421 = vmul.f32 %v2409, %v2413
      %v2422 = vmul.f32 %v2410, %v2414
      %v2423 = vadd.f32 %v2419, -0.0049
      %v2424 = vadd.f32 %v2420, -0.0049
      %v2425 = vadd.f32 %v2421, -0.0049
      %v2426 = vadd.f32 %v2422, -0.0049
      %v2431 = vrot.slane %v2423, 6
      %v2432 = vrot.slane %v2424, 6
      %v2433 = vrot.slane %v2425, 6
      %v2434 = vrot.slane %v2426, 6
      %v2439 = vsel %vm2227, %v2431, 0.0
      %v2440 = vsel %vm2228, %v2432, 0.0
      %v2441 = vsel %vm2229, %v2433, 0.0
      %v2442 = vsel %vm2230, %v2434, 0.0
      %vm2443 = vcmp.lt.s32.totalorder %v2195, 2
      %vm2444 = vcmp.lt.s32.totalorder %v2196, 2
      %vm2445 = vcmp.lt.s32.totalorder %v2197, 2
      %vm2446 = vcmp.lt.s32.totalorder %v2198, 2
      %vm2447 = vcmp.lt.f32.partialorder %v2439, 0.0
      %vm2448 = vcmp.lt.f32.partialorder %v2440, 0.0
      %vm2449 = vcmp.lt.f32.partialorder %v2441, 0.0
      %vm2450 = vcmp.lt.f32.partialorder %v2442, 0.0
      %vm2451 = vmand %vm2443, %vm2447
      %vm2452 = vmand %vm2444, %vm2448
      %vm2453 = vmand %vm2445, %vm2449
      %vm2454 = vmand %vm2446, %vm2450
      %v2455 = vsel %vm2451, 0.0, %v2439
      %v2456 = vsel %vm2452, 0.0, %v2440
      %v2457 = vsel %vm2453, 0.0, %v2441
      %v2458 = vsel %vm2454, 0.0, %v2442
      %vm2459 = vcmp.gt.s32.totalorder %v2195, 6
      %vm2460 = vcmp.gt.s32.totalorder %v2196, 6
      %vm2461 = vcmp.gt.s32.totalorder %v2197, 6
      %vm2462 = vcmp.gt.s32.totalorder %v2198, 6
      %vm2463 = vcmp.gt.f32.partialorder %v2455, 0.0
      %vm2464 = vcmp.gt.f32.partialorder %v2456, 0.0
      %vm2465 = vcmp.gt.f32.partialorder %v2457, 0.0
      %vm2466 = vcmp.gt.f32.partialorder %v2458, 0.0
      %vm2467 = vmand %vm2459, %vm2463
      %vm2468 = vmand %vm2460, %vm2464
      %vm2469 = vmand %vm2461, %vm2465
      %vm2470 = vmand %vm2462, %vm2466
      %v2471 = vsel %vm2467, 0.0, %v2455
      %v2472 = vsel %vm2468, 0.0, %v2456
      %v2473 = vsel %vm2469, 0.0, %v2457
      %v2474 = vsel %vm2470, 0.0, %v2458
      %v2475 = vmul.f32 %v2207, %v2178
      %v2476 = vmul.f32 %v2208, %v2179
      %v2477 = vmul.f32 %v2209, %v2180
      %v2478 = vmul.f32 %v2210, %v2181
      %v2479 = vadd.f32 %v2174, %v2475
      %v2480 = vadd.f32 %v2175, %v2476
      %v2481 = vadd.f32 %v2176, %v2477
      %v2482 = vadd.f32 %v2177, %v2478
      %v2483 = vrot.slane %v2383, 1
      %v2484 = vrot.slane %v2384, 1
      %v2485 = vrot.slane %v2385, 1
      %v2486 = vrot.slane %v2386, 1
      %v2491 = vadd.f32 %v2479, %v2483
      %v2492 = vadd.f32 %v2480, %v2484
      %v2493 = vadd.f32 %v2481, %v2485
      %v2494 = vadd.f32 %v2482, %v2486
      %v2499 = vrot.slane %v2403, 2
      %v2500 = vrot.slane %v2404, 2
      %v2501 = vrot.slane %v2405, 2
      %v2502 = vrot.slane %v2406, 2
      %v2507 = vadd.f32 %v2491, %v2499
      %v2508 = vadd.f32 %v2492, %v2500
      %v2509 = vadd.f32 %v2493, %v2501
      %v2510 = vadd.f32 %v2494, %v2502
      %v2511 = vrot.slane %v2236, 1
      %v2512 = vrot.slane %v2238, 1
      %v2513 = vrot.slane %v2240, 1
      %v2514 = vrot.slane %v2242, 1
      %v2519 = vmul.f32 %v2507, %v2511
      %v2520 = vmul.f32 %v2508, %v2512
      %v2521 = vmul.f32 %v2509, %v2513
      %v2522 = vmul.f32 %v2510, %v2514
      %v2523 = vadd.f32 %v2519, 0.0
      %v2524 = vadd.f32 %v2520, 0.0
      %v2525 = vadd.f32 %v2521, 0.0
      %v2526 = vadd.f32 %v2522, 0.0
      %v2531 = vrot.slane %v2523, 7
      %v2532 = vrot.slane %v2524, 7
      %v2533 = vrot.slane %v2525, 7
      %v2534 = vrot.slane %v2526, 7
      %v2539 = vsel %vm2227, %v2531, 0.0
      %v2540 = vsel %vm2228, %v2532, 0.0
      %v2541 = vsel %vm2229, %v2533, 0.0
      %v2542 = vsel %vm2230, %v2534, 0.0
      %vm2543 = vcmp.lt.s32.totalorder %v2199, 2
      %vm2544 = vcmp.lt.s32.totalorder %v2200, 2
      %vm2545 = vcmp.lt.s32.totalorder %v2201, 2
      %vm2546 = vcmp.lt.s32.totalorder %v2202, 2
      %vm2547 = vcmp.lt.f32.partialorder %v2539, 0.0
      %vm2548 = vcmp.lt.f32.partialorder %v2540, 0.0
      %vm2549 = vcmp.lt.f32.partialorder %v2541, 0.0
      %vm2550 = vcmp.lt.f32.partialorder %v2542, 0.0
      %vm2551 = vmand %vm2543, %vm2547
      %vm2552 = vmand %vm2544, %vm2548
      %vm2553 = vmand %vm2545, %vm2549
      %vm2554 = vmand %vm2546, %vm2550
      %v2555 = vsel %vm2551, 0.0, %v2539
      %v2556 = vsel %vm2552, 0.0, %v2540
      %v2557 = vsel %vm2553, 0.0, %v2541
      %v2558 = vsel %vm2554, 0.0, %v2542
      %vm2559 = vcmp.gt.s32.totalorder %v2199, 6
      %vm2560 = vcmp.gt.s32.totalorder %v2200, 6
      %vm2561 = vcmp.gt.s32.totalorder %v2201, 6
      %vm2562 = vcmp.gt.s32.totalorder %v2202, 6
      %vm2563 = vcmp.gt.f32.partialorder %v2555, 0.0
      %vm2564 = vcmp.gt.f32.partialorder %v2556, 0.0
      %vm2565 = vcmp.gt.f32.partialorder %v2557, 0.0
      %vm2566 = vcmp.gt.f32.partialorder %v2558, 0.0
      %vm2567 = vmand %vm2559, %vm2563
      %vm2568 = vmand %vm2560, %vm2564
      %vm2569 = vmand %vm2561, %vm2565
      %vm2570 = vmand %vm2562, %vm2566
      %v2571 = vsel %vm2567, 0.0, %v2555
      %v2572 = vsel %vm2568, 0.0, %v2556
      %v2573 = vsel %vm2569, 0.0, %v2557
      %v2574 = vsel %vm2570, 0.0, %v2558
      %v2575 = vmul.f32 %v2367, %v2207
      %v2576 = vmul.f32 %v2368, %v2208
      %v2577 = vmul.f32 %v2369, %v2209
      %v2578 = vmul.f32 %v2370, %v2210
      %v2579 = vmul.f32 %v2367, %v2215
      %v2580 = vmul.f32 %v2368, %v2216
      %v2581 = vmul.f32 %v2369, %v2217
      %v2582 = vmul.f32 %v2370, %v2218
      %v2583 = vmul.f32 %v2367, %v2223
      %v2584 = vmul.f32 %v2368, %v2224
      %v2585 = vmul.f32 %v2369, %v2225
      %v2586 = vmul.f32 %v2370, %v2226
      %v2587 = vmul.f32 %v2471, %v2207
      %v2588 = vmul.f32 %v2472, %v2208
      %v2589 = vmul.f32 %v2473, %v2209
      %v2590 = vmul.f32 %v2474, %v2210
      %v2591 = vmul.f32 %v2471, %v2215
      %v2592 = vmul.f32 %v2472, %v2216
      %v2593 = vmul.f32 %v2473, %v2217
      %v2594 = vmul.f32 %v2474, %v2218
      %v2595 = vmul.f32 %v2471, %v2223
      %v2596 = vmul.f32 %v2472, %v2224
      %v2597 = vmul.f32 %v2473, %v2225
      %v2598 = vmul.f32 %v2474, %v2226
      %v2599 = vmul.f32 %v2571, %v2207
      %v2600 = vmul.f32 %v2572, %v2208
      %v2601 = vmul.f32 %v2573, %v2209
      %v2602 = vmul.f32 %v2574, %v2210
      %v2603 = vmul.f32 %v2571, %v2215
      %v2604 = vmul.f32 %v2572, %v2216
      %v2605 = vmul.f32 %v2573, %v2217
      %v2606 = vmul.f32 %v2574, %v2218
      %v2607 = vmul.f32 %v2571, %v2223
      %v2608 = vmul.f32 %v2572, %v2224
      %v2609 = vmul.f32 %v2573, %v2225
      %v2610 = vmul.f32 %v2574, %v2226
      %v2615 = vrot.slane %v2367, 3
      %v2616 = vrot.slane %v2368, 3
      %v2617 = vrot.slane %v2369, 3
      %v2618 = vrot.slane %v2370, 3
      %v2627 = vrot.slane %v2471, 2
      %v2628 = vrot.slane %v2472, 2
      %v2629 = vrot.slane %v2473, 2
      %v2630 = vrot.slane %v2474, 2
      %v2639 = vrot.slane %v2571, 1
      %v2640 = vrot.slane %v2572, 1
      %v2641 = vrot.slane %v2573, 1
      %v2642 = vrot.slane %v2574, 1
      %v2651 = vrot.slane %v2579, 7
      %v2652 = vrot.slane %v2580, 7
      %v2653 = vrot.slane %v2581, 7
      %v2654 = vrot.slane %v2582, 7
      %v2663 = vrot.slane %v2583, 6
      %v2664 = vrot.slane %v2584, 6
      %v2665 = vrot.slane %v2585, 6
      %v2666 = vrot.slane %v2586, 6
      %v2675 = vrot.slane %v2587, 5
      %v2676 = vrot.slane %v2588, 5
      %v2677 = vrot.slane %v2589, 5
      %v2678 = vrot.slane %v2590, 5
      %v2687 = vrot.slane %v2591, 4
      %v2688 = vrot.slane %v2592, 4
      %v2689 = vrot.slane %v2593, 4
      %v2690 = vrot.slane %v2594, 4
      %v2699 = vrot.slane %v2595, 3
      %v2700 = vrot.slane %v2596, 3
      %v2701 = vrot.slane %v2597, 3
      %v2702 = vrot.slane %v2598, 3
      %v2711 = vrot.slane %v2599, 2
      %v2712 = vrot.slane %v2600, 2
      %v2713 = vrot.slane %v2601, 2
      %v2714 = vrot.slane %v2602, 2
      %v2723 = vrot.slane %v2603, 1
      %v2724 = vrot.slane %v2604, 1
      %v2725 = vrot.slane %v2605, 1
      %v2726 = vrot.slane %v2606, 1
      %v2731 = vsel %vm1961, %v2615, %v2627
      %v2732 = vsel %vm1961, %v2616, %v2628
      %v2733 = vsel %vm1961, %v2617, %v2629
      %v2734 = vsel %vm1961, %v2618, %v2630
      %v2735 = vsel %vm1963, %v2731, %v2639
      %v2736 = vsel %vm1963, %v2732, %v2640
      %v2737 = vsel %vm1963, %v2733, %v2641
      %v2738 = vsel %vm1963, %v2734, %v2642
      %v2739 = vsel %vm1965, %v2735, %v2575
      %v2740 = vsel %vm1965, %v2736, %v2576
      %v2741 = vsel %vm1965, %v2737, %v2577
      %v2742 = vsel %vm1965, %v2738, %v2578
      %v2743 = vsel %vm1967, %v2739, %v2651
      %v2744 = vsel %vm1967, %v2740, %v2652
      %v2745 = vsel %vm1967, %v2741, %v2653
      %v2746 = vsel %vm1967, %v2742, %v2654
      %v2747 = vsel %vm1969, %v2743, %v2663
      %v2748 = vsel %vm1969, %v2744, %v2664
      %v2749 = vsel %vm1969, %v2745, %v2665
      %v2750 = vsel %vm1969, %v2746, %v2666
      %v2751 = vsel %vm1971, %v2747, %v2675
      %v2752 = vsel %vm1971, %v2748, %v2676
      %v2753 = vsel %vm1971, %v2749, %v2677
      %v2754 = vsel %vm1971, %v2750, %v2678
      %v2755 = vsel %vm1973, %v2751, %v2687
      %v2756 = vsel %vm1973, %v2752, %v2688
      %v2757 = vsel %vm1973, %v2753, %v2689
      %v2758 = vsel %vm1973, %v2754, %v2690
      %v2759 = vsel %vm1961, %v2699, %v2711
      %v2760 = vsel %vm1961, %v2700, %v2712
      %v2761 = vsel %vm1961, %v2701, %v2713
      %v2762 = vsel %vm1961, %v2702, %v2714
      %v2763 = vsel %vm1963, %v2759, %v2723
      %v2764 = vsel %vm1963, %v2760, %v2724
      %v2765 = vsel %vm1963, %v2761, %v2725
      %v2766 = vsel %vm1963, %v2762, %v2726
      %v2767 = vsel %vm1965, %v2763, %v2607
      %v2768 = vsel %vm1965, %v2764, %v2608
      %v2769 = vsel %vm1965, %v2765, %v2609
      %v2770 = vsel %vm1965, %v2766, %v2610
      %v2771 = vsel %vm1967, %v2767, 0.0
      %v2772 = vsel %vm1967, %v2768, 0.0
      %v2773 = vsel %vm1967, %v2769, 0.0
      %v2774 = vsel %vm1967, %v2770, 0.0
      %v2775 = vsel %vm1969, %v2771, 0.0
      %v2776 = vsel %vm1969, %v2772, 0.0
      %v2777 = vsel %vm1969, %v2773, 0.0
      %v2778 = vsel %vm1969, %v2774, 0.0
      %v2779 = vsel %vm1971, %v2775, 0.0
      %v2780 = vsel %vm1971, %v2776, 0.0
      %v2781 = vsel %vm1971, %v2777, 0.0
      %v2782 = vsel %vm1971, %v2778, 0.0
      %v2783 = vsel %vm1973, %v2779, 0.0
      %v2784 = vsel %vm1973, %v2780, 0.0
      %v2785 = vsel %vm1973, %v2781, 0.0
      %v2786 = vsel %vm1973, %v2782, 0.0
      %2787 = vst [vmem:[#allocation5] sm:$0xff] %v2755
      %2788 = vst [vmem:[#allocation5 + $0x8] sm:$0xff] %v2756
      %2789 = vst [vmem:[#allocation5 + $0x10] sm:$0xff] %v2757
      %2790 = vst [vmem:[#allocation5 + $0x18] sm:$0xff] %v2758
      %2791 = vst [vmem:[#allocation5 + $0x20] sm:$0xff] %v2783
      %2792 = vst [vmem:[#allocation5 + $0x28] sm:$0xff] %v2784
      %2793 = vst [vmem:[#allocation5 + $0x30] sm:$0xff] %v2785
      %2794 = vst [vmem:[#allocation5 + $0x38] sm:$0xff] %v2786
    $region17: #{tpu_custom_call.1} parent=1 // pred_fallthru
      _
    // Predicated region
    $region18: #{tpu_custom_call.1} parent=1 // pred_check
      _
    $region19: #{tpu_custom_call.1} parent=1 // pred_check_branch
      %2796 = sbr.rel (0) target = $region21
    $region20: #{tpu_custom_call.1} parent=1 // pred_region
      %s2798 = ssub.s32 1024, 1024
      %2799 = vsyncadd [#allocation4], %s2798
      %s2800 = sshll.u32 [#allocation5], 4
      %s2801 = int_to_ptr.vmem [resolvable:$true] %s2800
      %2806 = dma.vmem_to_hbm [thread:$0]  %s2801, 1024, %s1, [#allocation4], 512, 512, 32
    $region21: #{tpu_custom_call.1} parent=1 // pred_fallthru
      _
    // Predicated region
    $region22: #{tpu_custom_call.1} parent=1 // pred_check
      _
    $region23: #{tpu_custom_call.1} parent=1 // pred_check_branch
      %2808 = sbr.rel (0) target = $region25
    $region24: #{tpu_custom_call.1} parent=1 // pred_region
      %2809 = dma.done [#allocation4], 1024
    $region25: #{tpu_custom_call.1} parent=1 // pred_fallthru
      _
    %2810 = vsyncpa [#allocation3], 1
    %2811 = vsyncpa [#allocation4], 1

</llo_original>
